<compile_context>
chip_gen: v5e
topology: v5e:2x2
jax: 0.10.0
libtpu: 0.0.40
codegen_flags: <defaults>
</compile_context>

<pallas_src>
import jax
import jax.numpy as jnp
from jax.experimental import pallas as pl
from jax.experimental.pallas import tpu as pltpu


def _round_up(v, m):
    return (v + m - 1) // m * m


# ----------------------------------------------------------------------------
# Fused kernel factory: NB images per grid step, everything lives in VMEM.
# ----------------------------------------------------------------------------
def _make_fused_cnn_kernel(n_conv, nb, coutp):
    """Kernel computing, for a block of NB images:
         [conv3x3 stride2 pad1 + ReLU] * n_conv -> global avg pool -> linear
    """

    def _pad_plane(x, top, bottom, left, right):
        # Zero-pad a (NB, R, Q, C) plane along rows (axis 1) / cols (axis 2)
        # using concatenate only (avoids lax.pad in the kernel).
        n, _, q, c = x.shape
        if top or bottom:
            zr = jnp.zeros((n, 1, q, c), x.dtype)
            x = jnp.concatenate(([zr] if top else []) + [x] +
                                ([zr] if bottom else []), axis=1)
        if left or right:
            zc = jnp.zeros((x.shape[0], x.shape[1], 1, c), x.dtype)
            x = jnp.concatenate(([zc] if left else []) + [x] +
                                ([zc] if right else []), axis=2)
        return x

    def _conv3x3_s2_relu(act, w_ref, b_ref):
        # act: (NB, S, S, Cin) bf16, S even.  Returns (NB*Ho*Wo, Cout) f32,
        # Ho = Wo = S // 2.  Single MXU GEMM with K = 9*Cin.
        n, s, _, cin = act.shape
        ho = s // 2
        # Space-to-depth: split rows/cols by parity (unit-stride ops only).
        x6 = act.reshape(n, ho, 2, ho, 2, cin)
        ee = x6[:, :, 0, :, 0, :]   # even rows, even cols
        eo = x6[:, :, 0, :, 1, :]   # even rows, odd  cols
        oe = x6[:, :, 1, :, 0, :]   # odd  rows, even cols
        oo = x6[:, :, 1, :, 1, :]   # odd  rows, odd  cols
        # Parity planes of the zero-padded (S+2, S+2) input:
        #   padded index 2a+p: p=0 -> [pad, odd entries], p=1 -> [even entries, pad]
        planes = {
            (0, 0): _pad_plane(oo, 1, 0, 1, 0),
            (0, 1): _pad_plane(oe, 1, 0, 0, 1),
            (1, 0): _pad_plane(eo, 0, 1, 1, 0),
            (1, 1): _pad_plane(ee, 0, 1, 0, 1),
        }
        # 9 taps, each a unit-stride window of a parity plane.
        taps = []
        for dy in range(3):
            p, a0 = dy % 2, dy // 2
            for dx in range(3):
                q, b0 = dx % 2, dx // 2
                taps.append(planes[(p, q)][:, a0:a0 + ho, b0:b0 + ho, :])
        patch = jnp.concatenate(taps, axis=-1)          # (NB, Ho, Wo, 9*Cin)
        patch = patch.reshape(n * ho * ho, 9 * cin)
        acc = jnp.dot(patch, w_ref[...],                # (9*Cin, Cout) bf16
                      preferred_element_type=jnp.float32)
        return jnp.maximum(acc + b_ref[...], 0.0)       # bias + ReLU, f32

    def kernel(*args):
        idx = 0
        x_ref = args[idx]; idx += 1                      # (NB, S0, S0, C0p) bf16
        w_refs = args[idx:idx + n_conv]; idx += n_conv   # each (9*Cin, Cout) bf16
        b_refs = args[idx:idx + n_conv]; idx += n_conv   # each (1, Cout) f32
        lw_ref = args[idx]; idx += 1                     # (C_last, Coutp) bf16
        lb_ref = args[idx]; idx += 1                     # (1, Coutp) f32
        out_ref = args[idx]                              # (NB, 1, Coutp) f32

        act = x_ref[...]
        s_out, cout = act.shape[1], act.shape[-1]
        acc = None
        for li in range(n_conv):
            acc = _conv3x3_s2_relu(act, w_refs[li], b_refs[li])
            s_out = act.shape[1] // 2
            cout = acc.shape[-1]
            if li < n_conv - 1:
                # Next layer's input: bf16 value (no scratch, no halo store).
                act = acc.reshape(nb, s_out, s_out, cout).astype(jnp.bfloat16)

        # AdaptiveAvgPool2d(1) + Flatten + Linear (lane-dense padded output).
        pooled = jnp.mean(acc.reshape(nb, s_out * s_out, cout), axis=1)  # (NB, C_last)
        logits = jnp.dot(pooled.astype(jnp.bfloat16), lw_ref[...],
                         preferred_element_type=jnp.float32) + lb_ref[...]
        out_ref[...] = logits.reshape(nb, 1, coutp)

    return kernel


# ----------------------------------------------------------------------------
# Wrapper: cheap layout prep + single fused pallas_call.
# ----------------------------------------------------------------------------
def simple_cnn_forward(x_nchw, params):
    """params: ([(conv_w_oihw, conv_b), ...], (lin_w (Cin,Cout), lin_b (Cout,)))."""
    conv_params, (lin_w, lin_b) = params
    N, cin0, H, W = x_nchw.shape
    L = len(conv_params)
    assert H == W, "square inputs assumed"
    s = H
    for _ in range(L):
        assert s % 2 == 0, "spatial size must stay even through the stride-2 convs"
        s //= 2

    # NCHW -> NHWC, pad channels to a multiple of 8, bf16 MXU operand dtype.
    # TODO(synk): for large inputs fold this transform into the producer to avoid
    # an extra HBM pass over x.
    c0p = _round_up(max(cin0, 8), 8)
    x = jnp.transpose(x_nchw, (0, 2, 3, 1)).astype(jnp.bfloat16)
    x = jnp.pad(x, ((0, 0), (0, 0), (0, 0), (0, c0p - cin0)))

    # Pack conv weights as (9*Cin_p, Cout) so each layer is one GEMM.
    w_packed, b_packed = [], []
    for li, (w_oihw, b) in enumerate(conv_params):
        cout, cin_real = int(w_oihw.shape[0]), int(w_oihw.shape[1])
        cin_p = c0p if li == 0 else cin_real
        wm = jnp.transpose(w_oihw, (2, 3, 1, 0))                 # (3,3,Cin,Cout)
        wm = jnp.pad(wm, ((0, 0), (0, 0), (0, cin_p - cin_real), (0, 0)))
        w_packed.append(wm.reshape(9 * cin_p, cout).astype(jnp.bfloat16))
        b_packed.append(b.reshape(1, cout).astype(jnp.float32))

    n_out = int(lin_w.shape[1])
    coutp = _round_up(max(n_out, 128), 128)            # lane-dense final store
    lw = jnp.pad(lin_w, ((0, 0), (0, coutp - n_out))).astype(jnp.bfloat16)
    lb = jnp.pad(lin_b, (0, coutp - n_out)).reshape(1, coutp).astype(jnp.float32)

    # Batch blocking: fold NB images into the GEMM M dim but keep >= 2 grid
    # steps (v7x: one block per TensorCore).  NB is capped small here; at these
    # shapes VMEM use per step is only a few hundred KiB.
    nb = max(1, min(N // 2, 8)) if N >= 2 else 1
    n_steps = pl.cdiv(N, nb)
    n_pad = n_steps * nb
    if n_pad != N:
        x = jnp.pad(x, ((0, n_pad - N), (0, 0), (0, 0), (0, 0)))

    kernel = _make_fused_cnn_kernel(L, nb, coutp)

    in_specs = [pl.BlockSpec((nb, H, W, c0p), lambda n: (n, 0, 0, 0))]
    # Weights/biases: constant index maps (block resident across grid steps).
    in_specs += [pl.BlockSpec(w.shape, lambda n: (0, 0)) for w in w_packed]
    in_specs += [pl.BlockSpec(b.shape, lambda n: (0, 0)) for b in b_packed]
    in_specs += [pl.BlockSpec(lw.shape, lambda n: (0, 0)),
                 pl.BlockSpec(lb.shape, lambda n: (0, 0))]

    out = pl.pallas_call(
        kernel,
        out_shape=jax.ShapeDtypeStruct((n_pad, 1, coutp), jnp.float32),
        grid=(n_steps,),
        in_specs=in_specs,
        out_specs=pl.BlockSpec((nb, 1, coutp), lambda n: (n, 0, 0)),
        compiler_params=pltpu.CompilerParams(
            dimension_semantics=("parallel",),        # v7x: blocks across both TCs
            vmem_limit_bytes=32 * 1024 * 1024,        # safe on v5e/v6e/v7x
        ),
    )(x, *w_packed, *b_packed, lw, lb)

    return out[:N, 0, :n_out]


# ----------------------------------------------------------------------------
# Pure-JAX f32 reference (same assumed semantics: conv+bias+ReLU, pool, linear).
# ----------------------------------------------------------------------------
def simple_cnn_reference(x_nchw, params):
    conv_params, (lin_w, lin_b) = params
    x = x_nchw.astype(jnp.float32)
    for (w, b) in conv_params:
        x = jax.lax.conv_general_dilated(
            x, w.astype(jnp.float32), window_strides=(2, 2),
            padding=((1, 1), (1, 1)),
            dimension_numbers=("NCHW", "OIHW", "NCHW"))
        x = jnp.maximum(x + b[None, :, None, None], 0.0)
    x = jnp.mean(x, axis=(2, 3))                       # AdaptiveAvgPool2d(1)+Flatten
    return x @ lin_w + lin_b


# ----------------------------------------------------------------------------
# Deterministic kaiming-normal-style init (matches init_cnn intent).
# ----------------------------------------------------------------------------
def init_params(key, channels_in, channels_out, n_filters):
    filt = [channels_in] + list(n_filters)
    conv_params = []
    for i in range(len(filt) - 1):
        key, k1 = jax.random.split(key)
        fan_in = filt[i] * 3 * 3
        w = jax.random.normal(k1, (filt[i + 1], filt[i], 3, 3), jnp.float32)
        w = w * jnp.sqrt(2.0 / fan_in)
        b = jnp.zeros((filt[i + 1],), jnp.float32)
        conv_params.append((w, b))
    key, k2 = jax.random.split(key)
    lin_w = jax.random.normal(k2, (filt[-1], channels_out), jnp.float32)
    lin_w = lin_w * jnp.sqrt(2.0 / filt[-1])
    lin_b = jnp.zeros((channels_out,), jnp.float32)
    return conv_params, (lin_w, lin_b)


if __name__ == "__main__":
    channels_in, channels_out = 3, 10
    n_filters = [8, 16]
    batch, spatial = 2, 16

    key = jax.random.PRNGKey(0)
    key, kx = jax.random.split(key)
    x = jax.random.normal(kx, (batch, channels_in, spatial, spatial), jnp.float32)

    params = init_params(key, channels_in, channels_out, n_filters)

    fwd = jax.jit(simple_cnn_forward)
    out = fwd(x, params)
    jax.block_until_ready(out)

    ref = simple_cnn_reference(x, params)

    assert out.shape == (batch, channels_out), out.shape
    assert bool(jnp.all(jnp.isfinite(out)))
    # bf16 MXU operands with f32 accumulation -> small deviation vs f32 reference.
    assert bool(jnp.allclose(out, ref, rtol=5e-2, atol=5e-2)), (out, ref)
    print("KERNEL_OK")
</pallas_src>

<mosaic_0001>
module attributes {stable_mosaic.version = 11 : i64} {
  func.func @kernel(%arg0: i32, %arg1: memref<1x16x16x8xbf16, #tpu.memory_space<vmem>>, %arg2: memref<72x8xbf16, #tpu.memory_space<vmem>>, %arg3: memref<72x16xbf16, #tpu.memory_space<vmem>>, %arg4: memref<1x8xf32, #tpu.memory_space<vmem>>, %arg5: memref<1x16xf32, #tpu.memory_space<vmem>>, %arg6: memref<16x128xbf16, #tpu.memory_space<vmem>>, %arg7: memref<1x128xf32, #tpu.memory_space<vmem>>, %arg8: memref<1x1x128xf32, #tpu.memory_space<vmem>>) attributes {dimension_semantics = [#tpu.dimension_semantics<parallel>], iteration_bounds = array<i64: 2>, scalar_prefetch = 0 : i64, scratch_operands = 0 : i64, tpu.core_type = #tpu.core_type<tc>, window_params = [{transform_indices = @transform_0, window_bounds = array<i64: 1, 16, 16, 8>}, {pipeline_mode = #tpu.pipeline_mode<synchronous>, transform_indices = @transform_1, window_bounds = array<i64: 72, 8>}, {pipeline_mode = #tpu.pipeline_mode<synchronous>, transform_indices = @transform_2, window_bounds = array<i64: 72, 16>}, {pipeline_mode = #tpu.pipeline_mode<synchronous>, transform_indices = @transform_3, window_bounds = array<i64: 1, 8>}, {pipeline_mode = #tpu.pipeline_mode<synchronous>, transform_indices = @transform_4, window_bounds = array<i64: 1, 16>}, {pipeline_mode = #tpu.pipeline_mode<synchronous>, transform_indices = @transform_5, window_bounds = array<i64: 16, 128>}, {pipeline_mode = #tpu.pipeline_mode<synchronous>, transform_indices = @transform_6, window_bounds = array<i64: 1, 128>}, {transform_indices = @transform_7, window_bounds = array<i64: 1, 1, 128>}]} {
    %c0 = arith.constant 0 : index
    %c0_0 = arith.constant 0 : index
    %c0_1 = arith.constant 0 : index
    %c0_2 = arith.constant 0 : index
    %0 = vector.load %arg1[%c0, %c0_0, %c0_1, %c0_2] : memref<1x16x16x8xbf16, #tpu.memory_space<vmem>>, vector<1x16x16x8xbf16>
    %1 = vector.shape_cast %0 : vector<1x16x16x8xbf16> to vector<1x8x2x8x2x8xbf16>
    %2 = vector.extract_strided_slice %1 {offsets = [0, 0, 0, 0, 0, 0], sizes = [1, 8, 1, 8, 1, 8], strides = [1, 1, 1, 1, 1, 1]} : vector<1x8x2x8x2x8xbf16> to vector<1x8x1x8x1x8xbf16>
    %3 = vector.shape_cast %2 : vector<1x8x1x8x1x8xbf16> to vector<1x8x8x8xbf16>
    %4 = vector.extract_strided_slice %1 {offsets = [0, 0, 0, 0, 1, 0], sizes = [1, 8, 1, 8, 1, 8], strides = [1, 1, 1, 1, 1, 1]} : vector<1x8x2x8x2x8xbf16> to vector<1x8x1x8x1x8xbf16>
    %5 = vector.shape_cast %4 : vector<1x8x1x8x1x8xbf16> to vector<1x8x8x8xbf16>
    %6 = vector.extract_strided_slice %1 {offsets = [0, 0, 1, 0, 0, 0], sizes = [1, 8, 1, 8, 1, 8], strides = [1, 1, 1, 1, 1, 1]} : vector<1x8x2x8x2x8xbf16> to vector<1x8x1x8x1x8xbf16>
    %7 = vector.shape_cast %6 : vector<1x8x1x8x1x8xbf16> to vector<1x8x8x8xbf16>
    %8 = vector.extract_strided_slice %1 {offsets = [0, 0, 1, 0, 1, 0], sizes = [1, 8, 1, 8, 1, 8], strides = [1, 1, 1, 1, 1, 1]} : vector<1x8x2x8x2x8xbf16> to vector<1x8x1x8x1x8xbf16>
    %9 = vector.shape_cast %8 : vector<1x8x1x8x1x8xbf16> to vector<1x8x8x8xbf16>
    %cst = arith.constant 0.000000e+00 : bf16
    %10 = vector.broadcast %cst : bf16 to vector<1x1x8x8xbf16>
    %11 = tpu.concatenate %10, %9 in 1 : vector<1x1x8x8xbf16>, vector<1x8x8x8xbf16> -> vector<1x9x8x8xbf16>
    %cst_3 = arith.constant 0.000000e+00 : bf16
    %12 = vector.broadcast %cst_3 : bf16 to vector<1x9x1x8xbf16>
    %13 = tpu.concatenate %12, %11 in 2 : vector<1x9x1x8xbf16>, vector<1x9x8x8xbf16> -> vector<1x9x9x8xbf16>
    %cst_4 = arith.constant 0.000000e+00 : bf16
    %14 = vector.broadcast %cst_4 : bf16 to vector<1x1x8x8xbf16>
    %15 = tpu.concatenate %14, %7 in 1 : vector<1x1x8x8xbf16>, vector<1x8x8x8xbf16> -> vector<1x9x8x8xbf16>
    %cst_5 = arith.constant 0.000000e+00 : bf16
    %16 = vector.broadcast %cst_5 : bf16 to vector<1x9x1x8xbf16>
    %17 = tpu.concatenate %15, %16 in 2 : vector<1x9x8x8xbf16>, vector<1x9x1x8xbf16> -> vector<1x9x9x8xbf16>
    %cst_6 = arith.constant 0.000000e+00 : bf16
    %18 = vector.broadcast %cst_6 : bf16 to vector<1x1x8x8xbf16>
    %19 = tpu.concatenate %5, %18 in 1 : vector<1x8x8x8xbf16>, vector<1x1x8x8xbf16> -> vector<1x9x8x8xbf16>
    %cst_7 = arith.constant 0.000000e+00 : bf16
    %20 = vector.broadcast %cst_7 : bf16 to vector<1x9x1x8xbf16>
    %21 = tpu.concatenate %20, %19 in 2 : vector<1x9x1x8xbf16>, vector<1x9x8x8xbf16> -> vector<1x9x9x8xbf16>
    %cst_8 = arith.constant 0.000000e+00 : bf16
    %22 = vector.broadcast %cst_8 : bf16 to vector<1x1x8x8xbf16>
    %23 = tpu.concatenate %3, %22 in 1 : vector<1x8x8x8xbf16>, vector<1x1x8x8xbf16> -> vector<1x9x8x8xbf16>
    %cst_9 = arith.constant 0.000000e+00 : bf16
    %24 = vector.broadcast %cst_9 : bf16 to vector<1x9x1x8xbf16>
    %25 = tpu.concatenate %23, %24 in 2 : vector<1x9x8x8xbf16>, vector<1x9x1x8xbf16> -> vector<1x9x9x8xbf16>
    %26 = vector.extract_strided_slice %13 {offsets = [0, 0, 0, 0], sizes = [1, 8, 8, 8], strides = [1, 1, 1, 1]} : vector<1x9x9x8xbf16> to vector<1x8x8x8xbf16>
    %27 = vector.extract_strided_slice %17 {offsets = [0, 0, 0, 0], sizes = [1, 8, 8, 8], strides = [1, 1, 1, 1]} : vector<1x9x9x8xbf16> to vector<1x8x8x8xbf16>
    %28 = vector.extract_strided_slice %13 {offsets = [0, 0, 1, 0], sizes = [1, 8, 8, 8], strides = [1, 1, 1, 1]} : vector<1x9x9x8xbf16> to vector<1x8x8x8xbf16>
    %29 = vector.extract_strided_slice %21 {offsets = [0, 0, 0, 0], sizes = [1, 8, 8, 8], strides = [1, 1, 1, 1]} : vector<1x9x9x8xbf16> to vector<1x8x8x8xbf16>
    %30 = vector.extract_strided_slice %25 {offsets = [0, 0, 0, 0], sizes = [1, 8, 8, 8], strides = [1, 1, 1, 1]} : vector<1x9x9x8xbf16> to vector<1x8x8x8xbf16>
    %31 = vector.extract_strided_slice %21 {offsets = [0, 0, 1, 0], sizes = [1, 8, 8, 8], strides = [1, 1, 1, 1]} : vector<1x9x9x8xbf16> to vector<1x8x8x8xbf16>
    %32 = vector.extract_strided_slice %13 {offsets = [0, 1, 0, 0], sizes = [1, 8, 8, 8], strides = [1, 1, 1, 1]} : vector<1x9x9x8xbf16> to vector<1x8x8x8xbf16>
    %33 = vector.extract_strided_slice %17 {offsets = [0, 1, 0, 0], sizes = [1, 8, 8, 8], strides = [1, 1, 1, 1]} : vector<1x9x9x8xbf16> to vector<1x8x8x8xbf16>
    %34 = vector.extract_strided_slice %13 {offsets = [0, 1, 1, 0], sizes = [1, 8, 8, 8], strides = [1, 1, 1, 1]} : vector<1x9x9x8xbf16> to vector<1x8x8x8xbf16>
    %35 = tpu.concatenate %26, %27, %28, %29, %30, %31, %32, %33, %34 in 3 : vector<1x8x8x8xbf16>, vector<1x8x8x8xbf16>, vector<1x8x8x8xbf16>, vector<1x8x8x8xbf16>, vector<1x8x8x8xbf16>, vector<1x8x8x8xbf16>, vector<1x8x8x8xbf16>, vector<1x8x8x8xbf16>, vector<1x8x8x8xbf16> -> vector<1x8x8x72xbf16>
    %36 = vector.shape_cast %35 : vector<1x8x8x72xbf16> to vector<64x72xbf16>
    %c0_10 = arith.constant 0 : index
    %c0_11 = arith.constant 0 : index
    %37 = vector.load %arg2[%c0_10, %c0_11] : memref<72x8xbf16, #tpu.memory_space<vmem>>, vector<72x8xbf16>
    %cst_12 = arith.constant dense<0.000000e+00> : vector<64x8xf32>
    %38 = tpu.matmul %36, %37, %cst_12 {dimension_numbers = #tpu.dot_dimension_numbers<[1], [0], [0], [1], [0, 0, 1, 1], [], []>} : vector<64x72xbf16>, vector<72x8xbf16>, vector<64x8xf32> -> vector<64x8xf32>
    %c0_13 = arith.constant 0 : index
    %c0_14 = arith.constant 0 : index
    %39 = vector.load %arg4[%c0_13, %c0_14] : memref<1x8xf32, #tpu.memory_space<vmem>>, vector<1x8xf32>
    %40 = vector.broadcast %39 : vector<1x8xf32> to vector<64x8xf32>
    %41 = arith.addf %38, %40 : vector<64x8xf32>
    %cst_15 = arith.constant 0.000000e+00 : f32
    %42 = vector.broadcast %cst_15 : f32 to vector<64x8xf32>
    %43 = arith.maximumf %41, %42 : vector<64x8xf32>
    %44 = vector.shape_cast %43 : vector<64x8xf32> to vector<1x8x8x8xf32>
    %45 = arith.truncf %44 : vector<1x8x8x8xf32> to vector<1x8x8x8xbf16>
    %46 = vector.shape_cast %45 : vector<1x8x8x8xbf16> to vector<1x4x2x4x2x8xbf16>
    %47 = vector.extract_strided_slice %46 {offsets = [0, 0, 0, 0, 0, 0], sizes = [1, 4, 1, 4, 1, 8], strides = [1, 1, 1, 1, 1, 1]} : vector<1x4x2x4x2x8xbf16> to vector<1x4x1x4x1x8xbf16>
    %48 = vector.shape_cast %47 : vector<1x4x1x4x1x8xbf16> to vector<1x4x4x8xbf16>
    %49 = vector.extract_strided_slice %46 {offsets = [0, 0, 0, 0, 1, 0], sizes = [1, 4, 1, 4, 1, 8], strides = [1, 1, 1, 1, 1, 1]} : vector<1x4x2x4x2x8xbf16> to vector<1x4x1x4x1x8xbf16>
    %50 = vector.shape_cast %49 : vector<1x4x1x4x1x8xbf16> to vector<1x4x4x8xbf16>
    %51 = vector.extract_strided_slice %46 {offsets = [0, 0, 1, 0, 0, 0], sizes = [1, 4, 1, 4, 1, 8], strides = [1, 1, 1, 1, 1, 1]} : vector<1x4x2x4x2x8xbf16> to vector<1x4x1x4x1x8xbf16>
    %52 = vector.shape_cast %51 : vector<1x4x1x4x1x8xbf16> to vector<1x4x4x8xbf16>
    %53 = vector.extract_strided_slice %46 {offsets = [0, 0, 1, 0, 1, 0], sizes = [1, 4, 1, 4, 1, 8], strides = [1, 1, 1, 1, 1, 1]} : vector<1x4x2x4x2x8xbf16> to vector<1x4x1x4x1x8xbf16>
    %54 = vector.shape_cast %53 : vector<1x4x1x4x1x8xbf16> to vector<1x4x4x8xbf16>
    %cst_16 = arith.constant 0.000000e+00 : bf16
    %55 = vector.broadcast %cst_16 : bf16 to vector<1x1x4x8xbf16>
    %56 = tpu.concatenate %55, %54 in 1 : vector<1x1x4x8xbf16>, vector<1x4x4x8xbf16> -> vector<1x5x4x8xbf16>
    %cst_17 = arith.constant 0.000000e+00 : bf16
    %57 = vector.broadcast %cst_17 : bf16 to vector<1x5x1x8xbf16>
    %58 = tpu.concatenate %57, %56 in 2 : vector<1x5x1x8xbf16>, vector<1x5x4x8xbf16> -> vector<1x5x5x8xbf16>
    %cst_18 = arith.constant 0.000000e+00 : bf16
    %59 = vector.broadcast %cst_18 : bf16 to vector<1x1x4x8xbf16>
    %60 = tpu.concatenate %59, %52 in 1 : vector<1x1x4x8xbf16>, vector<1x4x4x8xbf16> -> vector<1x5x4x8xbf16>
    %cst_19 = arith.constant 0.000000e+00 : bf16
    %61 = vector.broadcast %cst_19 : bf16 to vector<1x5x1x8xbf16>
    %62 = tpu.concatenate %60, %61 in 2 : vector<1x5x4x8xbf16>, vector<1x5x1x8xbf16> -> vector<1x5x5x8xbf16>
    %cst_20 = arith.constant 0.000000e+00 : bf16
    %63 = vector.broadcast %cst_20 : bf16 to vector<1x1x4x8xbf16>
    %64 = tpu.concatenate %50, %63 in 1 : vector<1x4x4x8xbf16>, vector<1x1x4x8xbf16> -> vector<1x5x4x8xbf16>
    %cst_21 = arith.constant 0.000000e+00 : bf16
    %65 = vector.broadcast %cst_21 : bf16 to vector<1x5x1x8xbf16>
    %66 = tpu.concatenate %65, %64 in 2 : vector<1x5x1x8xbf16>, vector<1x5x4x8xbf16> -> vector<1x5x5x8xbf16>
    %cst_22 = arith.constant 0.000000e+00 : bf16
    %67 = vector.broadcast %cst_22 : bf16 to vector<1x1x4x8xbf16>
    %68 = tpu.concatenate %48, %67 in 1 : vector<1x4x4x8xbf16>, vector<1x1x4x8xbf16> -> vector<1x5x4x8xbf16>
    %cst_23 = arith.constant 0.000000e+00 : bf16
    %69 = vector.broadcast %cst_23 : bf16 to vector<1x5x1x8xbf16>
    %70 = tpu.concatenate %68, %69 in 2 : vector<1x5x4x8xbf16>, vector<1x5x1x8xbf16> -> vector<1x5x5x8xbf16>
    %71 = vector.extract_strided_slice %58 {offsets = [0, 0, 0, 0], sizes = [1, 4, 4, 8], strides = [1, 1, 1, 1]} : vector<1x5x5x8xbf16> to vector<1x4x4x8xbf16>
    %72 = vector.extract_strided_slice %62 {offsets = [0, 0, 0, 0], sizes = [1, 4, 4, 8], strides = [1, 1, 1, 1]} : vector<1x5x5x8xbf16> to vector<1x4x4x8xbf16>
    %73 = vector.extract_strided_slice %58 {offsets = [0, 0, 1, 0], sizes = [1, 4, 4, 8], strides = [1, 1, 1, 1]} : vector<1x5x5x8xbf16> to vector<1x4x4x8xbf16>
    %74 = vector.extract_strided_slice %66 {offsets = [0, 0, 0, 0], sizes = [1, 4, 4, 8], strides = [1, 1, 1, 1]} : vector<1x5x5x8xbf16> to vector<1x4x4x8xbf16>
    %75 = vector.extract_strided_slice %70 {offsets = [0, 0, 0, 0], sizes = [1, 4, 4, 8], strides = [1, 1, 1, 1]} : vector<1x5x5x8xbf16> to vector<1x4x4x8xbf16>
    %76 = vector.extract_strided_slice %66 {offsets = [0, 0, 1, 0], sizes = [1, 4, 4, 8], strides = [1, 1, 1, 1]} : vector<1x5x5x8xbf16> to vector<1x4x4x8xbf16>
    %77 = vector.extract_strided_slice %58 {offsets = [0, 1, 0, 0], sizes = [1, 4, 4, 8], strides = [1, 1, 1, 1]} : vector<1x5x5x8xbf16> to vector<1x4x4x8xbf16>
    %78 = vector.extract_strided_slice %62 {offsets = [0, 1, 0, 0], sizes = [1, 4, 4, 8], strides = [1, 1, 1, 1]} : vector<1x5x5x8xbf16> to vector<1x4x4x8xbf16>
    %79 = vector.extract_strided_slice %58 {offsets = [0, 1, 1, 0], sizes = [1, 4, 4, 8], strides = [1, 1, 1, 1]} : vector<1x5x5x8xbf16> to vector<1x4x4x8xbf16>
    %80 = tpu.concatenate %71, %72, %73, %74, %75, %76, %77, %78, %79 in 3 : vector<1x4x4x8xbf16>, vector<1x4x4x8xbf16>, vector<1x4x4x8xbf16>, vector<1x4x4x8xbf16>, vector<1x4x4x8xbf16>, vector<1x4x4x8xbf16>, vector<1x4x4x8xbf16>, vector<1x4x4x8xbf16>, vector<1x4x4x8xbf16> -> vector<1x4x4x72xbf16>
    %81 = vector.shape_cast %80 : vector<1x4x4x72xbf16> to vector<16x72xbf16>
    %c0_24 = arith.constant 0 : index
    %c0_25 = arith.constant 0 : index
    %82 = vector.load %arg3[%c0_24, %c0_25] : memref<72x16xbf16, #tpu.memory_space<vmem>>, vector<72x16xbf16>
    %cst_26 = arith.constant dense<0.000000e+00> : vector<16x16xf32>
    %83 = tpu.matmul %81, %82, %cst_26 {dimension_numbers = #tpu.dot_dimension_numbers<[1], [0], [0], [1], [0, 0, 1, 1], [], []>} : vector<16x72xbf16>, vector<72x16xbf16>, vector<16x16xf32> -> vector<16x16xf32>
    %c0_27 = arith.constant 0 : index
    %c0_28 = arith.constant 0 : index
    %84 = vector.load %arg5[%c0_27, %c0_28] : memref<1x16xf32, #tpu.memory_space<vmem>>, vector<1x16xf32>
    %85 = vector.broadcast %84 : vector<1x16xf32> to vector<16x16xf32>
    %86 = arith.addf %83, %85 : vector<16x16xf32>
    %cst_29 = arith.constant 0.000000e+00 : f32
    %87 = vector.broadcast %cst_29 : f32 to vector<16x16xf32>
    %88 = arith.maximumf %86, %87 : vector<16x16xf32>
    %89 = vector.shape_cast %88 : vector<16x16xf32> to vector<1x16x16xf32>
    %cst_30 = arith.constant dense<0.000000e+00> : vector<1x16xf32>
    %90 = vector.multi_reduction <add>, %89, %cst_30 [1] : vector<1x16x16xf32> to vector<1x16xf32>
    %cst_31 = arith.constant 1.600000e+01 : f32
    %91 = vector.broadcast %cst_31 : f32 to vector<1x16xf32>
    %92 = arith.divf %90, %91 : vector<1x16xf32>
    %93 = arith.truncf %92 : vector<1x16xf32> to vector<1x16xbf16>
    %c0_32 = arith.constant 0 : index
    %c0_33 = arith.constant 0 : index
    %94 = vector.load %arg6[%c0_32, %c0_33] : memref<16x128xbf16, #tpu.memory_space<vmem>>, vector<16x128xbf16>
    %cst_34 = arith.constant dense<0.000000e+00> : vector<1x128xf32>
    %95 = tpu.matmul %93, %94, %cst_34 {dimension_numbers = #tpu.dot_dimension_numbers<[1], [0], [0], [1], [0, 0, 1, 1], [], []>} : vector<1x16xbf16>, vector<16x128xbf16>, vector<1x128xf32> -> vector<1x128xf32>
    %c0_35 = arith.constant 0 : index
    %c0_36 = arith.constant 0 : index
    %96 = vector.load %arg7[%c0_35, %c0_36] : memref<1x128xf32, #tpu.memory_space<vmem>>, vector<1x128xf32>
    %97 = arith.addf %95, %96 : vector<1x128xf32>
    %98 = vector.shape_cast %97 : vector<1x128xf32> to vector<1x1x128xf32>
    %c0_37 = arith.constant 0 : index
    %c0_38 = arith.constant 0 : index
    %c0_39 = arith.constant 0 : index
    %99 = vector.load %arg8[%c0_37, %c0_38, %c0_39] : memref<1x1x128xf32, #tpu.memory_space<vmem>>, vector<1x1x128xf32>
    tpu.vector_store %arg8[%c0_37, %c0_38, %c0_39], %98 {strides = array<i32>} : memref<1x1x128xf32, #tpu.memory_space<vmem>>, vector<1x1x128xf32>,
    return
  }
  func.func @transform_0(%arg0: i32) -> (i32, i32, i32, i32) {
    %c0_i32 = arith.constant 0 : i32
    %c0_i32_0 = arith.constant 0 : i32
    %c0_i32_1 = arith.constant 0 : i32
    %c0_i32_2 = arith.constant 0 : i32
    return %arg0, %c0_i32, %c0_i32_0, %c0_i32_1 : i32, i32, i32, i32
  }
  func.func @transform_1(%arg0: i32) -> (i32, i32) {
    %c0_i32 = arith.constant 0 : i32
    %c0_i32_0 = arith.constant 0 : i32
    %c0_i32_1 = arith.constant 0 : i32
    return %c0_i32, %c0_i32_0 : i32, i32
  }
  func.func @transform_2(%arg0: i32) -> (i32, i32) {
    %c0_i32 = arith.constant 0 : i32
    %c0_i32_0 = arith.constant 0 : i32
    %c0_i32_1 = arith.constant 0 : i32
    return %c0_i32, %c0_i32_0 : i32, i32
  }
  func.func @transform_3(%arg0: i32) -> (i32, i32) {
    %c0_i32 = arith.constant 0 : i32
    %c0_i32_0 = arith.constant 0 : i32
    %c0_i32_1 = arith.constant 0 : i32
    return %c0_i32, %c0_i32_0 : i32, i32
  }
  func.func @transform_4(%arg0: i32) -> (i32, i32) {
    %c0_i32 = arith.constant 0 : i32
    %c0_i32_0 = arith.constant 0 : i32
    %c0_i32_1 = arith.constant 0 : i32
    return %c0_i32, %c0_i32_0 : i32, i32
  }
  func.func @transform_5(%arg0: i32) -> (i32, i32) {
    %c0_i32 = arith.constant 0 : i32
    %c0_i32_0 = arith.constant 0 : i32
    %c0_i32_1 = arith.constant 0 : i32
    return %c0_i32, %c0_i32_0 : i32, i32
  }
  func.func @transform_6(%arg0: i32) -> (i32, i32) {
    %c0_i32 = arith.constant 0 : i32
    %c0_i32_0 = arith.constant 0 : i32
    %c0_i32_1 = arith.constant 0 : i32
    return %c0_i32, %c0_i32_0 : i32, i32
  }
  func.func @transform_7(%arg0: i32) -> (i32, i32, i32) {
    %c0_i32 = arith.constant 0 : i32
    %c0_i32_0 = arith.constant 0 : i32
    %c0_i32_1 = arith.constant 0 : i32
    return %arg0, %c0_i32, %c0_i32_0 : i32, i32, i32
  }
}

</mosaic_0001>

<llo_original>
// kernel: simple_cnn_forward.1
$region0: #{simple_cnn_forward.1}
  #allocation0 [shape = 'u32[]', space=smem, size = 0x4, offset = 0x4, fixed_abs, tag = 'smem constant byte address 0x4 - core index']
  #allocation1 [shape = 'u32[72,128]{1,0:T(1,128)}', space=vmem, size = 0x9000, scoped, tag = 'internal scratch']
  %s0 = inlined_call_operand.vmem [shape: bf16[2,16,16,8], index: 0, kind: input, shape index: {}]
  %s1 = inlined_call_operand.vmem [shape: bf16[72,8], index: 1, kind: input, shape index: {}]
  %s2 = inlined_call_operand.vmem [shape: bf16[72,16], index: 2, kind: input, shape index: {}]
  %s3 = inlined_call_operand.vmem [shape: f32[1,8], index: 3, kind: input, shape index: {}]
  %s4 = inlined_call_operand.vmem [shape: f32[1,16], index: 4, kind: input, shape index: {}]
  %s5 = inlined_call_operand.vmem [shape: bf16[16,128], index: 5, kind: input, shape index: {}]
  %s6 = inlined_call_operand.vmem [shape: f32[1,128], index: 6, kind: input, shape index: {}]
  %s7 = inlined_call_operand.hbm [shape: f32[2,1,128], index: 7, kind: output, shape index: {}]
  %s8 = sld [smem:[#allocation0]]
  $region61: #{simple_cnn_forward.1} parent=0
    _
  %s10 = ssub.s32 1, %s8
  %s11 = scalar_select 0, %s10, %s8
  $region1: #{simple_cnn_forward.1} parent=0
    #allocation2 [shape = 'u8[1024]{0}', space=vmem, size = 0x400, scoped, tag = 'output window, operand 0']
    #allocation3 [shape = 's32[2]{0}', space=sflag, size = 0x8, scoped, tag = 'scoped memory for simple_cnn_forward.1']
    %12 = vsyncpa [#allocation3], 0
    %s13 = scalar_lea.sflag [#allocation3], 1
    %14 = vsyncpa %s13, 0
    loop: start=0, step=1, limit=4
    $region2: #{simple_cnn_forward.1} parent=1 // loop_pre_header
      _
    $region3: #{simple_cnn_forward.1} parent=1 // loop_header
      %s16 = sphi 0, %s20
      %p17 = scmp.ge.s32.totalorder %s16, 4
      %s26 = sphi 0, %s28
      %s29 = sphi 0, %s26
      %s30 = sphi 0, %s29
      %s46 = sphi 0, %s30
      %s50 = sphi 0, %s50
      %s52 = sphi 0, %s50
      %s53 = sphi 0, %s52
      %s67 = sphi 0, %s53
      %s71 = sphi 0, %s71
      %s73 = sphi 0, %s71
      %s74 = sphi 0, %s73
      %s88 = sphi 0, %s74
      %s92 = sphi 0, %s92
      %s94 = sphi 0, %s92
      %s95 = sphi 0, %s94
      %s109 = sphi 0, %s95
      %s113 = sphi 0, %s113
      %s115 = sphi 0, %s113
      %s116 = sphi 0, %s115
      %s130 = sphi 0, %s116
      %s134 = sphi 0, %s134
      %s136 = sphi 0, %s134
      %s137 = sphi 0, %s136
      %s151 = sphi 0, %s137
      %s155 = sphi 0, %s155
      %s157 = sphi 0, %s155
      %s158 = sphi 0, %s157
      %s172 = sphi 0, %s158
      %s178 = sphi 0, %s180
      %s181 = sphi 0, %s178
      %s182 = sphi 0, %s181
      %s198 = sphi 0, %s182
    $region4: #{simple_cnn_forward.1} parent=1 // loop_header_branch
      %19 = sbr.rel (%p17) target = $region8
    $region5: #{simple_cnn_forward.1} parent=1 // loop_body
      %s21 = ssub.s32 %s16, 1
      %s22 = ssub.s32 %s16, 2
      %s23 = sadd.s32 %s16, 1
      %s24 = ssub.s32 %s16, %s23
      %p25 = scmp.eq.s32.totalorder %s24, 0
      %s27 = sadd.s32 %s26, 1
      %s28 = scalar_select %p25, %s26, %s27
      %p31 = pneg %p25
      %p32 = scmp.eq.s32.totalorder %s16, 1
      %p33 = por %p31, %p32
      %p34 = scmp.ne.s32.totalorder %s26, %s29
      %p35 = scmp.eq.s32.totalorder %s16, 0
      %p36 = por %p34, %p35
      %p37 = scmp.ne.s32.totalorder %s26, %s29
      %p38 = scmp.eq.s32.totalorder %s21, 1
      %p39 = por %p37, %p38
      %p40 = scmp.ne.s32.totalorder %s29, %s30
      %p41 = scmp.eq.s32.totalorder %s21, 0
      %p42 = por %p40, %p41
      %p43 = scmp.ne.s32.totalorder %s29, %s30
      %p44 = scmp.eq.s32.totalorder %s22, 1
      %p45 = por %p43, %p44
      %p47 = scmp.ne.s32.totalorder %s30, %s46
      %p48 = scmp.eq.s32.totalorder %s22, 0
      %p49 = por %p47, %p48
      %s51 = sadd.s32 %s50, 1
      %p54 = scmp.eq.s32.totalorder %s16, 1
      %p55 = scmp.ne.s32.totalorder %s50, %s52
      %p56 = scmp.eq.s32.totalorder %s16, 0
      %p57 = por %p55, %p56
      %p58 = scmp.ne.s32.totalorder %s50, %s52
      %p59 = scmp.eq.s32.totalorder %s21, 1
      %p60 = por %p58, %p59
      %p61 = scmp.ne.s32.totalorder %s52, %s53
      %p62 = scmp.eq.s32.totalorder %s21, 0
      %p63 = por %p61, %p62
      %p64 = scmp.ne.s32.totalorder %s52, %s53
      %p65 = scmp.eq.s32.totalorder %s22, 1
      %p66 = por %p64, %p65
      %p68 = scmp.ne.s32.totalorder %s53, %s67
      %p69 = scmp.eq.s32.totalorder %s22, 0
      %p70 = por %p68, %p69
      %s72 = sadd.s32 %s71, 1
      %p75 = scmp.eq.s32.totalorder %s16, 1
      %p76 = scmp.ne.s32.totalorder %s71, %s73
      %p77 = scmp.eq.s32.totalorder %s16, 0
      %p78 = por %p76, %p77
      %p79 = scmp.ne.s32.totalorder %s71, %s73
      %p80 = scmp.eq.s32.totalorder %s21, 1
      %p81 = por %p79, %p80
      %p82 = scmp.ne.s32.totalorder %s73, %s74
      %p83 = scmp.eq.s32.totalorder %s21, 0
      %p84 = por %p82, %p83
      %p85 = scmp.ne.s32.totalorder %s73, %s74
      %p86 = scmp.eq.s32.totalorder %s22, 1
      %p87 = por %p85, %p86
      %p89 = scmp.ne.s32.totalorder %s74, %s88
      %p90 = scmp.eq.s32.totalorder %s22, 0
      %p91 = por %p89, %p90
      %s93 = sadd.s32 %s92, 1
      %p96 = scmp.eq.s32.totalorder %s16, 1
      %p97 = scmp.ne.s32.totalorder %s92, %s94
      %p98 = scmp.eq.s32.totalorder %s16, 0
      %p99 = por %p97, %p98
      %p100 = scmp.ne.s32.totalorder %s92, %s94
      %p101 = scmp.eq.s32.totalorder %s21, 1
      %p102 = por %p100, %p101
      %p103 = scmp.ne.s32.totalorder %s94, %s95
      %p104 = scmp.eq.s32.totalorder %s21, 0
      %p105 = por %p103, %p104
      %p106 = scmp.ne.s32.totalorder %s94, %s95
      %p107 = scmp.eq.s32.totalorder %s22, 1
      %p108 = por %p106, %p107
      %p110 = scmp.ne.s32.totalorder %s95, %s109
      %p111 = scmp.eq.s32.totalorder %s22, 0
      %p112 = por %p110, %p111
      %s114 = sadd.s32 %s113, 1
      %p117 = scmp.eq.s32.totalorder %s16, 1
      %p118 = scmp.ne.s32.totalorder %s113, %s115
      %p119 = scmp.eq.s32.totalorder %s16, 0
      %p120 = por %p118, %p119
      %p121 = scmp.ne.s32.totalorder %s113, %s115
      %p122 = scmp.eq.s32.totalorder %s21, 1
      %p123 = por %p121, %p122
      %p124 = scmp.ne.s32.totalorder %s115, %s116
      %p125 = scmp.eq.s32.totalorder %s21, 0
      %p126 = por %p124, %p125
      %p127 = scmp.ne.s32.totalorder %s115, %s116
      %p128 = scmp.eq.s32.totalorder %s22, 1
      %p129 = por %p127, %p128
      %p131 = scmp.ne.s32.totalorder %s116, %s130
      %p132 = scmp.eq.s32.totalorder %s22, 0
      %p133 = por %p131, %p132
      %s135 = sadd.s32 %s134, 1
      %p138 = scmp.eq.s32.totalorder %s16, 1
      %p139 = scmp.ne.s32.totalorder %s134, %s136
      %p140 = scmp.eq.s32.totalorder %s16, 0
      %p141 = por %p139, %p140
      %p142 = scmp.ne.s32.totalorder %s134, %s136
      %p143 = scmp.eq.s32.totalorder %s21, 1
      %p144 = por %p142, %p143
      %p145 = scmp.ne.s32.totalorder %s136, %s137
      %p146 = scmp.eq.s32.totalorder %s21, 0
      %p147 = por %p145, %p146
      %p148 = scmp.ne.s32.totalorder %s136, %s137
      %p149 = scmp.eq.s32.totalorder %s22, 1
      %p150 = por %p148, %p149
      %p152 = scmp.ne.s32.totalorder %s137, %s151
      %p153 = scmp.eq.s32.totalorder %s22, 0
      %p154 = por %p152, %p153
      %s156 = sadd.s32 %s155, 1
      %p159 = scmp.eq.s32.totalorder %s16, 1
      %p160 = scmp.ne.s32.totalorder %s155, %s157
      %p161 = scmp.eq.s32.totalorder %s16, 0
      %p162 = por %p160, %p161
      %p163 = scmp.ne.s32.totalorder %s155, %s157
      %p164 = scmp.eq.s32.totalorder %s21, 1
      %p165 = por %p163, %p164
      %p166 = scmp.ne.s32.totalorder %s157, %s158
      %p167 = scmp.eq.s32.totalorder %s21, 0
      %p168 = por %p166, %p167
      %p169 = scmp.ne.s32.totalorder %s157, %s158
      %p170 = scmp.eq.s32.totalorder %s22, 1
      %p171 = por %p169, %p170
      %p173 = scmp.ne.s32.totalorder %s158, %s172
      %p174 = scmp.eq.s32.totalorder %s22, 0
      %p175 = por %p173, %p174
      %s176 = ssub.s32 %s16, %s23
      %p177 = scmp.eq.s32.totalorder %s176, 0
      %s179 = sadd.s32 %s178, 1
      %s180 = scalar_select %p177, %s178, %s179
      %p183 = pneg %p177
      %p184 = scmp.eq.s32.totalorder %s16, 1
      %p185 = por %p183, %p184
      %p186 = scmp.ne.s32.totalorder %s178, %s181
      %p187 = scmp.eq.s32.totalorder %s16, 0
      %p188 = por %p186, %p187
      %p189 = scmp.ne.s32.totalorder %s178, %s181
      %p190 = scmp.eq.s32.totalorder %s21, 1
      %p191 = por %p189, %p190
      %p192 = scmp.ne.s32.totalorder %s181, %s182
      %p193 = scmp.eq.s32.totalorder %s21, 0
      %p194 = por %p192, %p193
      %p195 = scmp.ne.s32.totalorder %s181, %s182
      %p196 = scmp.eq.s32.totalorder %s22, 1
      %p197 = por %p195, %p196
      %p199 = scmp.ne.s32.totalorder %s182, %s198
      %p200 = scmp.eq.s32.totalorder %s22, 0
      %p201 = por %p199, %p200
      %p202 = scmp.le.s32.totalorder 1, %s16
      %p203 = scmp.lt.s32.totalorder %s16, 3
      %p204 = pnand %p202, %p203
      %p205 = pneg %p204
      // Predicated region
      $region9: #{simple_cnn_forward.1} parent=5 // pred_check
        _
      $region10: #{simple_cnn_forward.1} parent=5 // pred_check_branch
        %207 = sbr.rel (%p204) target = $region12
      $region11: #{simple_cnn_forward.1} parent=5 // pred_region
        %s208 = ssub.s32 %s16, 1
        // Predicated region
        $region13: #{simple_cnn_forward.1} parent=11 // pred_check
          %p209 = pneg %p63
        $region14: #{simple_cnn_forward.1} parent=11 // pred_check_branch
          %211 = sbr.rel (%p209) target = $region16
        $region15: #{simple_cnn_forward.1} parent=11 // pred_region
          _
        $region16: #{simple_cnn_forward.1} parent=11 // pred_fallthru
          _
        // Predicated region
        $region17: #{simple_cnn_forward.1} parent=11 // pred_check
          %p212 = pneg %p84
        $region18: #{simple_cnn_forward.1} parent=11 // pred_check_branch
          %214 = sbr.rel (%p212) target = $region20
        $region19: #{simple_cnn_forward.1} parent=11 // pred_region
          _
        $region20: #{simple_cnn_forward.1} parent=11 // pred_fallthru
          _
        // Predicated region
        $region21: #{simple_cnn_forward.1} parent=11 // pred_check
          %p215 = pneg %p105
        $region22: #{simple_cnn_forward.1} parent=11 // pred_check_branch
          %217 = sbr.rel (%p215) target = $region24
        $region23: #{simple_cnn_forward.1} parent=11 // pred_region
          _
        $region24: #{simple_cnn_forward.1} parent=11 // pred_fallthru
          _
        // Predicated region
        $region25: #{simple_cnn_forward.1} parent=11 // pred_check
          %p218 = pneg %p126
        $region26: #{simple_cnn_forward.1} parent=11 // pred_check_branch
          %220 = sbr.rel (%p218) target = $region28
        $region27: #{simple_cnn_forward.1} parent=11 // pred_region
          _
        $region28: #{simple_cnn_forward.1} parent=11 // pred_fallthru
          _
        // Predicated region
        $region29: #{simple_cnn_forward.1} parent=11 // pred_check
          %p221 = pneg %p147
        $region30: #{simple_cnn_forward.1} parent=11 // pred_check_branch
          %223 = sbr.rel (%p221) target = $region32
        $region31: #{simple_cnn_forward.1} parent=11 // pred_region
          _
        $region32: #{simple_cnn_forward.1} parent=11 // pred_fallthru
          _
        // Predicated region
        $region33: #{simple_cnn_forward.1} parent=11 // pred_check
          %p224 = pneg %p168
        $region34: #{simple_cnn_forward.1} parent=11 // pred_check_branch
          %226 = sbr.rel (%p224) target = $region36
        $region35: #{simple_cnn_forward.1} parent=11 // pred_region
          _
        $region36: #{simple_cnn_forward.1} parent=11 // pred_fallthru
          _
      $region12: #{simple_cnn_forward.1} parent=5 // pred_fallthru
        _
      %p227 = scmp.lt.s32.totalorder %s16, 2
      // Predicated region
      $region37: #{simple_cnn_forward.1} parent=5 // pred_check
        %p228 = pneg %p227
      $region38: #{simple_cnn_forward.1} parent=5 // pred_check_branch
        %230 = sbr.rel (%p228) target = $region40
      $region39: #{simple_cnn_forward.1} parent=5 // pred_region
        // Predicated region
        $region41: #{simple_cnn_forward.1} parent=39 // pred_check
          %p231 = pneg %p36
        $region42: #{simple_cnn_forward.1} parent=39 // pred_check_branch
          %233 = sbr.rel (%p231) target = $region44
        $region43: #{simple_cnn_forward.1} parent=39 // pred_region
          %p234 = scmp.lt.s32.totalorder %s16, 1
          %s235 = scalar_select %p234, %s16, 1
          %s236 = smul.addr %s235, 32
          %s237 = smul.addr %s236, 4
          %s238 = scalar_lea.vmem %s0, %s237
        $region44: #{simple_cnn_forward.1} parent=39 // pred_fallthru
          _
      $region40: #{simple_cnn_forward.1} parent=5 // pred_fallthru
        _
      %p239 = scmp.le.s32.totalorder 1, %s16
      %p240 = scmp.lt.s32.totalorder %s16, 3
      %p241 = pnand %p239, %p240
      %p242 = pneg %p241
      // Predicated region
      $region45: #{simple_cnn_forward.1} parent=5 // pred_check
        _
      $region46: #{simple_cnn_forward.1} parent=5 // pred_check_branch
        %244 = sbr.rel (%p241) target = $region48
      $region47: #{simple_cnn_forward.1} parent=5 // pred_region
        %s245 = ssub.s32 %s16, 1
        %p246 = scmp.lt.s32.totalorder %s21, 1
        %s247 = scalar_select %p246, %s21, 1
        %s248 = smul.addr %s247, 32
        %s249 = smul.addr %s248, 4
        %s250 = scalar_lea.vmem %s0, %s249
        %p251 = pneg %p42
        %p252 = pneg %p39
        %p253 = pneg %p63
        %p254 = pneg %p60
        %p255 = pneg %p84
        %p256 = pneg %p81
        %p257 = pneg %p105
        %p258 = pneg %p102
        %p259 = pneg %p126
        %p260 = pneg %p123
        %p261 = pneg %p147
        %p262 = pneg %p144
        %p263 = pneg %p168
        %p264 = pneg %p165
        %p265 = pneg %p194
        %p266 = pneg %p191
        %s267 = sand.u32 %s181, 1
        %s268 = scalar_lea.sflag [#allocation3], %s267
        %s269 = sand.u32 %s181, 1
        %s270 = scalar_lea.vmem [#allocation2], %s269
        %p271 = scmp.lt.s32.totalorder %s21, 1
        %s272 = scalar_select %p271, %s21, 1
        %s273 = smul.addr %s272, 32
        %s274 = smul.addr %s273, 4
        %s275 = scalar_lea.vmem %s0, %s274
        %v277 = vld [vmem:[%s275] sm:$0xf]
        %v278 = vld [vmem:[%s275 + $0x4] sm:$0xf]
        %v279 = vld [vmem:[%s275 + $0x8] sm:$0xf]
        %v280 = vld [vmem:[%s275 + $0xc] sm:$0xf]
        %v281 = vld [vmem:[%s275 + $0x10] sm:$0xf]
        %v282 = vld [vmem:[%s275 + $0x14] sm:$0xf]
        %v283 = vld [vmem:[%s275 + $0x18] sm:$0xf]
        %v284 = vld [vmem:[%s275 + $0x1c] sm:$0xf]
        %v285 = vld [vmem:[%s275 + $0x20] sm:$0xf]
        %v286 = vld [vmem:[%s275 + $0x24] sm:$0xf]
        %v287 = vld [vmem:[%s275 + $0x28] sm:$0xf]
        %v288 = vld [vmem:[%s275 + $0x2c] sm:$0xf]
        %v289 = vld [vmem:[%s275 + $0x30] sm:$0xf]
        %v290 = vld [vmem:[%s275 + $0x34] sm:$0xf]
        %v291 = vld [vmem:[%s275 + $0x38] sm:$0xf]
        %v292 = vld [vmem:[%s275 + $0x3c] sm:$0xf]
        %v293 = vld [vmem:[%s275 + $0x40] sm:$0xf]
        %v294 = vld [vmem:[%s275 + $0x44] sm:$0xf]
        %v295 = vld [vmem:[%s275 + $0x48] sm:$0xf]
        %v296 = vld [vmem:[%s275 + $0x4c] sm:$0xf]
        %v297 = vld [vmem:[%s275 + $0x50] sm:$0xf]
        %v298 = vld [vmem:[%s275 + $0x54] sm:$0xf]
        %v299 = vld [vmem:[%s275 + $0x58] sm:$0xf]
        %v300 = vld [vmem:[%s275 + $0x5c] sm:$0xf]
        %v301 = vld [vmem:[%s275 + $0x60] sm:$0xf]
        %v302 = vld [vmem:[%s275 + $0x64] sm:$0xf]
        %v303 = vld [vmem:[%s275 + $0x68] sm:$0xf]
        %v304 = vld [vmem:[%s275 + $0x6c] sm:$0xf]
        %v305 = vld [vmem:[%s275 + $0x70] sm:$0xf]
        %v306 = vld [vmem:[%s275 + $0x74] sm:$0xf]
        %v307 = vld [vmem:[%s275 + $0x78] sm:$0xf]
        %v308 = vld [vmem:[%s275 + $0x7c] sm:$0xf]
        %v341 = vrot.slane %v277, 3
        %v342 = vrot.slane %v278, 3
        %v343 = vrot.slane %v279, 3
        %v344 = vrot.slane %v280, 3
        %v345 = vrot.slane %v281, 3
        %v346 = vrot.slane %v282, 3
        %v347 = vrot.slane %v283, 3
        %v348 = vrot.slane %v284, 3
        %v349 = vrot.slane %v285, 3
        %v350 = vrot.slane %v286, 3
        %v351 = vrot.slane %v287, 3
        %v352 = vrot.slane %v288, 3
        %v353 = vrot.slane %v289, 3
        %v354 = vrot.slane %v290, 3
        %v355 = vrot.slane %v291, 3
        %v356 = vrot.slane %v292, 3
        %v357 = vrot.slane %v293, 3
        %v358 = vrot.slane %v294, 3
        %v359 = vrot.slane %v295, 3
        %v360 = vrot.slane %v296, 3
        %v361 = vrot.slane %v297, 3
        %v362 = vrot.slane %v298, 3
        %v363 = vrot.slane %v299, 3
        %v364 = vrot.slane %v300, 3
        %v365 = vrot.slane %v301, 3
        %v366 = vrot.slane %v302, 3
        %v367 = vrot.slane %v303, 3
        %v368 = vrot.slane %v304, 3
        %v369 = vrot.slane %v305, 3
        %v370 = vrot.slane %v306, 3
        %v371 = vrot.slane %v307, 3
        %v372 = vrot.slane %v308, 3
        %vm373 = vcmask 1040384
        %v376 = vsel %vm373, %v277, %v341
        %vm377 = vcmask 1041409
        %v378 = vsel %vm377, %v277, %v341
        %v380 = vrot.slane %v378, 1
        %vm381 = vcmask 1042434
        %v382 = vsel %vm381, %v277, %v341
        %v384 = vrot.slane %v382, 2
        %vm385 = vcmask 1043459
        %v386 = vsel %vm385, %v277, %v341
        %v388 = vrot.slane %v386, 3
        %v391 = vsel %vm373, %v278, %v342
        %v392 = vsel %vm377, %v278, %v342
        %v394 = vrot.slane %v392, 1
        %v395 = vsel %vm381, %v278, %v342
        %v397 = vrot.slane %v395, 2
        %v398 = vsel %vm385, %v278, %v342
        %v400 = vrot.slane %v398, 3
        %v403 = vsel %vm373, %v279, %v343
        %v404 = vsel %vm377, %v279, %v343
        %v406 = vrot.slane %v404, 1
        %v407 = vsel %vm381, %v279, %v343
        %v409 = vrot.slane %v407, 2
        %v410 = vsel %vm385, %v279, %v343
        %v412 = vrot.slane %v410, 3
        %v415 = vsel %vm373, %v280, %v344
        %v416 = vsel %vm377, %v280, %v344
        %v418 = vrot.slane %v416, 1
        %v419 = vsel %vm381, %v280, %v344
        %v421 = vrot.slane %v419, 2
        %v422 = vsel %vm385, %v280, %v344
        %v424 = vrot.slane %v422, 3
        %v427 = vsel %vm373, %v281, %v345
        %v428 = vsel %vm377, %v281, %v345
        %v430 = vrot.slane %v428, 1
        %v431 = vsel %vm381, %v281, %v345
        %v433 = vrot.slane %v431, 2
        %v434 = vsel %vm385, %v281, %v345
        %v436 = vrot.slane %v434, 3
        %v439 = vsel %vm373, %v282, %v346
        %v440 = vsel %vm377, %v282, %v346
        %v442 = vrot.slane %v440, 1
        %v443 = vsel %vm381, %v282, %v346
        %v445 = vrot.slane %v443, 2
        %v446 = vsel %vm385, %v282, %v346
        %v448 = vrot.slane %v446, 3
        %v451 = vsel %vm373, %v283, %v347
        %v452 = vsel %vm377, %v283, %v347
        %v454 = vrot.slane %v452, 1
        %v455 = vsel %vm381, %v283, %v347
        %v457 = vrot.slane %v455, 2
        %v458 = vsel %vm385, %v283, %v347
        %v460 = vrot.slane %v458, 3
        %v463 = vsel %vm373, %v284, %v348
        %v464 = vsel %vm377, %v284, %v348
        %v466 = vrot.slane %v464, 1
        %v467 = vsel %vm381, %v284, %v348
        %v469 = vrot.slane %v467, 2
        %v470 = vsel %vm385, %v284, %v348
        %v472 = vrot.slane %v470, 3
        %v475 = vsel %vm373, %v285, %v349
        %v476 = vsel %vm377, %v285, %v349
        %v478 = vrot.slane %v476, 1
        %v479 = vsel %vm381, %v285, %v349
        %v481 = vrot.slane %v479, 2
        %v482 = vsel %vm385, %v285, %v349
        %v484 = vrot.slane %v482, 3
        %v487 = vsel %vm373, %v286, %v350
        %v488 = vsel %vm377, %v286, %v350
        %v490 = vrot.slane %v488, 1
        %v491 = vsel %vm381, %v286, %v350
        %v493 = vrot.slane %v491, 2
        %v494 = vsel %vm385, %v286, %v350
        %v496 = vrot.slane %v494, 3
        %v499 = vsel %vm373, %v287, %v351
        %v500 = vsel %vm377, %v287, %v351
        %v502 = vrot.slane %v500, 1
        %v503 = vsel %vm381, %v287, %v351
        %v505 = vrot.slane %v503, 2
        %v506 = vsel %vm385, %v287, %v351
        %v508 = vrot.slane %v506, 3
        %v511 = vsel %vm373, %v288, %v352
        %v512 = vsel %vm377, %v288, %v352
        %v514 = vrot.slane %v512, 1
        %v515 = vsel %vm381, %v288, %v352
        %v517 = vrot.slane %v515, 2
        %v518 = vsel %vm385, %v288, %v352
        %v520 = vrot.slane %v518, 3
        %v523 = vsel %vm373, %v289, %v353
        %v524 = vsel %vm377, %v289, %v353
        %v526 = vrot.slane %v524, 1
        %v527 = vsel %vm381, %v289, %v353
        %v529 = vrot.slane %v527, 2
        %v530 = vsel %vm385, %v289, %v353
        %v532 = vrot.slane %v530, 3
        %v535 = vsel %vm373, %v290, %v354
        %v536 = vsel %vm377, %v290, %v354
        %v538 = vrot.slane %v536, 1
        %v539 = vsel %vm381, %v290, %v354
        %v541 = vrot.slane %v539, 2
        %v542 = vsel %vm385, %v290, %v354
        %v544 = vrot.slane %v542, 3
        %v547 = vsel %vm373, %v291, %v355
        %v548 = vsel %vm377, %v291, %v355
        %v550 = vrot.slane %v548, 1
        %v551 = vsel %vm381, %v291, %v355
        %v553 = vrot.slane %v551, 2
        %v554 = vsel %vm385, %v291, %v355
        %v556 = vrot.slane %v554, 3
        %v559 = vsel %vm373, %v292, %v356
        %v560 = vsel %vm377, %v292, %v356
        %v562 = vrot.slane %v560, 1
        %v563 = vsel %vm381, %v292, %v356
        %v565 = vrot.slane %v563, 2
        %v566 = vsel %vm385, %v292, %v356
        %v568 = vrot.slane %v566, 3
        %v571 = vsel %vm373, %v293, %v357
        %v572 = vsel %vm377, %v293, %v357
        %v574 = vrot.slane %v572, 1
        %v575 = vsel %vm381, %v293, %v357
        %v577 = vrot.slane %v575, 2
        %v578 = vsel %vm385, %v293, %v357
        %v580 = vrot.slane %v578, 3
        %v583 = vsel %vm373, %v294, %v358
        %v584 = vsel %vm377, %v294, %v358
        %v586 = vrot.slane %v584, 1
        %v587 = vsel %vm381, %v294, %v358
        %v589 = vrot.slane %v587, 2
        %v590 = vsel %vm385, %v294, %v358
        %v592 = vrot.slane %v590, 3
        %v595 = vsel %vm373, %v295, %v359
        %v596 = vsel %vm377, %v295, %v359
        %v598 = vrot.slane %v596, 1
        %v599 = vsel %vm381, %v295, %v359
        %v601 = vrot.slane %v599, 2
        %v602 = vsel %vm385, %v295, %v359
        %v604 = vrot.slane %v602, 3
        %v607 = vsel %vm373, %v296, %v360
        %v608 = vsel %vm377, %v296, %v360
        %v610 = vrot.slane %v608, 1
        %v611 = vsel %vm381, %v296, %v360
        %v613 = vrot.slane %v611, 2
        %v614 = vsel %vm385, %v296, %v360
        %v616 = vrot.slane %v614, 3
        %v619 = vsel %vm373, %v297, %v361
        %v620 = vsel %vm377, %v297, %v361
        %v622 = vrot.slane %v620, 1
        %v623 = vsel %vm381, %v297, %v361
        %v625 = vrot.slane %v623, 2
        %v626 = vsel %vm385, %v297, %v361
        %v628 = vrot.slane %v626, 3
        %v631 = vsel %vm373, %v298, %v362
        %v632 = vsel %vm377, %v298, %v362
        %v634 = vrot.slane %v632, 1
        %v635 = vsel %vm381, %v298, %v362
        %v637 = vrot.slane %v635, 2
        %v638 = vsel %vm385, %v298, %v362
        %v640 = vrot.slane %v638, 3
        %v643 = vsel %vm373, %v299, %v363
        %v644 = vsel %vm377, %v299, %v363
        %v646 = vrot.slane %v644, 1
        %v647 = vsel %vm381, %v299, %v363
        %v649 = vrot.slane %v647, 2
        %v650 = vsel %vm385, %v299, %v363
        %v652 = vrot.slane %v650, 3
        %v655 = vsel %vm373, %v300, %v364
        %v656 = vsel %vm377, %v300, %v364
        %v658 = vrot.slane %v656, 1
        %v659 = vsel %vm381, %v300, %v364
        %v661 = vrot.slane %v659, 2
        %v662 = vsel %vm385, %v300, %v364
        %v664 = vrot.slane %v662, 3
        %v667 = vsel %vm373, %v301, %v365
        %v668 = vsel %vm377, %v301, %v365
        %v670 = vrot.slane %v668, 1
        %v671 = vsel %vm381, %v301, %v365
        %v673 = vrot.slane %v671, 2
        %v674 = vsel %vm385, %v301, %v365
        %v676 = vrot.slane %v674, 3
        %v679 = vsel %vm373, %v302, %v366
        %v680 = vsel %vm377, %v302, %v366
        %v682 = vrot.slane %v680, 1
        %v683 = vsel %vm381, %v302, %v366
        %v685 = vrot.slane %v683, 2
        %v686 = vsel %vm385, %v302, %v366
        %v688 = vrot.slane %v686, 3
        %v691 = vsel %vm373, %v303, %v367
        %v692 = vsel %vm377, %v303, %v367
        %v694 = vrot.slane %v692, 1
        %v695 = vsel %vm381, %v303, %v367
        %v697 = vrot.slane %v695, 2
        %v698 = vsel %vm385, %v303, %v367
        %v700 = vrot.slane %v698, 3
        %v703 = vsel %vm373, %v304, %v368
        %v704 = vsel %vm377, %v304, %v368
        %v706 = vrot.slane %v704, 1
        %v707 = vsel %vm381, %v304, %v368
        %v709 = vrot.slane %v707, 2
        %v710 = vsel %vm385, %v304, %v368
        %v712 = vrot.slane %v710, 3
        %v715 = vsel %vm373, %v305, %v369
        %v716 = vsel %vm377, %v305, %v369
        %v718 = vrot.slane %v716, 1
        %v719 = vsel %vm381, %v305, %v369
        %v721 = vrot.slane %v719, 2
        %v722 = vsel %vm385, %v305, %v369
        %v724 = vrot.slane %v722, 3
        %v727 = vsel %vm373, %v306, %v370
        %v728 = vsel %vm377, %v306, %v370
        %v730 = vrot.slane %v728, 1
        %v731 = vsel %vm381, %v306, %v370
        %v733 = vrot.slane %v731, 2
        %v734 = vsel %vm385, %v306, %v370
        %v736 = vrot.slane %v734, 3
        %v739 = vsel %vm373, %v307, %v371
        %v740 = vsel %vm377, %v307, %v371
        %v742 = vrot.slane %v740, 1
        %v743 = vsel %vm381, %v307, %v371
        %v745 = vrot.slane %v743, 2
        %v746 = vsel %vm385, %v307, %v371
        %v748 = vrot.slane %v746, 3
        %v751 = vsel %vm373, %v308, %v372
        %v752 = vsel %vm377, %v308, %v372
        %v754 = vrot.slane %v752, 1
        %v755 = vsel %vm381, %v308, %v372
        %v757 = vrot.slane %v755, 2
        %v758 = vsel %vm385, %v308, %v372
        %v760 = vrot.slane %v758, 3
        %761 = vst [vmem:[#allocation1] ss:$9 sm:$0xff] %v403
        %v762 = vld [vmem:[#allocation1] sm:$0xff]
        %765 = vst [vmem:[#allocation1] ss:$9 sm:$0xff] %v406
        %v766 = vld [vmem:[#allocation1] sm:$0xff]
        %769 = vst [vmem:[#allocation1] ss:$9 sm:$0xff] %v409
        %v770 = vld [vmem:[#allocation1] sm:$0xff]
        %773 = vst [vmem:[#allocation1] ss:$9 sm:$0xff] %v412
        %v774 = vld [vmem:[#allocation1] sm:$0xff]
        %776 = vst [vmem:[#allocation1] ss:$9 sm:$0xff] %v415
        %v777 = vld [vmem:[#allocation1] sm:$0xff]
        %780 = vst [vmem:[#allocation1] ss:$9 sm:$0xff] %v418
        %v781 = vld [vmem:[#allocation1] sm:$0xff]
        %784 = vst [vmem:[#allocation1] ss:$9 sm:$0xff] %v421
        %v785 = vld [vmem:[#allocation1] sm:$0xff]
        %788 = vst [vmem:[#allocation1] ss:$9 sm:$0xff] %v424
        %v789 = vld [vmem:[#allocation1] sm:$0xff]
        %791 = vst [vmem:[#allocation1] ss:$9 sm:$0xff] %v451
        %v792 = vld [vmem:[#allocation1] sm:$0xff]
        %795 = vst [vmem:[#allocation1] ss:$9 sm:$0xff] %v454
        %v796 = vld [vmem:[#allocation1] sm:$0xff]
        %799 = vst [vmem:[#allocation1] ss:$9 sm:$0xff] %v457
        %v800 = vld [vmem:[#allocation1] sm:$0xff]
        %803 = vst [vmem:[#allocation1] ss:$9 sm:$0xff] %v460
        %v804 = vld [vmem:[#allocation1] sm:$0xff]
        %806 = vst [vmem:[#allocation1] ss:$9 sm:$0xff] %v463
        %v807 = vld [vmem:[#allocation1] sm:$0xff]
        %810 = vst [vmem:[#allocation1] ss:$9 sm:$0xff] %v466
        %v811 = vld [vmem:[#allocation1] sm:$0xff]
        %814 = vst [vmem:[#allocation1] ss:$9 sm:$0xff] %v469
        %v815 = vld [vmem:[#allocation1] sm:$0xff]
        %818 = vst [vmem:[#allocation1] ss:$9 sm:$0xff] %v472
        %v819 = vld [vmem:[#allocation1] sm:$0xff]
        %821 = vst [vmem:[#allocation1] ss:$9 sm:$0xff] %v499
        %v822 = vld [vmem:[#allocation1] sm:$0xff]
        %825 = vst [vmem:[#allocation1] ss:$9 sm:$0xff] %v502
        %v826 = vld [vmem:[#allocation1] sm:$0xff]
        %829 = vst [vmem:[#allocation1] ss:$9 sm:$0xff] %v505
        %v830 = vld [vmem:[#allocation1] sm:$0xff]
        %833 = vst [vmem:[#allocation1] ss:$9 sm:$0xff] %v508
        %v834 = vld [vmem:[#allocation1] sm:$0xff]
        %836 = vst [vmem:[#allocation1] ss:$9 sm:$0xff] %v511
        %v837 = vld [vmem:[#allocation1] sm:$0xff]
        %840 = vst [vmem:[#allocation1] ss:$9 sm:$0xff] %v514
        %v841 = vld [vmem:[#allocation1] sm:$0xff]
        %844 = vst [vmem:[#allocation1] ss:$9 sm:$0xff] %v517
        %v845 = vld [vmem:[#allocation1] sm:$0xff]
        %848 = vst [vmem:[#allocation1] ss:$9 sm:$0xff] %v520
        %v849 = vld [vmem:[#allocation1] sm:$0xff]
        %851 = vst [vmem:[#allocation1] ss:$9 sm:$0xff] %v547
        %v852 = vld [vmem:[#allocation1] sm:$0xff]
        %855 = vst [vmem:[#allocation1] ss:$9 sm:$0xff] %v550
        %v856 = vld [vmem:[#allocation1] sm:$0xff]
        %859 = vst [vmem:[#allocation1] ss:$9 sm:$0xff] %v553
        %v860 = vld [vmem:[#allocation1] sm:$0xff]
        %863 = vst [vmem:[#allocation1] ss:$9 sm:$0xff] %v556
        %v864 = vld [vmem:[#allocation1] sm:$0xff]
        %866 = vst [vmem:[#allocation1] ss:$9 sm:$0xff] %v559
        %v867 = vld [vmem:[#allocation1] sm:$0xff]
        %870 = vst [vmem:[#allocation1] ss:$9 sm:$0xff] %v562
        %v871 = vld [vmem:[#allocation1] sm:$0xff]
        %874 = vst [vmem:[#allocation1] ss:$9 sm:$0xff] %v565
        %v875 = vld [vmem:[#allocation1] sm:$0xff]
        %878 = vst [vmem:[#allocation1] ss:$9 sm:$0xff] %v568
        %v879 = vld [vmem:[#allocation1] sm:$0xff]
        %881 = vst [vmem:[#allocation1] ss:$9 sm:$0xff] %v595
        %v882 = vld [vmem:[#allocation1] sm:$0xff]
        %885 = vst [vmem:[#allocation1] ss:$9 sm:$0xff] %v598
        %v886 = vld [vmem:[#allocation1] sm:$0xff]
        %889 = vst [vmem:[#allocation1] ss:$9 sm:$0xff] %v601
        %v890 = vld [vmem:[#allocation1] sm:$0xff]
        %893 = vst [vmem:[#allocation1] ss:$9 sm:$0xff] %v604
        %v894 = vld [vmem:[#allocation1] sm:$0xff]
        %896 = vst [vmem:[#allocation1] ss:$9 sm:$0xff] %v607
        %v897 = vld [vmem:[#allocation1] sm:$0xff]
        %900 = vst [vmem:[#allocation1] ss:$9 sm:$0xff] %v610
        %v901 = vld [vmem:[#allocation1] sm:$0xff]
        %904 = vst [vmem:[#allocation1] ss:$9 sm:$0xff] %v613
        %v905 = vld [vmem:[#allocation1] sm:$0xff]
        %908 = vst [vmem:[#allocation1] ss:$9 sm:$0xff] %v616
        %v909 = vld [vmem:[#allocation1] sm:$0xff]
        %911 = vst [vmem:[#allocation1] ss:$9 sm:$0xff] %v643
        %v912 = vld [vmem:[#allocation1] sm:$0xff]
        %915 = vst [vmem:[#allocation1] ss:$9 sm:$0xff] %v646
        %v916 = vld [vmem:[#allocation1] sm:$0xff]
        %919 = vst [vmem:[#allocation1] ss:$9 sm:$0xff] %v649
        %v920 = vld [vmem:[#allocation1] sm:$0xff]
        %923 = vst [vmem:[#allocation1] ss:$9 sm:$0xff] %v652
        %v924 = vld [vmem:[#allocation1] sm:$0xff]
        %926 = vst [vmem:[#allocation1] ss:$9 sm:$0xff] %v655
        %v927 = vld [vmem:[#allocation1] sm:$0xff]
        %930 = vst [vmem:[#allocation1] ss:$9 sm:$0xff] %v658
        %v931 = vld [vmem:[#allocation1] sm:$0xff]
        %934 = vst [vmem:[#allocation1] ss:$9 sm:$0xff] %v661
        %v935 = vld [vmem:[#allocation1] sm:$0xff]
        %938 = vst [vmem:[#allocation1] ss:$9 sm:$0xff] %v664
        %v939 = vld [vmem:[#allocation1] sm:$0xff]
        %941 = vst [vmem:[#allocation1] ss:$9 sm:$0xff] %v691
        %v942 = vld [vmem:[#allocation1] sm:$0xff]
        %945 = vst [vmem:[#allocation1] ss:$9 sm:$0xff] %v694
        %v946 = vld [vmem:[#allocation1] sm:$0xff]
        %949 = vst [vmem:[#allocation1] ss:$9 sm:$0xff] %v697
        %v950 = vld [vmem:[#allocation1] sm:$0xff]
        %953 = vst [vmem:[#allocation1] ss:$9 sm:$0xff] %v700
        %v954 = vld [vmem:[#allocation1] sm:$0xff]
        %956 = vst [vmem:[#allocation1] ss:$9 sm:$0xff] %v703
        %v957 = vld [vmem:[#allocation1] sm:$0xff]
        %960 = vst [vmem:[#allocation1] ss:$9 sm:$0xff] %v706
        %v961 = vld [vmem:[#allocation1] sm:$0xff]
        %964 = vst [vmem:[#allocation1] ss:$9 sm:$0xff] %v709
        %v965 = vld [vmem:[#allocation1] sm:$0xff]
        %968 = vst [vmem:[#allocation1] ss:$9 sm:$0xff] %v712
        %v969 = vld [vmem:[#allocation1] sm:$0xff]
        %971 = vst [vmem:[#allocation1] ss:$9 sm:$0xff] %v739
        %v972 = vld [vmem:[#allocation1] sm:$0xff]
        %975 = vst [vmem:[#allocation1] ss:$9 sm:$0xff] %v742
        %v976 = vld [vmem:[#allocation1] sm:$0xff]
        %979 = vst [vmem:[#allocation1] ss:$9 sm:$0xff] %v745
        %v980 = vld [vmem:[#allocation1] sm:$0xff]
        %983 = vst [vmem:[#allocation1] ss:$9 sm:$0xff] %v748
        %v984 = vld [vmem:[#allocation1] sm:$0xff]
        %986 = vst [vmem:[#allocation1] ss:$9 sm:$0xff] %v751
        %v987 = vld [vmem:[#allocation1] sm:$0xff]
        %990 = vst [vmem:[#allocation1] ss:$9 sm:$0xff] %v754
        %v991 = vld [vmem:[#allocation1] sm:$0xff]
        %994 = vst [vmem:[#allocation1] ss:$9 sm:$0xff] %v757
        %v995 = vld [vmem:[#allocation1] sm:$0xff]
        %998 = vst [vmem:[#allocation1] ss:$9 sm:$0xff] %v760
        %v999 = vld [vmem:[#allocation1] sm:$0xff]
        %v1001 = vunpack.c.l.b16 %v762
        %v1002 = vunpack.c.l.b16 %v766
        %v1003 = vunpack.c.l.b16 %v770
        %v1004 = vunpack.c.l.b16 %v774
        %v1005 = vunpack.c.l.b16 %v777
        %v1006 = vunpack.c.l.b16 %v781
        %v1007 = vunpack.c.l.b16 %v785
        %v1008 = vunpack.c.l.b16 %v789
        %v1009 = vunpack.c.l.b16 %v792
        %v1010 = vunpack.c.l.b16 %v796
        %v1011 = vunpack.c.l.b16 %v800
        %v1012 = vunpack.c.l.b16 %v804
        %v1013 = vunpack.c.l.b16 %v807
        %v1014 = vunpack.c.l.b16 %v811
        %v1015 = vunpack.c.l.b16 %v815
        %v1016 = vunpack.c.l.b16 %v819
        %v1017 = vunpack.c.l.b16 %v822
        %v1018 = vunpack.c.l.b16 %v826
        %v1019 = vunpack.c.l.b16 %v830
        %v1020 = vunpack.c.l.b16 %v834
        %v1021 = vunpack.c.l.b16 %v837
        %v1022 = vunpack.c.l.b16 %v841
        %v1023 = vunpack.c.l.b16 %v845
        %v1024 = vunpack.c.l.b16 %v849
        %v1025 = vunpack.c.l.b16 %v852
        %v1026 = vunpack.c.l.b16 %v856
        %v1027 = vunpack.c.l.b16 %v860
        %v1028 = vunpack.c.l.b16 %v864
        %v1029 = vunpack.c.l.b16 %v867
        %v1030 = vunpack.c.l.b16 %v871
        %v1031 = vunpack.c.l.b16 %v875
        %v1032 = vunpack.c.l.b16 %v879
        %v1033 = vunpack.c.l.b16 %v882
        %v1034 = vunpack.c.l.b16 %v886
        %v1035 = vunpack.c.l.b16 %v890
        %v1036 = vunpack.c.l.b16 %v894
        %v1037 = vunpack.c.l.b16 %v897
        %v1038 = vunpack.c.l.b16 %v901
        %v1039 = vunpack.c.l.b16 %v905
        %v1040 = vunpack.c.l.b16 %v909
        %v1041 = vunpack.c.l.b16 %v912
        %v1042 = vunpack.c.l.b16 %v916
        %v1043 = vunpack.c.l.b16 %v920
        %v1044 = vunpack.c.l.b16 %v924
        %v1045 = vunpack.c.l.b16 %v927
        %v1046 = vunpack.c.l.b16 %v931
        %v1047 = vunpack.c.l.b16 %v935
        %v1048 = vunpack.c.l.b16 %v939
        %v1049 = vunpack.c.l.b16 %v942
        %v1050 = vunpack.c.l.b16 %v946
        %v1051 = vunpack.c.l.b16 %v950
        %v1052 = vunpack.c.l.b16 %v954
        %v1053 = vunpack.c.l.b16 %v957
        %v1054 = vunpack.c.l.b16 %v961
        %v1055 = vunpack.c.l.b16 %v965
        %v1056 = vunpack.c.l.b16 %v969
        %v1057 = vunpack.c.l.b16 %v972
        %v1058 = vunpack.c.l.b16 %v976
        %v1059 = vunpack.c.l.b16 %v980
        %v1060 = vunpack.c.l.b16 %v984
        %v1061 = vunpack.c.l.b16 %v987
        %v1062 = vunpack.c.l.b16 %v991
        %v1063 = vunpack.c.l.b16 %v995
        %v1064 = vunpack.c.l.b16 %v999
        %v1065 = vrot.slane %v1001, 1
        %v1066 = vsel %vm377, %v1002, %v1065
        %v1067 = vrot.slane %v1003, 7
        %v1068 = vsel %vm381, %v1067, %v1066
        %v1069 = vrot.slane %v1004, 6
        %v1070 = vsel %vm385, %v1069, %v1068
        %v1071 = vrot.slane %v1005, 5
        %vm1072 = vcmask 1044484
        %v1073 = vsel %vm1072, %v1071, %v1070
        %v1074 = vrot.slane %v1006, 4
        %vm1075 = vcmask 1045509
        %v1076 = vsel %vm1075, %v1074, %v1073
        %v1077 = vrot.slane %v1007, 3
        %vm1078 = vcmask 1046534
        %v1079 = vsel %vm1078, %v1077, %v1076
        %v1080 = vrot.slane %v1008, 2
        %vm1081 = vcmask 1047559
        %v1082 = vsel %vm1081, %v1080, %v1079
        %v1083 = vrot.slane %v1009, 1
        %v1084 = vsel %vm377, %v1010, %v1083
        %v1085 = vrot.slane %v1011, 7
        %v1086 = vsel %vm381, %v1085, %v1084
        %v1087 = vrot.slane %v1012, 6
        %v1088 = vsel %vm385, %v1087, %v1086
        %v1089 = vrot.slane %v1013, 5
        %v1090 = vsel %vm1072, %v1089, %v1088
        %v1091 = vrot.slane %v1014, 4
        %v1092 = vsel %vm1075, %v1091, %v1090
        %v1093 = vrot.slane %v1015, 3
        %v1094 = vsel %vm1078, %v1093, %v1092
        %v1095 = vrot.slane %v1016, 2
        %v1096 = vsel %vm1081, %v1095, %v1094
        %v1097 = vrot.slane %v1017, 1
        %v1098 = vsel %vm377, %v1018, %v1097
        %v1099 = vrot.slane %v1019, 7
        %v1100 = vsel %vm381, %v1099, %v1098
        %v1101 = vrot.slane %v1020, 6
        %v1102 = vsel %vm385, %v1101, %v1100
        %v1103 = vrot.slane %v1021, 5
        %v1104 = vsel %vm1072, %v1103, %v1102
        %v1105 = vrot.slane %v1022, 4
        %v1106 = vsel %vm1075, %v1105, %v1104
        %v1107 = vrot.slane %v1023, 3
        %v1108 = vsel %vm1078, %v1107, %v1106
        %v1109 = vrot.slane %v1024, 2
        %v1110 = vsel %vm1081, %v1109, %v1108
        %v1111 = vrot.slane %v1025, 1
        %v1112 = vsel %vm377, %v1026, %v1111
        %v1113 = vrot.slane %v1027, 7
        %v1114 = vsel %vm381, %v1113, %v1112
        %v1115 = vrot.slane %v1028, 6
        %v1116 = vsel %vm385, %v1115, %v1114
        %v1117 = vrot.slane %v1029, 5
        %v1118 = vsel %vm1072, %v1117, %v1116
        %v1119 = vrot.slane %v1030, 4
        %v1120 = vsel %vm1075, %v1119, %v1118
        %v1121 = vrot.slane %v1031, 3
        %v1122 = vsel %vm1078, %v1121, %v1120
        %v1123 = vrot.slane %v1032, 2
        %v1124 = vsel %vm1081, %v1123, %v1122
        %v1125 = vrot.slane %v1033, 1
        %v1126 = vsel %vm377, %v1034, %v1125
        %v1127 = vrot.slane %v1035, 7
        %v1128 = vsel %vm381, %v1127, %v1126
        %v1129 = vrot.slane %v1036, 6
        %v1130 = vsel %vm385, %v1129, %v1128
        %v1131 = vrot.slane %v1037, 5
        %v1132 = vsel %vm1072, %v1131, %v1130
        %v1133 = vrot.slane %v1038, 4
        %v1134 = vsel %vm1075, %v1133, %v1132
        %v1135 = vrot.slane %v1039, 3
        %v1136 = vsel %vm1078, %v1135, %v1134
        %v1137 = vrot.slane %v1040, 2
        %v1138 = vsel %vm1081, %v1137, %v1136
        %v1139 = vrot.slane %v1041, 1
        %v1140 = vsel %vm377, %v1042, %v1139
        %v1141 = vrot.slane %v1043, 7
        %v1142 = vsel %vm381, %v1141, %v1140
        %v1143 = vrot.slane %v1044, 6
        %v1144 = vsel %vm385, %v1143, %v1142
        %v1145 = vrot.slane %v1045, 5
        %v1146 = vsel %vm1072, %v1145, %v1144
        %v1147 = vrot.slane %v1046, 4
        %v1148 = vsel %vm1075, %v1147, %v1146
        %v1149 = vrot.slane %v1047, 3
        %v1150 = vsel %vm1078, %v1149, %v1148
        %v1151 = vrot.slane %v1048, 2
        %v1152 = vsel %vm1081, %v1151, %v1150
        %v1153 = vrot.slane %v1049, 1
        %v1154 = vsel %vm377, %v1050, %v1153
        %v1155 = vrot.slane %v1051, 7
        %v1156 = vsel %vm381, %v1155, %v1154
        %v1157 = vrot.slane %v1052, 6
        %v1158 = vsel %vm385, %v1157, %v1156
        %v1159 = vrot.slane %v1053, 5
        %v1160 = vsel %vm1072, %v1159, %v1158
        %v1161 = vrot.slane %v1054, 4
        %v1162 = vsel %vm1075, %v1161, %v1160
        %v1163 = vrot.slane %v1055, 3
        %v1164 = vsel %vm1078, %v1163, %v1162
        %v1165 = vrot.slane %v1056, 2
        %v1166 = vsel %vm1081, %v1165, %v1164
        %v1167 = vrot.slane %v1057, 1
        %v1168 = vsel %vm377, %v1058, %v1167
        %v1169 = vrot.slane %v1059, 7
        %v1170 = vsel %vm381, %v1169, %v1168
        %v1171 = vrot.slane %v1060, 6
        %v1172 = vsel %vm385, %v1171, %v1170
        %v1173 = vrot.slane %v1061, 5
        %v1174 = vsel %vm1072, %v1173, %v1172
        %v1175 = vrot.slane %v1062, 4
        %v1176 = vsel %vm1075, %v1175, %v1174
        %v1177 = vrot.slane %v1063, 3
        %v1178 = vsel %vm1078, %v1177, %v1176
        %v1179 = vrot.slane %v1064, 2
        %v1180 = vsel %vm1081, %v1179, %v1178
        %v1181 = vpack.c.b16 %v1082, %v1082
        %v1182 = vpack.c.b16 %v1096, %v1096
        %v1183 = vpack.c.b16 %v1110, %v1110
        %v1184 = vpack.c.b16 %v1124, %v1124
        %v1185 = vpack.c.b16 %v1138, %v1138
        %v1186 = vpack.c.b16 %v1152, %v1152
        %v1187 = vpack.c.b16 %v1166, %v1166
        %v1188 = vpack.c.b16 %v1180, %v1180
        %v1190 = vshrl.u32 0, 16
        %v1192 = vrot.slane %v1190, 7
        %v1193 = vshll.u32 0, 16
        %v1195 = vor.u32 %v1192, %v1193
        %v1197 = vshrl.u32 %v1181, 16
        %v1199 = vrot.slane %v1197, 7
        %v1200 = vshll.u32 %v1181, 16
        %v1202 = vor.u32 %v1199, %v1200
        %v1204 = vshrl.u32 %v1182, 16
        %v1206 = vrot.slane %v1204, 7
        %v1207 = vshll.u32 %v1182, 16
        %v1209 = vor.u32 %v1206, %v1207
        %v1211 = vshrl.u32 %v1183, 16
        %v1213 = vrot.slane %v1211, 7
        %v1214 = vshll.u32 %v1183, 16
        %v1216 = vor.u32 %v1213, %v1214
        %v1218 = vshrl.u32 %v1184, 16
        %v1220 = vrot.slane %v1218, 7
        %v1221 = vshll.u32 %v1184, 16
        %v1223 = vor.u32 %v1220, %v1221
        %v1225 = vshrl.u32 %v1185, 16
        %v1227 = vrot.slane %v1225, 7
        %v1228 = vshll.u32 %v1185, 16
        %v1230 = vor.u32 %v1227, %v1228
        %v1232 = vshrl.u32 %v1186, 16
        %v1234 = vrot.slane %v1232, 7
        %v1235 = vshll.u32 %v1186, 16
        %v1237 = vor.u32 %v1234, %v1235
        %v1239 = vshrl.u32 %v1187, 16
        %v1241 = vrot.slane %v1239, 7
        %v1242 = vshll.u32 %v1187, 16
        %v1244 = vor.u32 %v1241, %v1242
        %v1246 = vshrl.u32 %v1188, 16
        %v1248 = vrot.slane %v1246, 7
        %v1249 = vshll.u32 %v1188, 16
        %v1251 = vor.u32 %v1248, %v1249
        %vm1261 = vcmask 1040384
        %vm1262 = vsmask.f32 256
        %vm1263 = vmand %vm1261, %vm1262
        %v1264 = vsel %vm1263, 0, %v1195
        %v1265 = vsel %vm1263, 0, %v1202
        %v1266 = vsel %vm1263, 0, %v1209
        %v1267 = vsel %vm1263, 0, %v1216
        %v1268 = vsel %vm1263, 0, %v1223
        %v1269 = vsel %vm1263, 0, %v1230
        %v1270 = vsel %vm1263, 0, %v1237
        %v1271 = vsel %vm1263, 0, %v1244
        %v1272 = vsel %vm1263, 0, %v1251
        %1273 = vst [vmem:[#allocation1] ss:$9 sm:$0xff] %v403
        %v1274 = vld [vmem:[#allocation1] sm:$0xff]
        %1276 = vst [vmem:[#allocation1] ss:$9 sm:$0xff] %v406
        %v1277 = vld [vmem:[#allocation1] sm:$0xff]
        %1279 = vst [vmem:[#allocation1] ss:$9 sm:$0xff] %v409
        %v1280 = vld [vmem:[#allocation1] sm:$0xff]
        %1282 = vst [vmem:[#allocation1] ss:$9 sm:$0xff] %v412
        %v1283 = vld [vmem:[#allocation1] sm:$0xff]
        %1285 = vst [vmem:[#allocation1] ss:$9 sm:$0xff] %v415
        %v1286 = vld [vmem:[#allocation1] sm:$0xff]
        %1288 = vst [vmem:[#allocation1] ss:$9 sm:$0xff] %v418
        %v1289 = vld [vmem:[#allocation1] sm:$0xff]
        %1291 = vst [vmem:[#allocation1] ss:$9 sm:$0xff] %v421
        %v1292 = vld [vmem:[#allocation1] sm:$0xff]
        %1294 = vst [vmem:[#allocation1] ss:$9 sm:$0xff] %v424
        %v1295 = vld [vmem:[#allocation1] sm:$0xff]
        %1297 = vst [vmem:[#allocation1] ss:$9 sm:$0xff] %v451
        %v1298 = vld [vmem:[#allocation1] sm:$0xff]
        %1300 = vst [vmem:[#allocation1] ss:$9 sm:$0xff] %v454
        %v1301 = vld [vmem:[#allocation1] sm:$0xff]
        %1303 = vst [vmem:[#allocation1] ss:$9 sm:$0xff] %v457
        %v1304 = vld [vmem:[#allocation1] sm:$0xff]
        %1306 = vst [vmem:[#allocation1] ss:$9 sm:$0xff] %v460
        %v1307 = vld [vmem:[#allocation1] sm:$0xff]
        %1309 = vst [vmem:[#allocation1] ss:$9 sm:$0xff] %v463
        %v1310 = vld [vmem:[#allocation1] sm:$0xff]
        %1312 = vst [vmem:[#allocation1] ss:$9 sm:$0xff] %v466
        %v1313 = vld [vmem:[#allocation1] sm:$0xff]
        %1315 = vst [vmem:[#allocation1] ss:$9 sm:$0xff] %v469
        %v1316 = vld [vmem:[#allocation1] sm:$0xff]
        %1318 = vst [vmem:[#allocation1] ss:$9 sm:$0xff] %v472
        %v1319 = vld [vmem:[#allocation1] sm:$0xff]
        %1321 = vst [vmem:[#allocation1] ss:$9 sm:$0xff] %v499
        %v1322 = vld [vmem:[#allocation1] sm:$0xff]
        %1324 = vst [vmem:[#allocation1] ss:$9 sm:$0xff] %v502
        %v1325 = vld [vmem:[#allocation1] sm:$0xff]
        %1327 = vst [vmem:[#allocation1] ss:$9 sm:$0xff] %v505
        %v1328 = vld [vmem:[#allocation1] sm:$0xff]
        %1330 = vst [vmem:[#allocation1] ss:$9 sm:$0xff] %v508
        %v1331 = vld [vmem:[#allocation1] sm:$0xff]
        %1333 = vst [vmem:[#allocation1] ss:$9 sm:$0xff] %v511
        %v1334 = vld [vmem:[#allocation1] sm:$0xff]
        %1336 = vst [vmem:[#allocation1] ss:$9 sm:$0xff] %v514
        %v1337 = vld [vmem:[#allocation1] sm:$0xff]
        %1339 = vst [vmem:[#allocation1] ss:$9 sm:$0xff] %v517
        %v1340 = vld [vmem:[#allocation1] sm:$0xff]
        %1342 = vst [vmem:[#allocation1] ss:$9 sm:$0xff] %v520
        %v1343 = vld [vmem:[#allocation1] sm:$0xff]
        %1345 = vst [vmem:[#allocation1] ss:$9 sm:$0xff] %v547
        %v1346 = vld [vmem:[#allocation1] sm:$0xff]
        %1348 = vst [vmem:[#allocation1] ss:$9 sm:$0xff] %v550
        %v1349 = vld [vmem:[#allocation1] sm:$0xff]
        %1351 = vst [vmem:[#allocation1] ss:$9 sm:$0xff] %v553
        %v1352 = vld [vmem:[#allocation1] sm:$0xff]
        %1354 = vst [vmem:[#allocation1] ss:$9 sm:$0xff] %v556
        %v1355 = vld [vmem:[#allocation1] sm:$0xff]
        %1357 = vst [vmem:[#allocation1] ss:$9 sm:$0xff] %v559
        %v1358 = vld [vmem:[#allocation1] sm:$0xff]
        %1360 = vst [vmem:[#allocation1] ss:$9 sm:$0xff] %v562
        %v1361 = vld [vmem:[#allocation1] sm:$0xff]
        %1363 = vst [vmem:[#allocation1] ss:$9 sm:$0xff] %v565
        %v1364 = vld [vmem:[#allocation1] sm:$0xff]
        %1366 = vst [vmem:[#allocation1] ss:$9 sm:$0xff] %v568
        %v1367 = vld [vmem:[#allocation1] sm:$0xff]
        %1369 = vst [vmem:[#allocation1] ss:$9 sm:$0xff] %v595
        %v1370 = vld [vmem:[#allocation1] sm:$0xff]
        %1372 = vst [vmem:[#allocation1] ss:$9 sm:$0xff] %v598
        %v1373 = vld [vmem:[#allocation1] sm:$0xff]
        %1375 = vst [vmem:[#allocation1] ss:$9 sm:$0xff] %v601
        %v1376 = vld [vmem:[#allocation1] sm:$0xff]
        %1378 = vst [vmem:[#allocation1] ss:$9 sm:$0xff] %v604
        %v1379 = vld [vmem:[#allocation1] sm:$0xff]
        %1381 = vst [vmem:[#allocation1] ss:$9 sm:$0xff] %v607
        %v1382 = vld [vmem:[#allocation1] sm:$0xff]
        %1384 = vst [vmem:[#allocation1] ss:$9 sm:$0xff] %v610
        %v1385 = vld [vmem:[#allocation1] sm:$0xff]
        %1387 = vst [vmem:[#allocation1] ss:$9 sm:$0xff] %v613
        %v1388 = vld [vmem:[#allocation1] sm:$0xff]
        %1390 = vst [vmem:[#allocation1] ss:$9 sm:$0xff] %v616
        %v1391 = vld [vmem:[#allocation1] sm:$0xff]
        %1393 = vst [vmem:[#allocation1] ss:$9 sm:$0xff] %v643
        %v1394 = vld [vmem:[#allocation1] sm:$0xff]
        %1396 = vst [vmem:[#allocation1] ss:$9 sm:$0xff] %v646
        %v1397 = vld [vmem:[#allocation1] sm:$0xff]
        %1399 = vst [vmem:[#allocation1] ss:$9 sm:$0xff] %v649
        %v1400 = vld [vmem:[#allocation1] sm:$0xff]
        %1402 = vst [vmem:[#allocation1] ss:$9 sm:$0xff] %v652
        %v1403 = vld [vmem:[#allocation1] sm:$0xff]
        %1405 = vst [vmem:[#allocation1] ss:$9 sm:$0xff] %v655
        %v1406 = vld [vmem:[#allocation1] sm:$0xff]
        %1408 = vst [vmem:[#allocation1] ss:$9 sm:$0xff] %v658
        %v1409 = vld [vmem:[#allocation1] sm:$0xff]
        %1411 = vst [vmem:[#allocation1] ss:$9 sm:$0xff] %v661
        %v1412 = vld [vmem:[#allocation1] sm:$0xff]
        %1414 = vst [vmem:[#allocation1] ss:$9 sm:$0xff] %v664
        %v1415 = vld [vmem:[#allocation1] sm:$0xff]
        %1417 = vst [vmem:[#allocation1] ss:$9 sm:$0xff] %v691
        %v1418 = vld [vmem:[#allocation1] sm:$0xff]
        %1420 = vst [vmem:[#allocation1] ss:$9 sm:$0xff] %v694
        %v1421 = vld [vmem:[#allocation1] sm:$0xff]
        %1423 = vst [vmem:[#allocation1] ss:$9 sm:$0xff] %v697
        %v1424 = vld [vmem:[#allocation1] sm:$0xff]
        %1426 = vst [vmem:[#allocation1] ss:$9 sm:$0xff] %v700
        %v1427 = vld [vmem:[#allocation1] sm:$0xff]
        %1429 = vst [vmem:[#allocation1] ss:$9 sm:$0xff] %v703
        %v1430 = vld [vmem:[#allocation1] sm:$0xff]
        %1432 = vst [vmem:[#allocation1] ss:$9 sm:$0xff] %v706
        %v1433 = vld [vmem:[#allocation1] sm:$0xff]
        %1435 = vst [vmem:[#allocation1] ss:$9 sm:$0xff] %v709
        %v1436 = vld [vmem:[#allocation1] sm:$0xff]
        %1438 = vst [vmem:[#allocation1] ss:$9 sm:$0xff] %v712
        %v1439 = vld [vmem:[#allocation1] sm:$0xff]
        %1441 = vst [vmem:[#allocation1] ss:$9 sm:$0xff] %v739
        %v1442 = vld [vmem:[#allocation1] sm:$0xff]
        %1444 = vst [vmem:[#allocation1] ss:$9 sm:$0xff] %v742
        %v1445 = vld [vmem:[#allocation1] sm:$0xff]
        %1447 = vst [vmem:[#allocation1] ss:$9 sm:$0xff] %v745
        %v1448 = vld [vmem:[#allocation1] sm:$0xff]
        %1450 = vst [vmem:[#allocation1] ss:$9 sm:$0xff] %v748
        %v1451 = vld [vmem:[#allocation1] sm:$0xff]
        %1453 = vst [vmem:[#allocation1] ss:$9 sm:$0xff] %v751
        %v1454 = vld [vmem:[#allocation1] sm:$0xff]
        %1456 = vst [vmem:[#allocation1] ss:$9 sm:$0xff] %v754
        %v1457 = vld [vmem:[#allocation1] sm:$0xff]
        %1459 = vst [vmem:[#allocation1] ss:$9 sm:$0xff] %v757
        %v1460 = vld [vmem:[#allocation1] sm:$0xff]
        %1462 = vst [vmem:[#allocation1] ss:$9 sm:$0xff] %v760
        %v1463 = vld [vmem:[#allocation1] sm:$0xff]
        %v1465 = vunpack.c.l.b16 %v1274
        %v1466 = vunpack.c.l.b16 %v1277
        %v1467 = vunpack.c.l.b16 %v1280
        %v1468 = vunpack.c.l.b16 %v1283
        %v1469 = vunpack.c.l.b16 %v1286
        %v1470 = vunpack.c.l.b16 %v1289
        %v1471 = vunpack.c.l.b16 %v1292
        %v1472 = vunpack.c.l.b16 %v1295
        %v1473 = vunpack.c.l.b16 %v1298
        %v1474 = vunpack.c.l.b16 %v1301
        %v1475 = vunpack.c.l.b16 %v1304
        %v1476 = vunpack.c.l.b16 %v1307
        %v1477 = vunpack.c.l.b16 %v1310
        %v1478 = vunpack.c.l.b16 %v1313
        %v1479 = vunpack.c.l.b16 %v1316
        %v1480 = vunpack.c.l.b16 %v1319
        %v1481 = vunpack.c.l.b16 %v1322
        %v1482 = vunpack.c.l.b16 %v1325
        %v1483 = vunpack.c.l.b16 %v1328
        %v1484 = vunpack.c.l.b16 %v1331
        %v1485 = vunpack.c.l.b16 %v1334
        %v1486 = vunpack.c.l.b16 %v1337
        %v1487 = vunpack.c.l.b16 %v1340
        %v1488 = vunpack.c.l.b16 %v1343
        %v1489 = vunpack.c.l.b16 %v1346
        %v1490 = vunpack.c.l.b16 %v1349
        %v1491 = vunpack.c.l.b16 %v1352
        %v1492 = vunpack.c.l.b16 %v1355
        %v1493 = vunpack.c.l.b16 %v1358
        %v1494 = vunpack.c.l.b16 %v1361
        %v1495 = vunpack.c.l.b16 %v1364
        %v1496 = vunpack.c.l.b16 %v1367
        %v1497 = vunpack.c.l.b16 %v1370
        %v1498 = vunpack.c.l.b16 %v1373
        %v1499 = vunpack.c.l.b16 %v1376
        %v1500 = vunpack.c.l.b16 %v1379
        %v1501 = vunpack.c.l.b16 %v1382
        %v1502 = vunpack.c.l.b16 %v1385
        %v1503 = vunpack.c.l.b16 %v1388
        %v1504 = vunpack.c.l.b16 %v1391
        %v1505 = vunpack.c.l.b16 %v1394
        %v1506 = vunpack.c.l.b16 %v1397
        %v1507 = vunpack.c.l.b16 %v1400
        %v1508 = vunpack.c.l.b16 %v1403
        %v1509 = vunpack.c.l.b16 %v1406
        %v1510 = vunpack.c.l.b16 %v1409
        %v1511 = vunpack.c.l.b16 %v1412
        %v1512 = vunpack.c.l.b16 %v1415
        %v1513 = vunpack.c.l.b16 %v1418
        %v1514 = vunpack.c.l.b16 %v1421
        %v1515 = vunpack.c.l.b16 %v1424
        %v1516 = vunpack.c.l.b16 %v1427
        %v1517 = vunpack.c.l.b16 %v1430
        %v1518 = vunpack.c.l.b16 %v1433
        %v1519 = vunpack.c.l.b16 %v1436
        %v1520 = vunpack.c.l.b16 %v1439
        %v1521 = vunpack.c.l.b16 %v1442
        %v1522 = vunpack.c.l.b16 %v1445
        %v1523 = vunpack.c.l.b16 %v1448
        %v1524 = vunpack.c.l.b16 %v1451
        %v1525 = vunpack.c.l.b16 %v1454
        %v1526 = vunpack.c.l.b16 %v1457
        %v1527 = vunpack.c.l.b16 %v1460
        %v1528 = vunpack.c.l.b16 %v1463
        %v1529 = vrot.slane %v1466, 7
        %v1530 = vsel %vm377, %v1529, %v1465
        %v1531 = vrot.slane %v1467, 6
        %v1532 = vsel %vm381, %v1531, %v1530
        %v1533 = vrot.slane %v1468, 5
        %v1534 = vsel %vm385, %v1533, %v1532
        %v1535 = vrot.slane %v1469, 4
        %v1536 = vsel %vm1072, %v1535, %v1534
        %v1537 = vrot.slane %v1470, 3
        %v1538 = vsel %vm1075, %v1537, %v1536
        %v1539 = vrot.slane %v1471, 2
        %v1540 = vsel %vm1078, %v1539, %v1538
        %v1541 = vrot.slane %v1472, 1
        %v1542 = vsel %vm1081, %v1541, %v1540
        %v1543 = vrot.slane %v1474, 7
        %v1544 = vsel %vm377, %v1543, %v1473
        %v1545 = vrot.slane %v1475, 6
        %v1546 = vsel %vm381, %v1545, %v1544
        %v1547 = vrot.slane %v1476, 5
        %v1548 = vsel %vm385, %v1547, %v1546
        %v1549 = vrot.slane %v1477, 4
        %v1550 = vsel %vm1072, %v1549, %v1548
        %v1551 = vrot.slane %v1478, 3
        %v1552 = vsel %vm1075, %v1551, %v1550
        %v1553 = vrot.slane %v1479, 2
        %v1554 = vsel %vm1078, %v1553, %v1552
        %v1555 = vrot.slane %v1480, 1
        %v1556 = vsel %vm1081, %v1555, %v1554
        %v1557 = vrot.slane %v1482, 7
        %v1558 = vsel %vm377, %v1557, %v1481
        %v1559 = vrot.slane %v1483, 6
        %v1560 = vsel %vm381, %v1559, %v1558
        %v1561 = vrot.slane %v1484, 5
        %v1562 = vsel %vm385, %v1561, %v1560
        %v1563 = vrot.slane %v1485, 4
        %v1564 = vsel %vm1072, %v1563, %v1562
        %v1565 = vrot.slane %v1486, 3
        %v1566 = vsel %vm1075, %v1565, %v1564
        %v1567 = vrot.slane %v1487, 2
        %v1568 = vsel %vm1078, %v1567, %v1566
        %v1569 = vrot.slane %v1488, 1
        %v1570 = vsel %vm1081, %v1569, %v1568
        %v1571 = vrot.slane %v1490, 7
        %v1572 = vsel %vm377, %v1571, %v1489
        %v1573 = vrot.slane %v1491, 6
        %v1574 = vsel %vm381, %v1573, %v1572
        %v1575 = vrot.slane %v1492, 5
        %v1576 = vsel %vm385, %v1575, %v1574
        %v1577 = vrot.slane %v1493, 4
        %v1578 = vsel %vm1072, %v1577, %v1576
        %v1579 = vrot.slane %v1494, 3
        %v1580 = vsel %vm1075, %v1579, %v1578
        %v1581 = vrot.slane %v1495, 2
        %v1582 = vsel %vm1078, %v1581, %v1580
        %v1583 = vrot.slane %v1496, 1
        %v1584 = vsel %vm1081, %v1583, %v1582
        %v1585 = vrot.slane %v1498, 7
        %v1586 = vsel %vm377, %v1585, %v1497
        %v1587 = vrot.slane %v1499, 6
        %v1588 = vsel %vm381, %v1587, %v1586
        %v1589 = vrot.slane %v1500, 5
        %v1590 = vsel %vm385, %v1589, %v1588
        %v1591 = vrot.slane %v1501, 4
        %v1592 = vsel %vm1072, %v1591, %v1590
        %v1593 = vrot.slane %v1502, 3
        %v1594 = vsel %vm1075, %v1593, %v1592
        %v1595 = vrot.slane %v1503, 2
        %v1596 = vsel %vm1078, %v1595, %v1594
        %v1597 = vrot.slane %v1504, 1
        %v1598 = vsel %vm1081, %v1597, %v1596
        %v1599 = vrot.slane %v1506, 7
        %v1600 = vsel %vm377, %v1599, %v1505
        %v1601 = vrot.slane %v1507, 6
        %v1602 = vsel %vm381, %v1601, %v1600
        %v1603 = vrot.slane %v1508, 5
        %v1604 = vsel %vm385, %v1603, %v1602
        %v1605 = vrot.slane %v1509, 4
        %v1606 = vsel %vm1072, %v1605, %v1604
        %v1607 = vrot.slane %v1510, 3
        %v1608 = vsel %vm1075, %v1607, %v1606
        %v1609 = vrot.slane %v1511, 2
        %v1610 = vsel %vm1078, %v1609, %v1608
        %v1611 = vrot.slane %v1512, 1
        %v1612 = vsel %vm1081, %v1611, %v1610
        %v1613 = vrot.slane %v1514, 7
        %v1614 = vsel %vm377, %v1613, %v1513
        %v1615 = vrot.slane %v1515, 6
        %v1616 = vsel %vm381, %v1615, %v1614
        %v1617 = vrot.slane %v1516, 5
        %v1618 = vsel %vm385, %v1617, %v1616
        %v1619 = vrot.slane %v1517, 4
        %v1620 = vsel %vm1072, %v1619, %v1618
        %v1621 = vrot.slane %v1518, 3
        %v1622 = vsel %vm1075, %v1621, %v1620
        %v1623 = vrot.slane %v1519, 2
        %v1624 = vsel %vm1078, %v1623, %v1622
        %v1625 = vrot.slane %v1520, 1
        %v1626 = vsel %vm1081, %v1625, %v1624
        %v1627 = vrot.slane %v1522, 7
        %v1628 = vsel %vm377, %v1627, %v1521
        %v1629 = vrot.slane %v1523, 6
        %v1630 = vsel %vm381, %v1629, %v1628
        %v1631 = vrot.slane %v1524, 5
        %v1632 = vsel %vm385, %v1631, %v1630
        %v1633 = vrot.slane %v1525, 4
        %v1634 = vsel %vm1072, %v1633, %v1632
        %v1635 = vrot.slane %v1526, 3
        %v1636 = vsel %vm1075, %v1635, %v1634
        %v1637 = vrot.slane %v1527, 2
        %v1638 = vsel %vm1078, %v1637, %v1636
        %v1639 = vrot.slane %v1528, 1
        %v1640 = vsel %vm1081, %v1639, %v1638
        %v1641 = vpack.c.b16 %v1542, %v1542
        %v1642 = vpack.c.b16 %v1556, %v1556
        %v1643 = vpack.c.b16 %v1570, %v1570
        %v1644 = vpack.c.b16 %v1584, %v1584
        %v1645 = vpack.c.b16 %v1598, %v1598
        %v1646 = vpack.c.b16 %v1612, %v1612
        %v1647 = vpack.c.b16 %v1626, %v1626
        %v1648 = vpack.c.b16 %v1640, %v1640
        %vm1649 = vcmask 1043456
        %v1651 = vsel %vm1649, %v1641, 0
        %v1653 = vsel %vm1649, %v1642, 0
        %v1655 = vsel %vm1649, %v1643, 0
        %v1657 = vsel %vm1649, %v1644, 0
        %v1659 = vsel %vm1649, %v1645, 0
        %v1661 = vsel %vm1649, %v1646, 0
        %v1663 = vsel %vm1649, %v1647, 0
        %v1665 = vsel %vm1649, %v1648, 0
        %1666 = vst [vmem:[#allocation1] ss:$9 sm:$0xff] %v376
        %v1667 = vld [vmem:[#allocation1] sm:$0xff]
        %1670 = vst [vmem:[#allocation1] ss:$9 sm:$0xff] %v380
        %v1671 = vld [vmem:[#allocation1] sm:$0xff]
        %1674 = vst [vmem:[#allocation1] ss:$9 sm:$0xff] %v384
        %v1675 = vld [vmem:[#allocation1] sm:$0xff]
        %1678 = vst [vmem:[#allocation1] ss:$9 sm:$0xff] %v388
        %v1679 = vld [vmem:[#allocation1] sm:$0xff]
        %1681 = vst [vmem:[#allocation1] ss:$9 sm:$0xff] %v391
        %v1682 = vld [vmem:[#allocation1] sm:$0xff]
        %1685 = vst [vmem:[#allocation1] ss:$9 sm:$0xff] %v394
        %v1686 = vld [vmem:[#allocation1] sm:$0xff]
        %1689 = vst [vmem:[#allocation1] ss:$9 sm:$0xff] %v397
        %v1690 = vld [vmem:[#allocation1] sm:$0xff]
        %1693 = vst [vmem:[#allocation1] ss:$9 sm:$0xff] %v400
        %v1694 = vld [vmem:[#allocation1] sm:$0xff]
        %1696 = vst [vmem:[#allocation1] ss:$9 sm:$0xff] %v427
        %v1697 = vld [vmem:[#allocation1] sm:$0xff]
        %1700 = vst [vmem:[#allocation1] ss:$9 sm:$0xff] %v430
        %v1701 = vld [vmem:[#allocation1] sm:$0xff]
        %1704 = vst [vmem:[#allocation1] ss:$9 sm:$0xff] %v433
        %v1705 = vld [vmem:[#allocation1] sm:$0xff]
        %1708 = vst [vmem:[#allocation1] ss:$9 sm:$0xff] %v436
        %v1709 = vld [vmem:[#allocation1] sm:$0xff]
        %1711 = vst [vmem:[#allocation1] ss:$9 sm:$0xff] %v439
        %v1712 = vld [vmem:[#allocation1] sm:$0xff]
        %1715 = vst [vmem:[#allocation1] ss:$9 sm:$0xff] %v442
        %v1716 = vld [vmem:[#allocation1] sm:$0xff]
        %1719 = vst [vmem:[#allocation1] ss:$9 sm:$0xff] %v445
        %v1720 = vld [vmem:[#allocation1] sm:$0xff]
        %1723 = vst [vmem:[#allocation1] ss:$9 sm:$0xff] %v448
        %v1724 = vld [vmem:[#allocation1] sm:$0xff]
        %1726 = vst [vmem:[#allocation1] ss:$9 sm:$0xff] %v475
        %v1727 = vld [vmem:[#allocation1] sm:$0xff]
        %1730 = vst [vmem:[#allocation1] ss:$9 sm:$0xff] %v478
        %v1731 = vld [vmem:[#allocation1] sm:$0xff]
        %1734 = vst [vmem:[#allocation1] ss:$9 sm:$0xff] %v481
        %v1735 = vld [vmem:[#allocation1] sm:$0xff]
        %1738 = vst [vmem:[#allocation1] ss:$9 sm:$0xff] %v484
        %v1739 = vld [vmem:[#allocation1] sm:$0xff]
        %1741 = vst [vmem:[#allocation1] ss:$9 sm:$0xff] %v487
        %v1742 = vld [vmem:[#allocation1] sm:$0xff]
        %1745 = vst [vmem:[#allocation1] ss:$9 sm:$0xff] %v490
        %v1746 = vld [vmem:[#allocation1] sm:$0xff]
        %1749 = vst [vmem:[#allocation1] ss:$9 sm:$0xff] %v493
        %v1750 = vld [vmem:[#allocation1] sm:$0xff]
        %1753 = vst [vmem:[#allocation1] ss:$9 sm:$0xff] %v496
        %v1754 = vld [vmem:[#allocation1] sm:$0xff]
        %1756 = vst [vmem:[#allocation1] ss:$9 sm:$0xff] %v523
        %v1757 = vld [vmem:[#allocation1] sm:$0xff]
        %1760 = vst [vmem:[#allocation1] ss:$9 sm:$0xff] %v526
        %v1761 = vld [vmem:[#allocation1] sm:$0xff]
        %1764 = vst [vmem:[#allocation1] ss:$9 sm:$0xff] %v529
        %v1765 = vld [vmem:[#allocation1] sm:$0xff]
        %1768 = vst [vmem:[#allocation1] ss:$9 sm:$0xff] %v532
        %v1769 = vld [vmem:[#allocation1] sm:$0xff]
        %1771 = vst [vmem:[#allocation1] ss:$9 sm:$0xff] %v535
        %v1772 = vld [vmem:[#allocation1] sm:$0xff]
        %1775 = vst [vmem:[#allocation1] ss:$9 sm:$0xff] %v538
        %v1776 = vld [vmem:[#allocation1] sm:$0xff]
        %1779 = vst [vmem:[#allocation1] ss:$9 sm:$0xff] %v541
        %v1780 = vld [vmem:[#allocation1] sm:$0xff]
        %1783 = vst [vmem:[#allocation1] ss:$9 sm:$0xff] %v544
        %v1784 = vld [vmem:[#allocation1] sm:$0xff]
        %1786 = vst [vmem:[#allocation1] ss:$9 sm:$0xff] %v571
        %v1787 = vld [vmem:[#allocation1] sm:$0xff]
        %1790 = vst [vmem:[#allocation1] ss:$9 sm:$0xff] %v574
        %v1791 = vld [vmem:[#allocation1] sm:$0xff]
        %1794 = vst [vmem:[#allocation1] ss:$9 sm:$0xff] %v577
        %v1795 = vld [vmem:[#allocation1] sm:$0xff]
        %1798 = vst [vmem:[#allocation1] ss:$9 sm:$0xff] %v580
        %v1799 = vld [vmem:[#allocation1] sm:$0xff]
        %1801 = vst [vmem:[#allocation1] ss:$9 sm:$0xff] %v583
        %v1802 = vld [vmem:[#allocation1] sm:$0xff]
        %1805 = vst [vmem:[#allocation1] ss:$9 sm:$0xff] %v586
        %v1806 = vld [vmem:[#allocation1] sm:$0xff]
        %1809 = vst [vmem:[#allocation1] ss:$9 sm:$0xff] %v589
        %v1810 = vld [vmem:[#allocation1] sm:$0xff]
        %1813 = vst [vmem:[#allocation1] ss:$9 sm:$0xff] %v592
        %v1814 = vld [vmem:[#allocation1] sm:$0xff]
        %1816 = vst [vmem:[#allocation1] ss:$9 sm:$0xff] %v619
        %v1817 = vld [vmem:[#allocation1] sm:$0xff]
        %1820 = vst [vmem:[#allocation1] ss:$9 sm:$0xff] %v622
        %v1821 = vld [vmem:[#allocation1] sm:$0xff]
        %1824 = vst [vmem:[#allocation1] ss:$9 sm:$0xff] %v625
        %v1825 = vld [vmem:[#allocation1] sm:$0xff]
        %1828 = vst [vmem:[#allocation1] ss:$9 sm:$0xff] %v628
        %v1829 = vld [vmem:[#allocation1] sm:$0xff]
        %1831 = vst [vmem:[#allocation1] ss:$9 sm:$0xff] %v631
        %v1832 = vld [vmem:[#allocation1] sm:$0xff]
        %1835 = vst [vmem:[#allocation1] ss:$9 sm:$0xff] %v634
        %v1836 = vld [vmem:[#allocation1] sm:$0xff]
        %1839 = vst [vmem:[#allocation1] ss:$9 sm:$0xff] %v637
        %v1840 = vld [vmem:[#allocation1] sm:$0xff]
        %1843 = vst [vmem:[#allocation1] ss:$9 sm:$0xff] %v640
        %v1844 = vld [vmem:[#allocation1] sm:$0xff]
        %1846 = vst [vmem:[#allocation1] ss:$9 sm:$0xff] %v667
        %v1847 = vld [vmem:[#allocation1] sm:$0xff]
        %1850 = vst [vmem:[#allocation1] ss:$9 sm:$0xff] %v670
        %v1851 = vld [vmem:[#allocation1] sm:$0xff]
        %1854 = vst [vmem:[#allocation1] ss:$9 sm:$0xff] %v673
        %v1855 = vld [vmem:[#allocation1] sm:$0xff]
        %1858 = vst [vmem:[#allocation1] ss:$9 sm:$0xff] %v676
        %v1859 = vld [vmem:[#allocation1] sm:$0xff]
        %1861 = vst [vmem:[#allocation1] ss:$9 sm:$0xff] %v679
        %v1862 = vld [vmem:[#allocation1] sm:$0xff]
        %1865 = vst [vmem:[#allocation1] ss:$9 sm:$0xff] %v682
        %v1866 = vld [vmem:[#allocation1] sm:$0xff]
        %1869 = vst [vmem:[#allocation1] ss:$9 sm:$0xff] %v685
        %v1870 = vld [vmem:[#allocation1] sm:$0xff]
        %1873 = vst [vmem:[#allocation1] ss:$9 sm:$0xff] %v688
        %v1874 = vld [vmem:[#allocation1] sm:$0xff]
        %1876 = vst [vmem:[#allocation1] ss:$9 sm:$0xff] %v715
        %v1877 = vld [vmem:[#allocation1] sm:$0xff]
        %1880 = vst [vmem:[#allocation1] ss:$9 sm:$0xff] %v718
        %v1881 = vld [vmem:[#allocation1] sm:$0xff]
        %1884 = vst [vmem:[#allocation1] ss:$9 sm:$0xff] %v721
        %v1885 = vld [vmem:[#allocation1] sm:$0xff]
        %1888 = vst [vmem:[#allocation1] ss:$9 sm:$0xff] %v724
        %v1889 = vld [vmem:[#allocation1] sm:$0xff]
        %1891 = vst [vmem:[#allocation1] ss:$9 sm:$0xff] %v727
        %v1892 = vld [vmem:[#allocation1] sm:$0xff]
        %1895 = vst [vmem:[#allocation1] ss:$9 sm:$0xff] %v730
        %v1896 = vld [vmem:[#allocation1] sm:$0xff]
        %1899 = vst [vmem:[#allocation1] ss:$9 sm:$0xff] %v733
        %v1900 = vld [vmem:[#allocation1] sm:$0xff]
        %1903 = vst [vmem:[#allocation1] ss:$9 sm:$0xff] %v736
        %v1904 = vld [vmem:[#allocation1] sm:$0xff]
        %1906 = vst [vmem:[#allocation1] ss:$9 sm:$0xff] 0
        %1907 = vst [vmem:[#allocation1] ss:$9 sm:$0xff] 0
        %1908 = vst [vmem:[#allocation1] ss:$9 sm:$0xff] 0
        %1909 = vst [vmem:[#allocation1] ss:$9 sm:$0xff] 0
        %1910 = vst [vmem:[#allocation1] ss:$9 sm:$0xff] 0
        %1911 = vst [vmem:[#allocation1] ss:$9 sm:$0xff] 0
        %1912 = vst [vmem:[#allocation1] ss:$9 sm:$0xff] 0
        %1913 = vst [vmem:[#allocation1] ss:$9 sm:$0xff] 0
        %v1914 = vunpack.c.l.b16 %v1667
        %v1915 = vunpack.c.l.b16 %v1671
        %v1916 = vunpack.c.l.b16 %v1675
        %v1917 = vunpack.c.l.b16 %v1679
        %v1918 = vunpack.c.l.b16 %v1682
        %v1919 = vunpack.c.l.b16 %v1686
        %v1920 = vunpack.c.l.b16 %v1690
        %v1921 = vunpack.c.l.b16 %v1694
        %v1922 = vunpack.c.l.b16 %v1697
        %v1923 = vunpack.c.l.b16 %v1701
        %v1924 = vunpack.c.l.b16 %v1705
        %v1925 = vunpack.c.l.b16 %v1709
        %v1926 = vunpack.c.l.b16 %v1712
        %v1927 = vunpack.c.l.b16 %v1716
        %v1928 = vunpack.c.l.b16 %v1720
        %v1929 = vunpack.c.l.b16 %v1724
        %v1930 = vunpack.c.l.b16 %v1727
        %v1931 = vunpack.c.l.b16 %v1731
        %v1932 = vunpack.c.l.b16 %v1735
        %v1933 = vunpack.c.l.b16 %v1739
        %v1934 = vunpack.c.l.b16 %v1742
        %v1935 = vunpack.c.l.b16 %v1746
        %v1936 = vunpack.c.l.b16 %v1750
        %v1937 = vunpack.c.l.b16 %v1754
        %v1938 = vunpack.c.l.b16 %v1757
        %v1939 = vunpack.c.l.b16 %v1761
        %v1940 = vunpack.c.l.b16 %v1765
        %v1941 = vunpack.c.l.b16 %v1769
        %v1942 = vunpack.c.l.b16 %v1772
        %v1943 = vunpack.c.l.b16 %v1776
        %v1944 = vunpack.c.l.b16 %v1780
        %v1945 = vunpack.c.l.b16 %v1784
        %v1946 = vunpack.c.l.b16 %v1787
        %v1947 = vunpack.c.l.b16 %v1791
        %v1948 = vunpack.c.l.b16 %v1795
        %v1949 = vunpack.c.l.b16 %v1799
        %v1950 = vunpack.c.l.b16 %v1802
        %v1951 = vunpack.c.l.b16 %v1806
        %v1952 = vunpack.c.l.b16 %v1810
        %v1953 = vunpack.c.l.b16 %v1814
        %v1954 = vunpack.c.l.b16 %v1817
        %v1955 = vunpack.c.l.b16 %v1821
        %v1956 = vunpack.c.l.b16 %v1825
        %v1957 = vunpack.c.l.b16 %v1829
        %v1958 = vunpack.c.l.b16 %v1832
        %v1959 = vunpack.c.l.b16 %v1836
        %v1960 = vunpack.c.l.b16 %v1840
        %v1961 = vunpack.c.l.b16 %v1844
        %v1962 = vunpack.c.l.b16 %v1847
        %v1963 = vunpack.c.l.b16 %v1851
        %v1964 = vunpack.c.l.b16 %v1855
        %v1965 = vunpack.c.l.b16 %v1859
        %v1966 = vunpack.c.l.b16 %v1862
        %v1967 = vunpack.c.l.b16 %v1866
        %v1968 = vunpack.c.l.b16 %v1870
        %v1969 = vunpack.c.l.b16 %v1874
        %v1970 = vunpack.c.l.b16 %v1877
        %v1971 = vunpack.c.l.b16 %v1881
        %v1972 = vunpack.c.l.b16 %v1885
        %v1973 = vunpack.c.l.b16 %v1889
        %v1974 = vunpack.c.l.b16 %v1892
        %v1975 = vunpack.c.l.b16 %v1896
        %v1976 = vunpack.c.l.b16 %v1900
        %v1977 = vunpack.c.l.b16 %v1904
        %v1978 = vrot.slane %v1915, 7
        %v1979 = vsel %vm381, %v1978, %v1914
        %v1980 = vrot.slane %v1916, 6
        %v1981 = vsel %vm385, %v1980, %v1979
        %v1982 = vrot.slane %v1917, 5
        %v1983 = vsel %vm1072, %v1982, %v1981
        %v1984 = vrot.slane %v1918, 4
        %v1985 = vsel %vm1075, %v1984, %v1983
        %v1986 = vrot.slane %v1919, 3
        %v1987 = vsel %vm1078, %v1986, %v1985
        %v1988 = vrot.slane %v1920, 2
        %v1989 = vsel %vm1081, %v1988, %v1987
        %v1990 = vrot.slane %v1921, 1
        %v1991 = vrot.slane %v1923, 7
        %v1992 = vsel %vm381, %v1991, %v1922
        %v1993 = vrot.slane %v1924, 6
        %v1994 = vsel %vm385, %v1993, %v1992
        %v1995 = vrot.slane %v1925, 5
        %v1996 = vsel %vm1072, %v1995, %v1994
        %v1997 = vrot.slane %v1926, 4
        %v1998 = vsel %vm1075, %v1997, %v1996
        %v1999 = vrot.slane %v1927, 3
        %v2000 = vsel %vm1078, %v1999, %v1998
        %v2001 = vrot.slane %v1928, 2
        %v2002 = vsel %vm1081, %v2001, %v2000
        %v2003 = vrot.slane %v1929, 1
        %v2004 = vrot.slane %v1931, 7
        %v2005 = vsel %vm381, %v2004, %v1930
        %v2006 = vrot.slane %v1932, 6
        %v2007 = vsel %vm385, %v2006, %v2005
        %v2008 = vrot.slane %v1933, 5
        %v2009 = vsel %vm1072, %v2008, %v2007
        %v2010 = vrot.slane %v1934, 4
        %v2011 = vsel %vm1075, %v2010, %v2009
        %v2012 = vrot.slane %v1935, 3
        %v2013 = vsel %vm1078, %v2012, %v2011
        %v2014 = vrot.slane %v1936, 2
        %v2015 = vsel %vm1081, %v2014, %v2013
        %v2016 = vrot.slane %v1937, 1
        %v2017 = vrot.slane %v1939, 7
        %v2018 = vsel %vm381, %v2017, %v1938
        %v2019 = vrot.slane %v1940, 6
        %v2020 = vsel %vm385, %v2019, %v2018
        %v2021 = vrot.slane %v1941, 5
        %v2022 = vsel %vm1072, %v2021, %v2020
        %v2023 = vrot.slane %v1942, 4
        %v2024 = vsel %vm1075, %v2023, %v2022
        %v2025 = vrot.slane %v1943, 3
        %v2026 = vsel %vm1078, %v2025, %v2024
        %v2027 = vrot.slane %v1944, 2
        %v2028 = vsel %vm1081, %v2027, %v2026
        %v2029 = vrot.slane %v1945, 1
        %v2030 = vrot.slane %v1947, 7
        %v2031 = vsel %vm381, %v2030, %v1946
        %v2032 = vrot.slane %v1948, 6
        %v2033 = vsel %vm385, %v2032, %v2031
        %v2034 = vrot.slane %v1949, 5
        %v2035 = vsel %vm1072, %v2034, %v2033
        %v2036 = vrot.slane %v1950, 4
        %v2037 = vsel %vm1075, %v2036, %v2035
        %v2038 = vrot.slane %v1951, 3
        %v2039 = vsel %vm1078, %v2038, %v2037
        %v2040 = vrot.slane %v1952, 2
        %v2041 = vsel %vm1081, %v2040, %v2039
        %v2042 = vrot.slane %v1953, 1
        %v2043 = vrot.slane %v1955, 7
        %v2044 = vsel %vm381, %v2043, %v1954
        %v2045 = vrot.slane %v1956, 6
        %v2046 = vsel %vm385, %v2045, %v2044
        %v2047 = vrot.slane %v1957, 5
        %v2048 = vsel %vm1072, %v2047, %v2046
        %v2049 = vrot.slane %v1958, 4
        %v2050 = vsel %vm1075, %v2049, %v2048
        %v2051 = vrot.slane %v1959, 3
        %v2052 = vsel %vm1078, %v2051, %v2050
        %v2053 = vrot.slane %v1960, 2
        %v2054 = vsel %vm1081, %v2053, %v2052
        %v2055 = vrot.slane %v1961, 1
        %v2056 = vrot.slane %v1963, 7
        %v2057 = vsel %vm381, %v2056, %v1962
        %v2058 = vrot.slane %v1964, 6
        %v2059 = vsel %vm385, %v2058, %v2057
        %v2060 = vrot.slane %v1965, 5
        %v2061 = vsel %vm1072, %v2060, %v2059
        %v2062 = vrot.slane %v1966, 4
        %v2063 = vsel %vm1075, %v2062, %v2061
        %v2064 = vrot.slane %v1967, 3
        %v2065 = vsel %vm1078, %v2064, %v2063
        %v2066 = vrot.slane %v1968, 2
        %v2067 = vsel %vm1081, %v2066, %v2065
        %v2068 = vrot.slane %v1969, 1
        %v2069 = vrot.slane %v1971, 7
        %v2070 = vsel %vm381, %v2069, %v1970
        %v2071 = vrot.slane %v1972, 6
        %v2072 = vsel %vm385, %v2071, %v2070
        %v2073 = vrot.slane %v1973, 5
        %v2074 = vsel %vm1072, %v2073, %v2072
        %v2075 = vrot.slane %v1974, 4
        %v2076 = vsel %vm1075, %v2075, %v2074
        %v2077 = vrot.slane %v1975, 3
        %v2078 = vsel %vm1078, %v2077, %v2076
        %v2079 = vrot.slane %v1976, 2
        %v2080 = vsel %vm1081, %v2079, %v2078
        %v2081 = vrot.slane %v1977, 1
        %v2082 = vpack.c.b16 %v1990, %v1989
        %v2083 = vpack.c.b16 %v2003, %v2002
        %v2084 = vpack.c.b16 %v2016, %v2015
        %v2085 = vpack.c.b16 %v2029, %v2028
        %v2086 = vpack.c.b16 %v2042, %v2041
        %v2087 = vpack.c.b16 %v2055, %v2054
        %v2088 = vpack.c.b16 %v2068, %v2067
        %v2089 = vpack.c.b16 %v2081, %v2080
        %v2098 = vsel %vm1263, 0, %v2082
        %v2099 = vsel %vm1263, 0, %v2083
        %v2100 = vsel %vm1263, 0, %v2084
        %v2101 = vsel %vm1263, 0, %v2085
        %v2102 = vsel %vm1263, 0, %v2086
        %v2103 = vsel %vm1263, 0, %v2087
        %v2104 = vsel %vm1263, 0, %v2088
        %v2105 = vsel %vm1263, 0, %v2089
        %2106 = vst [vmem:[#allocation1] ss:$9 sm:$0xff] %v376
        %v2107 = vld [vmem:[#allocation1] sm:$0xff]
        %2109 = vst [vmem:[#allocation1] ss:$9 sm:$0xff] %v380
        %v2110 = vld [vmem:[#allocation1] sm:$0xff]
        %2112 = vst [vmem:[#allocation1] ss:$9 sm:$0xff] %v384
        %v2113 = vld [vmem:[#allocation1] sm:$0xff]
        %2115 = vst [vmem:[#allocation1] ss:$9 sm:$0xff] %v388
        %v2116 = vld [vmem:[#allocation1] sm:$0xff]
        %2118 = vst [vmem:[#allocation1] ss:$9 sm:$0xff] %v391
        %v2119 = vld [vmem:[#allocation1] sm:$0xff]
        %2121 = vst [vmem:[#allocation1] ss:$9 sm:$0xff] %v394
        %v2122 = vld [vmem:[#allocation1] sm:$0xff]
        %2124 = vst [vmem:[#allocation1] ss:$9 sm:$0xff] %v397
        %v2125 = vld [vmem:[#allocation1] sm:$0xff]
        %2127 = vst [vmem:[#allocation1] ss:$9 sm:$0xff] %v400
        %v2128 = vld [vmem:[#allocation1] sm:$0xff]
        %2130 = vst [vmem:[#allocation1] ss:$9 sm:$0xff] %v427
        %v2131 = vld [vmem:[#allocation1] sm:$0xff]
        %2133 = vst [vmem:[#allocation1] ss:$9 sm:$0xff] %v430
        %v2134 = vld [vmem:[#allocation1] sm:$0xff]
        %2136 = vst [vmem:[#allocation1] ss:$9 sm:$0xff] %v433
        %v2137 = vld [vmem:[#allocation1] sm:$0xff]
        %2139 = vst [vmem:[#allocation1] ss:$9 sm:$0xff] %v436
        %v2140 = vld [vmem:[#allocation1] sm:$0xff]
        %2142 = vst [vmem:[#allocation1] ss:$9 sm:$0xff] %v439
        %v2143 = vld [vmem:[#allocation1] sm:$0xff]
        %2145 = vst [vmem:[#allocation1] ss:$9 sm:$0xff] %v442
        %v2146 = vld [vmem:[#allocation1] sm:$0xff]
        %2148 = vst [vmem:[#allocation1] ss:$9 sm:$0xff] %v445
        %v2149 = vld [vmem:[#allocation1] sm:$0xff]
        %2151 = vst [vmem:[#allocation1] ss:$9 sm:$0xff] %v448
        %v2152 = vld [vmem:[#allocation1] sm:$0xff]
        %2154 = vst [vmem:[#allocation1] ss:$9 sm:$0xff] %v475
        %v2155 = vld [vmem:[#allocation1] sm:$0xff]
        %2157 = vst [vmem:[#allocation1] ss:$9 sm:$0xff] %v478
        %v2158 = vld [vmem:[#allocation1] sm:$0xff]
        %2160 = vst [vmem:[#allocation1] ss:$9 sm:$0xff] %v481
        %v2161 = vld [vmem:[#allocation1] sm:$0xff]
        %2163 = vst [vmem:[#allocation1] ss:$9 sm:$0xff] %v484
        %v2164 = vld [vmem:[#allocation1] sm:$0xff]
        %2166 = vst [vmem:[#allocation1] ss:$9 sm:$0xff] %v487
        %v2167 = vld [vmem:[#allocation1] sm:$0xff]
        %2169 = vst [vmem:[#allocation1] ss:$9 sm:$0xff] %v490
        %v2170 = vld [vmem:[#allocation1] sm:$0xff]
        %2172 = vst [vmem:[#allocation1] ss:$9 sm:$0xff] %v493
        %v2173 = vld [vmem:[#allocation1] sm:$0xff]
        %2175 = vst [vmem:[#allocation1] ss:$9 sm:$0xff] %v496
        %v2176 = vld [vmem:[#allocation1] sm:$0xff]
        %2178 = vst [vmem:[#allocation1] ss:$9 sm:$0xff] %v523
        %v2179 = vld [vmem:[#allocation1] sm:$0xff]
        %2181 = vst [vmem:[#allocation1] ss:$9 sm:$0xff] %v526
        %v2182 = vld [vmem:[#allocation1] sm:$0xff]
        %2184 = vst [vmem:[#allocation1] ss:$9 sm:$0xff] %v529
        %v2185 = vld [vmem:[#allocation1] sm:$0xff]
        %2187 = vst [vmem:[#allocation1] ss:$9 sm:$0xff] %v532
        %v2188 = vld [vmem:[#allocation1] sm:$0xff]
        %2190 = vst [vmem:[#allocation1] ss:$9 sm:$0xff] %v535
        %v2191 = vld [vmem:[#allocation1] sm:$0xff]
        %2193 = vst [vmem:[#allocation1] ss:$9 sm:$0xff] %v538
        %v2194 = vld [vmem:[#allocation1] sm:$0xff]
        %2196 = vst [vmem:[#allocation1] ss:$9 sm:$0xff] %v541
        %v2197 = vld [vmem:[#allocation1] sm:$0xff]
        %2199 = vst [vmem:[#allocation1] ss:$9 sm:$0xff] %v544
        %v2200 = vld [vmem:[#allocation1] sm:$0xff]
        %2202 = vst [vmem:[#allocation1] ss:$9 sm:$0xff] %v571
        %v2203 = vld [vmem:[#allocation1] sm:$0xff]
        %2205 = vst [vmem:[#allocation1] ss:$9 sm:$0xff] %v574
        %v2206 = vld [vmem:[#allocation1] sm:$0xff]
        %2208 = vst [vmem:[#allocation1] ss:$9 sm:$0xff] %v577
        %v2209 = vld [vmem:[#allocation1] sm:$0xff]
        %2211 = vst [vmem:[#allocation1] ss:$9 sm:$0xff] %v580
        %v2212 = vld [vmem:[#allocation1] sm:$0xff]
        %2214 = vst [vmem:[#allocation1] ss:$9 sm:$0xff] %v583
        %v2215 = vld [vmem:[#allocation1] sm:$0xff]
        %2217 = vst [vmem:[#allocation1] ss:$9 sm:$0xff] %v586
        %v2218 = vld [vmem:[#allocation1] sm:$0xff]
        %2220 = vst [vmem:[#allocation1] ss:$9 sm:$0xff] %v589
        %v2221 = vld [vmem:[#allocation1] sm:$0xff]
        %2223 = vst [vmem:[#allocation1] ss:$9 sm:$0xff] %v592
        %v2224 = vld [vmem:[#allocation1] sm:$0xff]
        %2226 = vst [vmem:[#allocation1] ss:$9 sm:$0xff] %v619
        %v2227 = vld [vmem:[#allocation1] sm:$0xff]
        %2229 = vst [vmem:[#allocation1] ss:$9 sm:$0xff] %v622
        %v2230 = vld [vmem:[#allocation1] sm:$0xff]
        %2232 = vst [vmem:[#allocation1] ss:$9 sm:$0xff] %v625
        %v2233 = vld [vmem:[#allocation1] sm:$0xff]
        %2235 = vst [vmem:[#allocation1] ss:$9 sm:$0xff] %v628
        %v2236 = vld [vmem:[#allocation1] sm:$0xff]
        %2238 = vst [vmem:[#allocation1] ss:$9 sm:$0xff] %v631
        %v2239 = vld [vmem:[#allocation1] sm:$0xff]
        %2241 = vst [vmem:[#allocation1] ss:$9 sm:$0xff] %v634
        %v2242 = vld [vmem:[#allocation1] sm:$0xff]
        %2244 = vst [vmem:[#allocation1] ss:$9 sm:$0xff] %v637
        %v2245 = vld [vmem:[#allocation1] sm:$0xff]
        %2247 = vst [vmem:[#allocation1] ss:$9 sm:$0xff] %v640
        %v2248 = vld [vmem:[#allocation1] sm:$0xff]
        %2250 = vst [vmem:[#allocation1] ss:$9 sm:$0xff] %v667
        %v2251 = vld [vmem:[#allocation1] sm:$0xff]
        %2253 = vst [vmem:[#allocation1] ss:$9 sm:$0xff] %v670
        %v2254 = vld [vmem:[#allocation1] sm:$0xff]
        %2256 = vst [vmem:[#allocation1] ss:$9 sm:$0xff] %v673
        %v2257 = vld [vmem:[#allocation1] sm:$0xff]
        %2259 = vst [vmem:[#allocation1] ss:$9 sm:$0xff] %v676
        %v2260 = vld [vmem:[#allocation1] sm:$0xff]
        %2262 = vst [vmem:[#allocation1] ss:$9 sm:$0xff] %v679
        %v2263 = vld [vmem:[#allocation1] sm:$0xff]
        %2265 = vst [vmem:[#allocation1] ss:$9 sm:$0xff] %v682
        %v2266 = vld [vmem:[#allocation1] sm:$0xff]
        %2268 = vst [vmem:[#allocation1] ss:$9 sm:$0xff] %v685
        %v2269 = vld [vmem:[#allocation1] sm:$0xff]
        %2271 = vst [vmem:[#allocation1] ss:$9 sm:$0xff] %v688
        %v2272 = vld [vmem:[#allocation1] sm:$0xff]
        %2274 = vst [vmem:[#allocation1] ss:$9 sm:$0xff] %v715
        %v2275 = vld [vmem:[#allocation1] sm:$0xff]
        %2277 = vst [vmem:[#allocation1] ss:$9 sm:$0xff] %v718
        %v2278 = vld [vmem:[#allocation1] sm:$0xff]
        %2280 = vst [vmem:[#allocation1] ss:$9 sm:$0xff] %v721
        %v2281 = vld [vmem:[#allocation1] sm:$0xff]
        %2283 = vst [vmem:[#allocation1] ss:$9 sm:$0xff] %v724
        %v2284 = vld [vmem:[#allocation1] sm:$0xff]
        %2286 = vst [vmem:[#allocation1] ss:$9 sm:$0xff] %v727
        %v2287 = vld [vmem:[#allocation1] sm:$0xff]
        %2289 = vst [vmem:[#allocation1] ss:$9 sm:$0xff] %v730
        %v2290 = vld [vmem:[#allocation1] sm:$0xff]
        %2292 = vst [vmem:[#allocation1] ss:$9 sm:$0xff] %v733
        %v2293 = vld [vmem:[#allocation1] sm:$0xff]
        %2295 = vst [vmem:[#allocation1] ss:$9 sm:$0xff] %v736
        %v2296 = vld [vmem:[#allocation1] sm:$0xff]
        %2298 = vst [vmem:[#allocation1] ss:$9 sm:$0xff] 0
        %2299 = vst [vmem:[#allocation1] ss:$9 sm:$0xff] 0
        %2300 = vst [vmem:[#allocation1] ss:$9 sm:$0xff] 0
        %2301 = vst [vmem:[#allocation1] ss:$9 sm:$0xff] 0
        %2302 = vst [vmem:[#allocation1] ss:$9 sm:$0xff] 0
        %2303 = vst [vmem:[#allocation1] ss:$9 sm:$0xff] 0
        %2304 = vst [vmem:[#allocation1] ss:$9 sm:$0xff] 0
        %2305 = vst [vmem:[#allocation1] ss:$9 sm:$0xff] 0
        %v2306 = vunpack.c.l.b16 %v2107
        %v2307 = vunpack.c.l.b16 %v2110
        %v2308 = vunpack.c.l.b16 %v2113
        %v2309 = vunpack.c.l.b16 %v2116
        %v2310 = vunpack.c.l.b16 %v2119
        %v2311 = vunpack.c.l.b16 %v2122
        %v2312 = vunpack.c.l.b16 %v2125
        %v2313 = vunpack.c.l.b16 %v2128
        %v2314 = vunpack.c.l.b16 %v2131
        %v2315 = vunpack.c.l.b16 %v2134
        %v2316 = vunpack.c.l.b16 %v2137
        %v2317 = vunpack.c.l.b16 %v2140
        %v2318 = vunpack.c.l.b16 %v2143
        %v2319 = vunpack.c.l.b16 %v2146
        %v2320 = vunpack.c.l.b16 %v2149
        %v2321 = vunpack.c.l.b16 %v2152
        %v2322 = vunpack.c.l.b16 %v2155
        %v2323 = vunpack.c.l.b16 %v2158
        %v2324 = vunpack.c.l.b16 %v2161
        %v2325 = vunpack.c.l.b16 %v2164
        %v2326 = vunpack.c.l.b16 %v2167
        %v2327 = vunpack.c.l.b16 %v2170
        %v2328 = vunpack.c.l.b16 %v2173
        %v2329 = vunpack.c.l.b16 %v2176
        %v2330 = vunpack.c.l.b16 %v2179
        %v2331 = vunpack.c.l.b16 %v2182
        %v2332 = vunpack.c.l.b16 %v2185
        %v2333 = vunpack.c.l.b16 %v2188
        %v2334 = vunpack.c.l.b16 %v2191
        %v2335 = vunpack.c.l.b16 %v2194
        %v2336 = vunpack.c.l.b16 %v2197
        %v2337 = vunpack.c.l.b16 %v2200
        %v2338 = vunpack.c.l.b16 %v2203
        %v2339 = vunpack.c.l.b16 %v2206
        %v2340 = vunpack.c.l.b16 %v2209
        %v2341 = vunpack.c.l.b16 %v2212
        %v2342 = vunpack.c.l.b16 %v2215
        %v2343 = vunpack.c.l.b16 %v2218
        %v2344 = vunpack.c.l.b16 %v2221
        %v2345 = vunpack.c.l.b16 %v2224
        %v2346 = vunpack.c.l.b16 %v2227
        %v2347 = vunpack.c.l.b16 %v2230
        %v2348 = vunpack.c.l.b16 %v2233
        %v2349 = vunpack.c.l.b16 %v2236
        %v2350 = vunpack.c.l.b16 %v2239
        %v2351 = vunpack.c.l.b16 %v2242
        %v2352 = vunpack.c.l.b16 %v2245
        %v2353 = vunpack.c.l.b16 %v2248
        %v2354 = vunpack.c.l.b16 %v2251
        %v2355 = vunpack.c.l.b16 %v2254
        %v2356 = vunpack.c.l.b16 %v2257
        %v2357 = vunpack.c.l.b16 %v2260
        %v2358 = vunpack.c.l.b16 %v2263
        %v2359 = vunpack.c.l.b16 %v2266
        %v2360 = vunpack.c.l.b16 %v2269
        %v2361 = vunpack.c.l.b16 %v2272
        %v2362 = vunpack.c.l.b16 %v2275
        %v2363 = vunpack.c.l.b16 %v2278
        %v2364 = vunpack.c.l.b16 %v2281
        %v2365 = vunpack.c.l.b16 %v2284
        %v2366 = vunpack.c.l.b16 %v2287
        %v2367 = vunpack.c.l.b16 %v2290
        %v2368 = vunpack.c.l.b16 %v2293
        %v2369 = vunpack.c.l.b16 %v2296
        %v2370 = vrot.slane %v2307, 7
        %v2371 = vsel %vm377, %v2370, %v2306
        %v2372 = vrot.slane %v2308, 6
        %v2373 = vsel %vm381, %v2372, %v2371
        %v2374 = vrot.slane %v2309, 5
        %v2375 = vsel %vm385, %v2374, %v2373
        %v2376 = vrot.slane %v2310, 4
        %v2377 = vsel %vm1072, %v2376, %v2375
        %v2378 = vrot.slane %v2311, 3
        %v2379 = vsel %vm1075, %v2378, %v2377
        %v2380 = vrot.slane %v2312, 2
        %v2381 = vsel %vm1078, %v2380, %v2379
        %v2382 = vrot.slane %v2313, 1
        %v2383 = vsel %vm1081, %v2382, %v2381
        %v2384 = vrot.slane %v2315, 7
        %v2385 = vsel %vm377, %v2384, %v2314
        %v2386 = vrot.slane %v2316, 6
        %v2387 = vsel %vm381, %v2386, %v2385
        %v2388 = vrot.slane %v2317, 5
        %v2389 = vsel %vm385, %v2388, %v2387
        %v2390 = vrot.slane %v2318, 4
        %v2391 = vsel %vm1072, %v2390, %v2389
        %v2392 = vrot.slane %v2319, 3
        %v2393 = vsel %vm1075, %v2392, %v2391
        %v2394 = vrot.slane %v2320, 2
        %v2395 = vsel %vm1078, %v2394, %v2393
        %v2396 = vrot.slane %v2321, 1
        %v2397 = vsel %vm1081, %v2396, %v2395
        %v2398 = vrot.slane %v2323, 7
        %v2399 = vsel %vm377, %v2398, %v2322
        %v2400 = vrot.slane %v2324, 6
        %v2401 = vsel %vm381, %v2400, %v2399
        %v2402 = vrot.slane %v2325, 5
        %v2403 = vsel %vm385, %v2402, %v2401
        %v2404 = vrot.slane %v2326, 4
        %v2405 = vsel %vm1072, %v2404, %v2403
        %v2406 = vrot.slane %v2327, 3
        %v2407 = vsel %vm1075, %v2406, %v2405
        %v2408 = vrot.slane %v2328, 2
        %v2409 = vsel %vm1078, %v2408, %v2407
        %v2410 = vrot.slane %v2329, 1
        %v2411 = vsel %vm1081, %v2410, %v2409
        %v2412 = vrot.slane %v2331, 7
        %v2413 = vsel %vm377, %v2412, %v2330
        %v2414 = vrot.slane %v2332, 6
        %v2415 = vsel %vm381, %v2414, %v2413
        %v2416 = vrot.slane %v2333, 5
        %v2417 = vsel %vm385, %v2416, %v2415
        %v2418 = vrot.slane %v2334, 4
        %v2419 = vsel %vm1072, %v2418, %v2417
        %v2420 = vrot.slane %v2335, 3
        %v2421 = vsel %vm1075, %v2420, %v2419
        %v2422 = vrot.slane %v2336, 2
        %v2423 = vsel %vm1078, %v2422, %v2421
        %v2424 = vrot.slane %v2337, 1
        %v2425 = vsel %vm1081, %v2424, %v2423
        %v2426 = vrot.slane %v2339, 7
        %v2427 = vsel %vm377, %v2426, %v2338
        %v2428 = vrot.slane %v2340, 6
        %v2429 = vsel %vm381, %v2428, %v2427
        %v2430 = vrot.slane %v2341, 5
        %v2431 = vsel %vm385, %v2430, %v2429
        %v2432 = vrot.slane %v2342, 4
        %v2433 = vsel %vm1072, %v2432, %v2431
        %v2434 = vrot.slane %v2343, 3
        %v2435 = vsel %vm1075, %v2434, %v2433
        %v2436 = vrot.slane %v2344, 2
        %v2437 = vsel %vm1078, %v2436, %v2435
        %v2438 = vrot.slane %v2345, 1
        %v2439 = vsel %vm1081, %v2438, %v2437
        %v2440 = vrot.slane %v2347, 7
        %v2441 = vsel %vm377, %v2440, %v2346
        %v2442 = vrot.slane %v2348, 6
        %v2443 = vsel %vm381, %v2442, %v2441
        %v2444 = vrot.slane %v2349, 5
        %v2445 = vsel %vm385, %v2444, %v2443
        %v2446 = vrot.slane %v2350, 4
        %v2447 = vsel %vm1072, %v2446, %v2445
        %v2448 = vrot.slane %v2351, 3
        %v2449 = vsel %vm1075, %v2448, %v2447
        %v2450 = vrot.slane %v2352, 2
        %v2451 = vsel %vm1078, %v2450, %v2449
        %v2452 = vrot.slane %v2353, 1
        %v2453 = vsel %vm1081, %v2452, %v2451
        %v2454 = vrot.slane %v2355, 7
        %v2455 = vsel %vm377, %v2454, %v2354
        %v2456 = vrot.slane %v2356, 6
        %v2457 = vsel %vm381, %v2456, %v2455
        %v2458 = vrot.slane %v2357, 5
        %v2459 = vsel %vm385, %v2458, %v2457
        %v2460 = vrot.slane %v2358, 4
        %v2461 = vsel %vm1072, %v2460, %v2459
        %v2462 = vrot.slane %v2359, 3
        %v2463 = vsel %vm1075, %v2462, %v2461
        %v2464 = vrot.slane %v2360, 2
        %v2465 = vsel %vm1078, %v2464, %v2463
        %v2466 = vrot.slane %v2361, 1
        %v2467 = vsel %vm1081, %v2466, %v2465
        %v2468 = vrot.slane %v2363, 7
        %v2469 = vsel %vm377, %v2468, %v2362
        %v2470 = vrot.slane %v2364, 6
        %v2471 = vsel %vm381, %v2470, %v2469
        %v2472 = vrot.slane %v2365, 5
        %v2473 = vsel %vm385, %v2472, %v2471
        %v2474 = vrot.slane %v2366, 4
        %v2475 = vsel %vm1072, %v2474, %v2473
        %v2476 = vrot.slane %v2367, 3
        %v2477 = vsel %vm1075, %v2476, %v2475
        %v2478 = vrot.slane %v2368, 2
        %v2479 = vsel %vm1078, %v2478, %v2477
        %v2480 = vrot.slane %v2369, 1
        %v2481 = vsel %vm1081, %v2480, %v2479
        %v2482 = vpack.c.b16 %v2383, %v2383
        %v2483 = vpack.c.b16 %v2397, %v2397
        %v2484 = vpack.c.b16 %v2411, %v2411
        %v2485 = vpack.c.b16 %v2425, %v2425
        %v2486 = vpack.c.b16 %v2439, %v2439
        %v2487 = vpack.c.b16 %v2453, %v2453
        %v2488 = vpack.c.b16 %v2467, %v2467
        %v2489 = vpack.c.b16 %v2481, %v2481
        %v2491 = vsel %vm1649, %v2482, 0
        %v2493 = vsel %vm1649, %v2483, 0
        %v2495 = vsel %vm1649, %v2484, 0
        %v2497 = vsel %vm1649, %v2485, 0
        %v2499 = vsel %vm1649, %v2486, 0
        %v2501 = vsel %vm1649, %v2487, 0
        %v2503 = vsel %vm1649, %v2488, 0
        %v2505 = vsel %vm1649, %v2489, 0
        %2514 = vrot.lane.b32.xlu0 0, 8
        %v2515 = vpop.permute.xlu0 %2514
        %2516 = vrot.lane.b32.xlu0 %v1651, 8
        %v2517 = vpop.permute.xlu0 %2516
        %2518 = vrot.lane.b32.xlu0 %v1653, 8
        %v2519 = vpop.permute.xlu0 %2518
        %2520 = vrot.lane.b32.xlu0 %v1655, 8
        %v2521 = vpop.permute.xlu0 %2520
        %2522 = vrot.lane.b32.xlu0 %v1657, 8
        %v2523 = vpop.permute.xlu0 %2522
        %2524 = vrot.lane.b32.xlu0 %v1659, 8
        %v2525 = vpop.permute.xlu0 %2524
        %2526 = vrot.lane.b32.xlu0 %v1661, 8
        %v2527 = vpop.permute.xlu0 %2526
        %2528 = vrot.lane.b32.xlu0 %v1663, 8
        %v2529 = vpop.permute.xlu0 %2528
        %v2531 = vshrl.u32 %v1264, 16
        %v2533 = vshll.u32 %v1264, 16
        %v2535 = vrot.slane %v2533, 1
        %v2536 = vor.u32 %v2531, %v2535
        %v2538 = vshrl.u32 %v1265, 16
        %v2540 = vshll.u32 %v1265, 16
        %v2542 = vrot.slane %v2540, 1
        %v2543 = vor.u32 %v2538, %v2542
        %v2545 = vshrl.u32 %v1266, 16
        %v2547 = vshll.u32 %v1266, 16
        %v2549 = vrot.slane %v2547, 1
        %v2550 = vor.u32 %v2545, %v2549
        %v2552 = vshrl.u32 %v1267, 16
        %v2554 = vshll.u32 %v1267, 16
        %v2556 = vrot.slane %v2554, 1
        %v2557 = vor.u32 %v2552, %v2556
        %v2559 = vshrl.u32 %v1268, 16
        %v2561 = vshll.u32 %v1268, 16
        %v2563 = vrot.slane %v2561, 1
        %v2564 = vor.u32 %v2559, %v2563
        %v2566 = vshrl.u32 %v1269, 16
        %v2568 = vshll.u32 %v1269, 16
        %v2570 = vrot.slane %v2568, 1
        %v2571 = vor.u32 %v2566, %v2570
        %v2573 = vshrl.u32 %v1270, 16
        %v2575 = vshll.u32 %v1270, 16
        %v2577 = vrot.slane %v2575, 1
        %v2578 = vor.u32 %v2573, %v2577
        %v2580 = vshrl.u32 %v1271, 16
        %v2582 = vshll.u32 %v1271, 16
        %v2584 = vrot.slane %v2582, 1
        %v2585 = vor.u32 %v2580, %v2584
        %2586 = vrot.lane.b32.xlu0 %v2536, 16
        %v2587 = vpop.permute.xlu0 %2586
        %2588 = vrot.lane.b32.xlu0 %v2543, 16
        %v2589 = vpop.permute.xlu0 %2588
        %2590 = vrot.lane.b32.xlu0 %v2550, 16
        %v2591 = vpop.permute.xlu0 %2590
        %2592 = vrot.lane.b32.xlu0 %v2557, 16
        %v2593 = vpop.permute.xlu0 %2592
        %2594 = vrot.lane.b32.xlu0 %v2564, 16
        %v2595 = vpop.permute.xlu0 %2594
        %2596 = vrot.lane.b32.xlu0 %v2571, 16
        %v2597 = vpop.permute.xlu0 %2596
        %2598 = vrot.lane.b32.xlu0 %v2578, 16
        %v2599 = vpop.permute.xlu0 %2598
        %2600 = vrot.lane.b32.xlu0 %v2585, 16
        %v2601 = vpop.permute.xlu0 %2600
        %2610 = vrot.lane.b32.xlu0 %v2098, 24
        %v2611 = vpop.permute.xlu0 %2610
        %2612 = vrot.lane.b32.xlu0 %v2099, 24
        %v2613 = vpop.permute.xlu0 %2612
        %2614 = vrot.lane.b32.xlu0 %v2100, 24
        %v2615 = vpop.permute.xlu0 %2614
        %2616 = vrot.lane.b32.xlu0 %v2101, 24
        %v2617 = vpop.permute.xlu0 %2616
        %2618 = vrot.lane.b32.xlu0 %v2102, 24
        %v2619 = vpop.permute.xlu0 %2618
        %2620 = vrot.lane.b32.xlu0 %v2103, 24
        %v2621 = vpop.permute.xlu0 %2620
        %2622 = vrot.lane.b32.xlu0 %v2104, 24
        %v2623 = vpop.permute.xlu0 %2622
        %2624 = vrot.lane.b32.xlu0 %v2105, 24
        %v2625 = vpop.permute.xlu0 %2624
        %2634 = vrot.lane.b32.xlu0 %v2491, 32
        %v2635 = vpop.permute.xlu0 %2634
        %2636 = vrot.lane.b32.xlu0 %v2493, 32
        %v2637 = vpop.permute.xlu0 %2636
        %2638 = vrot.lane.b32.xlu0 %v2495, 32
        %v2639 = vpop.permute.xlu0 %2638
        %2640 = vrot.lane.b32.xlu0 %v2497, 32
        %v2641 = vpop.permute.xlu0 %2640
        %2642 = vrot.lane.b32.xlu0 %v2499, 32
        %v2643 = vpop.permute.xlu0 %2642
        %2644 = vrot.lane.b32.xlu0 %v2501, 32
        %v2645 = vpop.permute.xlu0 %2644
        %2646 = vrot.lane.b32.xlu0 %v2503, 32
        %v2647 = vpop.permute.xlu0 %2646
        %2648 = vrot.lane.b32.xlu0 %v2505, 32
        %v2649 = vpop.permute.xlu0 %2648
        %v2651 = vshrl.u32 %v2098, 16
        %v2653 = vshll.u32 %v2098, 16
        %v2655 = vrot.slane %v2653, 1
        %v2656 = vor.u32 %v2651, %v2655
        %v2658 = vshrl.u32 %v2099, 16
        %v2660 = vshll.u32 %v2099, 16
        %v2662 = vrot.slane %v2660, 1
        %v2663 = vor.u32 %v2658, %v2662
        %v2665 = vshrl.u32 %v2100, 16
        %v2667 = vshll.u32 %v2100, 16
        %v2669 = vrot.slane %v2667, 1
        %v2670 = vor.u32 %v2665, %v2669
        %v2672 = vshrl.u32 %v2101, 16
        %v2674 = vshll.u32 %v2101, 16
        %v2676 = vrot.slane %v2674, 1
        %v2677 = vor.u32 %v2672, %v2676
        %v2679 = vshrl.u32 %v2102, 16
        %v2681 = vshll.u32 %v2102, 16
        %v2683 = vrot.slane %v2681, 1
        %v2684 = vor.u32 %v2679, %v2683
        %v2686 = vshrl.u32 %v2103, 16
        %v2688 = vshll.u32 %v2103, 16
        %v2690 = vrot.slane %v2688, 1
        %v2691 = vor.u32 %v2686, %v2690
        %v2693 = vshrl.u32 %v2104, 16
        %v2695 = vshll.u32 %v2104, 16
        %v2697 = vrot.slane %v2695, 1
        %v2698 = vor.u32 %v2693, %v2697
        %v2700 = vshrl.u32 %v2105, 16
        %v2702 = vshll.u32 %v2105, 16
        %v2704 = vrot.slane %v2702, 1
        %v2705 = vor.u32 %v2700, %v2704
        %2706 = vrot.lane.b32.xlu0 %v2656, 40
        %v2707 = vpop.permute.xlu0 %2706
        %2708 = vrot.lane.b32.xlu0 %v2663, 40
        %v2709 = vpop.permute.xlu0 %2708
        %2710 = vrot.lane.b32.xlu0 %v2670, 40
        %v2711 = vpop.permute.xlu0 %2710
        %2712 = vrot.lane.b32.xlu0 %v2677, 40
        %v2713 = vpop.permute.xlu0 %2712
        %2714 = vrot.lane.b32.xlu0 %v2684, 40
        %v2715 = vpop.permute.xlu0 %2714
        %2716 = vrot.lane.b32.xlu0 %v2691, 40
        %v2717 = vpop.permute.xlu0 %2716
        %2718 = vrot.lane.b32.xlu0 %v2698, 40
        %v2719 = vpop.permute.xlu0 %2718
        %2720 = vrot.lane.b32.xlu0 %v2705, 40
        %v2721 = vpop.permute.xlu0 %2720
        %2730 = vrot.lane.b32.xlu0 %v1265, 48
        %v2731 = vpop.permute.xlu0 %2730
        %2732 = vrot.lane.b32.xlu0 %v1266, 48
        %v2733 = vpop.permute.xlu0 %2732
        %2734 = vrot.lane.b32.xlu0 %v1267, 48
        %v2735 = vpop.permute.xlu0 %2734
        %2736 = vrot.lane.b32.xlu0 %v1268, 48
        %v2737 = vpop.permute.xlu0 %2736
        %2738 = vrot.lane.b32.xlu0 %v1269, 48
        %v2739 = vpop.permute.xlu0 %2738
        %2740 = vrot.lane.b32.xlu0 %v1270, 48
        %v2741 = vpop.permute.xlu0 %2740
        %2742 = vrot.lane.b32.xlu0 %v1271, 48
        %v2743 = vpop.permute.xlu0 %2742
        %2744 = vrot.lane.b32.xlu0 %v1272, 48
        %v2745 = vpop.permute.xlu0 %2744
        %2747 = vrot.lane.b32.xlu0 %v1651, 56
        %v2748 = vpop.permute.xlu0 %2747
        %2749 = vrot.lane.b32.xlu0 %v1653, 56
        %v2750 = vpop.permute.xlu0 %2749
        %2751 = vrot.lane.b32.xlu0 %v1655, 56
        %v2752 = vpop.permute.xlu0 %2751
        %2753 = vrot.lane.b32.xlu0 %v1657, 56
        %v2754 = vpop.permute.xlu0 %2753
        %2755 = vrot.lane.b32.xlu0 %v1659, 56
        %v2756 = vpop.permute.xlu0 %2755
        %2757 = vrot.lane.b32.xlu0 %v1661, 56
        %v2758 = vpop.permute.xlu0 %2757
        %2759 = vrot.lane.b32.xlu0 %v1663, 56
        %v2760 = vpop.permute.xlu0 %2759
        %2761 = vrot.lane.b32.xlu0 %v1665, 56
        %v2762 = vpop.permute.xlu0 %2761
        %v2764 = vshrl.u32 %v1272, 16
        %v2766 = vshll.u32 %v1272, 16
        %v2768 = vrot.slane %v2766, 1
        %v2769 = vor.u32 %v2764, %v2768
        %2770 = vrot.lane.b32.xlu0 %v2543, 64
        %v2771 = vpop.permute.xlu0 %2770
        %2772 = vrot.lane.b32.xlu0 %v2550, 64
        %v2773 = vpop.permute.xlu0 %2772
        %2774 = vrot.lane.b32.xlu0 %v2557, 64
        %v2775 = vpop.permute.xlu0 %2774
        %2776 = vrot.lane.b32.xlu0 %v2564, 64
        %v2777 = vpop.permute.xlu0 %2776
        %2778 = vrot.lane.b32.xlu0 %v2571, 64
        %v2779 = vpop.permute.xlu0 %2778
        %2780 = vrot.lane.b32.xlu0 %v2578, 64
        %v2781 = vpop.permute.xlu0 %2780
        %2782 = vrot.lane.b32.xlu0 %v2585, 64
        %v2783 = vpop.permute.xlu0 %2782
        %2784 = vrot.lane.b32.xlu0 %v2769, 64
        %v2785 = vpop.permute.xlu0 %2784
        %vm2786 = vcmask 64512
        %v2788 = vsel %vm2786, %v1264, %v2515
        %v2790 = vsel %vm2786, %v1265, %v2517
        %v2792 = vsel %vm2786, %v1266, %v2519
        %v2794 = vsel %vm2786, %v1267, %v2521
        %v2796 = vsel %vm2786, %v1268, %v2523
        %v2798 = vsel %vm2786, %v1269, %v2525
        %v2800 = vsel %vm2786, %v1270, %v2527
        %v2802 = vsel %vm2786, %v1271, %v2529
        %vm2803 = vcmask 130048
        %v2805 = vsel %vm2803, %v2788, %v2587
        %v2807 = vsel %vm2803, %v2790, %v2589
        %v2809 = vsel %vm2803, %v2792, %v2591
        %v2811 = vsel %vm2803, %v2794, %v2593
        %v2813 = vsel %vm2803, %v2796, %v2595
        %v2815 = vsel %vm2803, %v2798, %v2597
        %v2817 = vsel %vm2803, %v2800, %v2599
        %v2819 = vsel %vm2803, %v2802, %v2601
        %vm2820 = vcmask 195584
        %v2822 = vsel %vm2820, %v2805, %v2611
        %v2824 = vsel %vm2820, %v2807, %v2613
        %v2826 = vsel %vm2820, %v2809, %v2615
        %v2828 = vsel %vm2820, %v2811, %v2617
        %v2830 = vsel %vm2820, %v2813, %v2619
        %v2832 = vsel %vm2820, %v2815, %v2621
        %v2834 = vsel %vm2820, %v2817, %v2623
        %v2836 = vsel %vm2820, %v2819, %v2625
        %vm2837 = vcmask 261120
        %v2839 = vsel %vm2837, %v2822, %v2635
        %v2841 = vsel %vm2837, %v2824, %v2637
        %v2843 = vsel %vm2837, %v2826, %v2639
        %v2845 = vsel %vm2837, %v2828, %v2641
        %v2847 = vsel %vm2837, %v2830, %v2643
        %v2849 = vsel %vm2837, %v2832, %v2645
        %v2851 = vsel %vm2837, %v2834, %v2647
        %v2853 = vsel %vm2837, %v2836, %v2649
        %vm2854 = vcmask 326656
        %v2856 = vsel %vm2854, %v2839, %v2707
        %v2858 = vsel %vm2854, %v2841, %v2709
        %v2860 = vsel %vm2854, %v2843, %v2711
        %v2862 = vsel %vm2854, %v2845, %v2713
        %v2864 = vsel %vm2854, %v2847, %v2715
        %v2866 = vsel %vm2854, %v2849, %v2717
        %v2868 = vsel %vm2854, %v2851, %v2719
        %v2870 = vsel %vm2854, %v2853, %v2721
        %vm2871 = vcmask 392192
        %v2873 = vsel %vm2871, %v2856, %v2731
        %v2875 = vsel %vm2871, %v2858, %v2733
        %v2877 = vsel %vm2871, %v2860, %v2735
        %v2879 = vsel %vm2871, %v2862, %v2737
        %v2881 = vsel %vm2871, %v2864, %v2739
        %v2883 = vsel %vm2871, %v2866, %v2741
        %v2885 = vsel %vm2871, %v2868, %v2743
        %v2887 = vsel %vm2871, %v2870, %v2745
        %vm2888 = vcmask 457728
        %v2890 = vsel %vm2888, %v2873, %v2748
        %v2892 = vsel %vm2888, %v2875, %v2750
        %v2894 = vsel %vm2888, %v2877, %v2752
        %v2896 = vsel %vm2888, %v2879, %v2754
        %v2898 = vsel %vm2888, %v2881, %v2756
        %v2900 = vsel %vm2888, %v2883, %v2758
        %v2902 = vsel %vm2888, %v2885, %v2760
        %v2904 = vsel %vm2888, %v2887, %v2762
        %vm2905 = vcmask 523264
        %v2907 = vsel %vm2905, %v2890, %v2771
        %v2909 = vsel %vm2905, %v2892, %v2773
        %v2911 = vsel %vm2905, %v2894, %v2775
        %v2913 = vsel %vm2905, %v2896, %v2777
        %v2915 = vsel %vm2905, %v2898, %v2779
        %v2917 = vsel %vm2905, %v2900, %v2781
        %v2919 = vsel %vm2905, %v2902, %v2783
        %v2921 = vsel %vm2905, %v2904, %v2785
        %v2922 = vld [vmem:[%s1] sm:$0xf]
        %v2923 = vld [vmem:[%s1 + $0x4] sm:$0xf]
        %v2924 = vld [vmem:[%s1 + $0x8] sm:$0xf]
        %v2925 = vld [vmem:[%s1 + $0xc] sm:$0xf]
        %v2926 = vld [vmem:[%s1 + $0x10] sm:$0xf]
        %v2927 = vld [vmem:[%s1 + $0x14] sm:$0xf]
        %v2928 = vld [vmem:[%s1 + $0x18] sm:$0xf]
        %v2929 = vld [vmem:[%s1 + $0x1c] sm:$0xf]
        %v2930 = vld [vmem:[%s1 + $0x20] sm:$0xf]
        %v2931 = vld [vmem:[%s3] sm:$0x1]
        %v2933 = vperm.slane %v2931, 0
        %v2943 = vunpack.c.l.b16 %v2907
        %v2944 = vunpack.c.l.b16 %v2909
        %v2945 = vunpack.c.l.b16 %v2911
        %v2946 = vunpack.c.l.b16 %v2913
        %v2947 = vunpack.c.l.b16 %v2915
        %v2948 = vunpack.c.l.b16 %v2917
        %v2949 = vunpack.c.l.b16 %v2919
        %v2950 = vunpack.c.l.b16 %v2921
        %v2951 = vpack.c.b16 %v2944, %v2943
        %v2952 = vpack.c.b16 %v2946, %v2945
        %v2953 = vpack.c.b16 %v2948, %v2947
        %v2954 = vpack.c.b16 %v2950, %v2949
        %v2964 = vunpack.c.l.b16 %v2922
        %v2965 = vunpack.c.l.b16 %v2923
        %v2966 = vunpack.c.l.b16 %v2924
        %v2967 = vunpack.c.l.b16 %v2925
        %v2968 = vunpack.c.l.b16 %v2926
        %v2969 = vunpack.c.l.b16 %v2927
        %v2970 = vunpack.c.l.b16 %v2928
        %v2971 = vunpack.c.l.b16 %v2929
        %v2972 = vunpack.c.l.b16 %v2930
        %v2973 = vpack.c.b16 %v2965, %v2964
        %v2974 = vpack.c.b16 %v2967, %v2966
        %v2975 = vpack.c.b16 %v2969, %v2968
        %v2976 = vpack.c.b16 %v2971, %v2970
        %v2977 = vpack.c.b16 %v2972, %v2972
        %vm2982 = vcmask 588800
        %v2984 = vsel %vm2982, %v2951, 0
        %v2987 = vsel %vm2982, %v2952, 0
        %v2990 = vsel %vm2982, %v2953, 0
        %v2993 = vsel %vm2982, %v2954, 0
        %v2996 = vsel %vm1649, %v2977, 0
        %2998 = vmatpush.bf16.msra.mxu0 0
        %2999 = vmatpush.bf16.msra.mxu0 0
        %3000 = vmatpush.bf16.msra.mxu0 0
        %3001 = vmatpush.bf16.msra.mxu0 %v2996
        %3002 = vmatpush.bf16.msra.mxu0 %v2976
        %3003 = vmatpush.bf16.msra.mxu0 %v2975
        %3004 = vmatpush.bf16.msra.mxu0 %v2974
        %3005 = vmatpush.bf16.msra.mxu0 %v2973
        %3006 = vmatmul.bf16.gmra.mxu0 %v2984
        %v3007 = vpop.f32.mrf.mxu0
        %v3008 = vadd.f32 %v2933, %v3007
        %v3009 = vpop.f32.mrf.mxu0
        %v3010 = vadd.f32 %v2933, %v3009
        %3011 = vmatmul.bf16.gmra.mxu0 %v2987
        %v3012 = vpop.f32.mrf.mxu0
        %v3013 = vadd.f32 %v2933, %v3012
        %v3014 = vpop.f32.mrf.mxu0
        %v3015 = vadd.f32 %v2933, %v3014
        %3016 = vmatmul.bf16.gmra.mxu0 %v2990
        %v3017 = vpop.f32.mrf.mxu0
        %v3018 = vadd.f32 %v2933, %v3017
        %v3019 = vpop.f32.mrf.mxu0
        %v3020 = vadd.f32 %v2933, %v3019
        %3021 = vmatmul.bf16.gmra.mxu0 %v2993
        %v3022 = vpop.f32.mrf.mxu0
        %v3023 = vadd.f32 %v2933, %v3022
        %v3024 = vpop.f32.mrf.mxu0
        %v3025 = vadd.f32 %v2933, %v3024
        %3026 = vdwg.mxu0
        %v3027 = vmax.f32 %v3008, 0.0
        %v3028 = vmax.f32 %v3010, 0.0
        %v3029 = vmax.f32 %v3013, 0.0
        %v3030 = vmax.f32 %v3015, 0.0
        %v3031 = vmax.f32 %v3018, 0.0
        %v3032 = vmax.f32 %v3020, 0.0
        %v3033 = vmax.f32 %v3023, 0.0
        %v3034 = vmax.f32 %v3025, 0.0
        %v3035 = vpack.c.bf16 %v3027, %v3027
        %v3036 = vpack.c.bf16 %v3028, %v3028
        %v3037 = vpack.c.bf16 %v3029, %v3029
        %v3038 = vpack.c.bf16 %v3030, %v3030
        %v3039 = vpack.c.bf16 %v3031, %v3031
        %v3040 = vpack.c.bf16 %v3032, %v3032
        %v3041 = vpack.c.bf16 %v3033, %v3033
        %v3042 = vpack.c.bf16 %v3034, %v3034
        %v3051 = vrot.slane %v3035, 3
        %v3052 = vrot.slane %v3036, 3
        %v3053 = vrot.slane %v3037, 3
        %v3054 = vrot.slane %v3038, 3
        %v3055 = vrot.slane %v3039, 3
        %v3056 = vrot.slane %v3040, 3
        %v3057 = vrot.slane %v3041, 3
        %v3058 = vrot.slane %v3042, 3
        %v3061 = vsel %vm373, %v3035, %v3051
        %v3062 = vsel %vm377, %v3035, %v3051
        %v3064 = vrot.slane %v3062, 1
        %v3065 = vsel %vm381, %v3035, %v3051
        %v3067 = vrot.slane %v3065, 2
        %v3068 = vsel %vm385, %v3035, %v3051
        %v3070 = vrot.slane %v3068, 3
        %v3073 = vsel %vm373, %v3036, %v3052
        %v3074 = vsel %vm377, %v3036, %v3052
        %v3076 = vrot.slane %v3074, 1
        %v3077 = vsel %vm381, %v3036, %v3052
        %v3079 = vrot.slane %v3077, 2
        %v3080 = vsel %vm385, %v3036, %v3052
        %v3082 = vrot.slane %v3080, 3
        %v3085 = vsel %vm373, %v3037, %v3053
        %v3086 = vsel %vm377, %v3037, %v3053
        %v3088 = vrot.slane %v3086, 1
        %v3089 = vsel %vm381, %v3037, %v3053
        %v3091 = vrot.slane %v3089, 2
        %v3092 = vsel %vm385, %v3037, %v3053
        %v3094 = vrot.slane %v3092, 3
        %v3097 = vsel %vm373, %v3038, %v3054
        %v3098 = vsel %vm377, %v3038, %v3054
        %v3100 = vrot.slane %v3098, 1
        %v3101 = vsel %vm381, %v3038, %v3054
        %v3103 = vrot.slane %v3101, 2
        %v3104 = vsel %vm385, %v3038, %v3054
        %v3106 = vrot.slane %v3104, 3
        %v3109 = vsel %vm373, %v3039, %v3055
        %v3110 = vsel %vm377, %v3039, %v3055
        %v3112 = vrot.slane %v3110, 1
        %v3113 = vsel %vm381, %v3039, %v3055
        %v3115 = vrot.slane %v3113, 2
        %v3116 = vsel %vm385, %v3039, %v3055
        %v3118 = vrot.slane %v3116, 3
        %v3121 = vsel %vm373, %v3040, %v3056
        %v3122 = vsel %vm377, %v3040, %v3056
        %v3124 = vrot.slane %v3122, 1
        %v3125 = vsel %vm381, %v3040, %v3056
        %v3127 = vrot.slane %v3125, 2
        %v3128 = vsel %vm385, %v3040, %v3056
        %v3130 = vrot.slane %v3128, 3
        %v3133 = vsel %vm373, %v3041, %v3057
        %v3134 = vsel %vm377, %v3041, %v3057
        %v3136 = vrot.slane %v3134, 1
        %v3137 = vsel %vm381, %v3041, %v3057
        %v3139 = vrot.slane %v3137, 2
        %v3140 = vsel %vm385, %v3041, %v3057
        %v3142 = vrot.slane %v3140, 3
        %v3145 = vsel %vm373, %v3042, %v3058
        %v3146 = vsel %vm377, %v3042, %v3058
        %v3148 = vrot.slane %v3146, 1
        %v3149 = vsel %vm381, %v3042, %v3058
        %v3151 = vrot.slane %v3149, 2
        %v3152 = vsel %vm385, %v3042, %v3058
        %v3154 = vrot.slane %v3152, 3
        %3155 = vst [vmem:[#allocation1] ss:$9 sm:$0xff] %v3073
        %v3156 = vld [vmem:[#allocation1] sm:$0xff]
        %3159 = vst [vmem:[#allocation1] ss:$9 sm:$0xff] %v3076
        %v3160 = vld [vmem:[#allocation1] sm:$0xff]
        %3163 = vst [vmem:[#allocation1] ss:$9 sm:$0xff] %v3079
        %v3164 = vld [vmem:[#allocation1] sm:$0xff]
        %3167 = vst [vmem:[#allocation1] ss:$9 sm:$0xff] %v3082
        %v3168 = vld [vmem:[#allocation1] sm:$0xff]
        %3170 = vst [vmem:[#allocation1] ss:$9 sm:$0xff] %v3097
        %v3171 = vld [vmem:[#allocation1] sm:$0xff]
        %3174 = vst [vmem:[#allocation1] ss:$9 sm:$0xff] %v3100
        %v3175 = vld [vmem:[#allocation1] sm:$0xff]
        %3178 = vst [vmem:[#allocation1] ss:$9 sm:$0xff] %v3103
        %v3179 = vld [vmem:[#allocation1] sm:$0xff]
        %3182 = vst [vmem:[#allocation1] ss:$9 sm:$0xff] %v3106
        %v3183 = vld [vmem:[#allocation1] sm:$0xff]
        %3185 = vst [vmem:[#allocation1] ss:$9 sm:$0xff] %v3121
        %v3186 = vld [vmem:[#allocation1] sm:$0xff]
        %3189 = vst [vmem:[#allocation1] ss:$9 sm:$0xff] %v3124
        %v3190 = vld [vmem:[#allocation1] sm:$0xff]
        %3193 = vst [vmem:[#allocation1] ss:$9 sm:$0xff] %v3127
        %v3194 = vld [vmem:[#allocation1] sm:$0xff]
        %3197 = vst [vmem:[#allocation1] ss:$9 sm:$0xff] %v3130
        %v3198 = vld [vmem:[#allocation1] sm:$0xff]
        %3200 = vst [vmem:[#allocation1] ss:$9 sm:$0xff] %v3145
        %v3201 = vld [vmem:[#allocation1] sm:$0xff]
        %3204 = vst [vmem:[#allocation1] ss:$9 sm:$0xff] %v3148
        %v3205 = vld [vmem:[#allocation1] sm:$0xff]
        %3208 = vst [vmem:[#allocation1] ss:$9 sm:$0xff] %v3151
        %v3209 = vld [vmem:[#allocation1] sm:$0xff]
        %3212 = vst [vmem:[#allocation1] ss:$9 sm:$0xff] %v3154
        %v3213 = vld [vmem:[#allocation1] sm:$0xff]
        %v3215 = vunpack.c.l.b16 %v3156
        %v3216 = vunpack.c.l.b16 %v3160
        %v3217 = vunpack.c.l.b16 %v3164
        %v3218 = vunpack.c.l.b16 %v3168
        %v3219 = vunpack.c.l.b16 %v3171
        %v3220 = vunpack.c.l.b16 %v3175
        %v3221 = vunpack.c.l.b16 %v3179
        %v3222 = vunpack.c.l.b16 %v3183
        %v3223 = vunpack.c.l.b16 %v3186
        %v3224 = vunpack.c.l.b16 %v3190
        %v3225 = vunpack.c.l.b16 %v3194
        %v3226 = vunpack.c.l.b16 %v3198
        %v3227 = vunpack.c.l.b16 %v3201
        %v3228 = vunpack.c.l.b16 %v3205
        %v3229 = vunpack.c.l.b16 %v3209
        %v3230 = vunpack.c.l.b16 %v3213
        %v3231 = vrot.slane %v3215, 1
        %v3232 = vsel %vm377, %v3216, %v3231
        %v3233 = vrot.slane %v3217, 7
        %v3234 = vsel %vm381, %v3233, %v3232
        %v3235 = vrot.slane %v3218, 6
        %v3236 = vsel %vm385, %v3235, %v3234
        %v3237 = vrot.slane %v3219, 1
        %v3238 = vsel %vm377, %v3220, %v3237
        %v3239 = vrot.slane %v3221, 7
        %v3240 = vsel %vm381, %v3239, %v3238
        %v3241 = vrot.slane %v3222, 6
        %v3242 = vsel %vm385, %v3241, %v3240
        %v3243 = vrot.slane %v3223, 1
        %v3244 = vsel %vm377, %v3224, %v3243
        %v3245 = vrot.slane %v3225, 7
        %v3246 = vsel %vm381, %v3245, %v3244
        %v3247 = vrot.slane %v3226, 6
        %v3248 = vsel %vm385, %v3247, %v3246
        %v3249 = vrot.slane %v3227, 1
        %v3250 = vsel %vm377, %v3228, %v3249
        %v3251 = vrot.slane %v3229, 7
        %v3252 = vsel %vm381, %v3251, %v3250
        %v3253 = vrot.slane %v3230, 6
        %v3254 = vsel %vm385, %v3253, %v3252
        %v3255 = vpack.c.b16 %v3236, %v3236
        %v3256 = vpack.c.b16 %v3242, %v3242
        %v3257 = vpack.c.b16 %v3248, %v3248
        %v3258 = vpack.c.b16 %v3254, %v3254
        %v3260 = vshrl.u32 %v3255, 16
        %v3262 = vrot.slane %v3260, 7
        %v3263 = vshll.u32 %v3255, 16
        %v3265 = vor.u32 %v3262, %v3263
        %v3267 = vshrl.u32 %v3256, 16
        %v3269 = vrot.slane %v3267, 7
        %v3270 = vshll.u32 %v3256, 16
        %v3272 = vor.u32 %v3269, %v3270
        %v3274 = vshrl.u32 %v3257, 16
        %v3276 = vrot.slane %v3274, 7
        %v3277 = vshll.u32 %v3257, 16
        %v3279 = vor.u32 %v3276, %v3277
        %v3281 = vshrl.u32 %v3258, 16
        %v3283 = vrot.slane %v3281, 7
        %v3284 = vshll.u32 %v3258, 16
        %v3286 = vor.u32 %v3283, %v3284
        %v3291 = vsel %vm1263, 0, %v3265
        %v3292 = vsel %vm1263, 0, %v3272
        %v3293 = vsel %vm1263, 0, %v3279
        %v3294 = vsel %vm1263, 0, %v3286
        %3295 = vst [vmem:[#allocation1] ss:$9 sm:$0xff] %v3073
        %v3296 = vld [vmem:[#allocation1] sm:$0xff]
        %3298 = vst [vmem:[#allocation1] ss:$9 sm:$0xff] %v3076
        %v3299 = vld [vmem:[#allocation1] sm:$0xff]
        %3301 = vst [vmem:[#allocation1] ss:$9 sm:$0xff] %v3079
        %v3302 = vld [vmem:[#allocation1] sm:$0xff]
        %3304 = vst [vmem:[#allocation1] ss:$9 sm:$0xff] %v3082
        %v3305 = vld [vmem:[#allocation1] sm:$0xff]
        %3307 = vst [vmem:[#allocation1] ss:$9 sm:$0xff] %v3097
        %v3308 = vld [vmem:[#allocation1] sm:$0xff]
        %3310 = vst [vmem:[#allocation1] ss:$9 sm:$0xff] %v3100
        %v3311 = vld [vmem:[#allocation1] sm:$0xff]
        %3313 = vst [vmem:[#allocation1] ss:$9 sm:$0xff] %v3103
        %v3314 = vld [vmem:[#allocation1] sm:$0xff]
        %3316 = vst [vmem:[#allocation1] ss:$9 sm:$0xff] %v3106
        %v3317 = vld [vmem:[#allocation1] sm:$0xff]
        %3319 = vst [vmem:[#allocation1] ss:$9 sm:$0xff] %v3121
        %v3320 = vld [vmem:[#allocation1] sm:$0xff]
        %3322 = vst [vmem:[#allocation1] ss:$9 sm:$0xff] %v3124
        %v3323 = vld [vmem:[#allocation1] sm:$0xff]
        %3325 = vst [vmem:[#allocation1] ss:$9 sm:$0xff] %v3127
        %v3326 = vld [vmem:[#allocation1] sm:$0xff]
        %3328 = vst [vmem:[#allocation1] ss:$9 sm:$0xff] %v3130
        %v3329 = vld [vmem:[#allocation1] sm:$0xff]
        %3331 = vst [vmem:[#allocation1] ss:$9 sm:$0xff] %v3145
        %v3332 = vld [vmem:[#allocation1] sm:$0xff]
        %3334 = vst [vmem:[#allocation1] ss:$9 sm:$0xff] %v3148
        %v3335 = vld [vmem:[#allocation1] sm:$0xff]
        %3337 = vst [vmem:[#allocation1] ss:$9 sm:$0xff] %v3151
        %v3338 = vld [vmem:[#allocation1] sm:$0xff]
        %3340 = vst [vmem:[#allocation1] ss:$9 sm:$0xff] %v3154
        %v3341 = vld [vmem:[#allocation1] sm:$0xff]
        %v3343 = vunpack.c.l.b16 %v3296
        %v3344 = vunpack.c.l.b16 %v3299
        %v3345 = vunpack.c.l.b16 %v3302
        %v3346 = vunpack.c.l.b16 %v3305
        %v3347 = vunpack.c.l.b16 %v3308
        %v3348 = vunpack.c.l.b16 %v3311
        %v3349 = vunpack.c.l.b16 %v3314
        %v3350 = vunpack.c.l.b16 %v3317
        %v3351 = vunpack.c.l.b16 %v3320
        %v3352 = vunpack.c.l.b16 %v3323
        %v3353 = vunpack.c.l.b16 %v3326
        %v3354 = vunpack.c.l.b16 %v3329
        %v3355 = vunpack.c.l.b16 %v3332
        %v3356 = vunpack.c.l.b16 %v3335
        %v3357 = vunpack.c.l.b16 %v3338
        %v3358 = vunpack.c.l.b16 %v3341
        %v3359 = vrot.slane %v3344, 7
        %v3360 = vsel %vm377, %v3359, %v3343
        %v3361 = vrot.slane %v3345, 6
        %v3362 = vsel %vm381, %v3361, %v3360
        %v3363 = vrot.slane %v3346, 5
        %v3364 = vsel %vm385, %v3363, %v3362
        %v3365 = vrot.slane %v3348, 7
        %v3366 = vsel %vm377, %v3365, %v3347
        %v3367 = vrot.slane %v3349, 6
        %v3368 = vsel %vm381, %v3367, %v3366
        %v3369 = vrot.slane %v3350, 5
        %v3370 = vsel %vm385, %v3369, %v3368
        %v3371 = vrot.slane %v3352, 7
        %v3372 = vsel %vm377, %v3371, %v3351
        %v3373 = vrot.slane %v3353, 6
        %v3374 = vsel %vm381, %v3373, %v3372
        %v3375 = vrot.slane %v3354, 5
        %v3376 = vsel %vm385, %v3375, %v3374
        %v3377 = vrot.slane %v3356, 7
        %v3378 = vsel %vm377, %v3377, %v3355
        %v3379 = vrot.slane %v3357, 6
        %v3380 = vsel %vm381, %v3379, %v3378
        %v3381 = vrot.slane %v3358, 5
        %v3382 = vsel %vm385, %v3381, %v3380
        %v3383 = vpack.c.b16 %v3364, %v3364
        %v3384 = vpack.c.b16 %v3370, %v3370
        %v3385 = vpack.c.b16 %v3376, %v3376
        %v3386 = vpack.c.b16 %v3382, %v3382
        %vm3387 = vcmask 1041408
        %v3389 = vsel %vm3387, %v3383, 0
        %v3391 = vsel %vm3387, %v3384, 0
        %v3393 = vsel %vm3387, %v3385, 0
        %v3395 = vsel %vm3387, %v3386, 0
        %3396 = vst [vmem:[#allocation1] ss:$9 sm:$0xff] %v3061
        %v3397 = vld [vmem:[#allocation1] sm:$0xff]
        %3400 = vst [vmem:[#allocation1] ss:$9 sm:$0xff] %v3064
        %v3401 = vld [vmem:[#allocation1] sm:$0xff]
        %3404 = vst [vmem:[#allocation1] ss:$9 sm:$0xff] %v3067
        %v3405 = vld [vmem:[#allocation1] sm:$0xff]
        %3408 = vst [vmem:[#allocation1] ss:$9 sm:$0xff] %v3070
        %v3409 = vld [vmem:[#allocation1] sm:$0xff]
        %3411 = vst [vmem:[#allocation1] ss:$9 sm:$0xff] %v3085
        %v3412 = vld [vmem:[#allocation1] sm:$0xff]
        %3415 = vst [vmem:[#allocation1] ss:$9 sm:$0xff] %v3088
        %v3416 = vld [vmem:[#allocation1] sm:$0xff]
        %3419 = vst [vmem:[#allocation1] ss:$9 sm:$0xff] %v3091
        %v3420 = vld [vmem:[#allocation1] sm:$0xff]
        %3423 = vst [vmem:[#allocation1] ss:$9 sm:$0xff] %v3094
        %v3424 = vld [vmem:[#allocation1] sm:$0xff]
        %3426 = vst [vmem:[#allocation1] ss:$9 sm:$0xff] %v3109
        %v3427 = vld [vmem:[#allocation1] sm:$0xff]
        %3430 = vst [vmem:[#allocation1] ss:$9 sm:$0xff] %v3112
        %v3431 = vld [vmem:[#allocation1] sm:$0xff]
        %3434 = vst [vmem:[#allocation1] ss:$9 sm:$0xff] %v3115
        %v3435 = vld [vmem:[#allocation1] sm:$0xff]
        %3438 = vst [vmem:[#allocation1] ss:$9 sm:$0xff] %v3118
        %v3439 = vld [vmem:[#allocation1] sm:$0xff]
        %3441 = vst [vmem:[#allocation1] ss:$9 sm:$0xff] %v3133
        %v3442 = vld [vmem:[#allocation1] sm:$0xff]
        %3445 = vst [vmem:[#allocation1] ss:$9 sm:$0xff] %v3136
        %v3446 = vld [vmem:[#allocation1] sm:$0xff]
        %3449 = vst [vmem:[#allocation1] ss:$9 sm:$0xff] %v3139
        %v3450 = vld [vmem:[#allocation1] sm:$0xff]
        %3453 = vst [vmem:[#allocation1] ss:$9 sm:$0xff] %v3142
        %v3454 = vld [vmem:[#allocation1] sm:$0xff]
        %3456 = vst [vmem:[#allocation1] ss:$9 sm:$0xff] 0
        %3457 = vst [vmem:[#allocation1] ss:$9 sm:$0xff] 0
        %3458 = vst [vmem:[#allocation1] ss:$9 sm:$0xff] 0
        %3459 = vst [vmem:[#allocation1] ss:$9 sm:$0xff] 0
        %v3460 = vunpack.c.l.b16 %v3397
        %v3461 = vunpack.c.l.b16 %v3401
        %v3462 = vunpack.c.l.b16 %v3405
        %v3463 = vunpack.c.l.b16 %v3409
        %v3464 = vunpack.c.l.b16 %v3412
        %v3465 = vunpack.c.l.b16 %v3416
        %v3466 = vunpack.c.l.b16 %v3420
        %v3467 = vunpack.c.l.b16 %v3424
        %v3468 = vunpack.c.l.b16 %v3427
        %v3469 = vunpack.c.l.b16 %v3431
        %v3470 = vunpack.c.l.b16 %v3435
        %v3471 = vunpack.c.l.b16 %v3439
        %v3472 = vunpack.c.l.b16 %v3442
        %v3473 = vunpack.c.l.b16 %v3446
        %v3474 = vunpack.c.l.b16 %v3450
        %v3475 = vunpack.c.l.b16 %v3454
        %v3476 = vrot.slane %v3461, 7
        %v3477 = vsel %vm381, %v3476, %v3460
        %v3478 = vrot.slane %v3462, 6
        %v3479 = vsel %vm385, %v3478, %v3477
        %v3480 = vrot.slane %v3463, 5
        %v3481 = vsel %vm1072, %v3480, %v3479
        %v3482 = vrot.slane %v3465, 7
        %v3483 = vsel %vm381, %v3482, %v3464
        %v3484 = vrot.slane %v3466, 6
        %v3485 = vsel %vm385, %v3484, %v3483
        %v3486 = vrot.slane %v3467, 5
        %v3487 = vsel %vm1072, %v3486, %v3485
        %v3488 = vrot.slane %v3469, 7
        %v3489 = vsel %vm381, %v3488, %v3468
        %v3490 = vrot.slane %v3470, 6
        %v3491 = vsel %vm385, %v3490, %v3489
        %v3492 = vrot.slane %v3471, 5
        %v3493 = vsel %vm1072, %v3492, %v3491
        %v3494 = vrot.slane %v3473, 7
        %v3495 = vsel %vm381, %v3494, %v3472
        %v3496 = vrot.slane %v3474, 6
        %v3497 = vsel %vm385, %v3496, %v3495
        %v3498 = vrot.slane %v3475, 5
        %v3499 = vsel %vm1072, %v3498, %v3497
        %v3500 = vpack.c.b16 %v3481, %v3481
        %v3501 = vpack.c.b16 %v3487, %v3487
        %v3502 = vpack.c.b16 %v3493, %v3493
        %v3503 = vpack.c.b16 %v3499, %v3499
        %v3508 = vsel %vm1263, 0, %v3500
        %v3509 = vsel %vm1263, 0, %v3501
        %v3510 = vsel %vm1263, 0, %v3502
        %v3511 = vsel %vm1263, 0, %v3503
        %3512 = vst [vmem:[#allocation1] ss:$9 sm:$0xff] %v3061
        %v3513 = vld [vmem:[#allocation1] sm:$0xff]
        %3515 = vst [vmem:[#allocation1] ss:$9 sm:$0xff] %v3064
        %v3516 = vld [vmem:[#allocation1] sm:$0xff]
        %3518 = vst [vmem:[#allocation1] ss:$9 sm:$0xff] %v3067
        %v3519 = vld [vmem:[#allocation1] sm:$0xff]
        %3521 = vst [vmem:[#allocation1] ss:$9 sm:$0xff] %v3070
        %v3522 = vld [vmem:[#allocation1] sm:$0xff]
        %3524 = vst [vmem:[#allocation1] ss:$9 sm:$0xff] %v3085
        %v3525 = vld [vmem:[#allocation1] sm:$0xff]
        %3527 = vst [vmem:[#allocation1] ss:$9 sm:$0xff] %v3088
        %v3528 = vld [vmem:[#allocation1] sm:$0xff]
        %3530 = vst [vmem:[#allocation1] ss:$9 sm:$0xff] %v3091
        %v3531 = vld [vmem:[#allocation1] sm:$0xff]
        %3533 = vst [vmem:[#allocation1] ss:$9 sm:$0xff] %v3094
        %v3534 = vld [vmem:[#allocation1] sm:$0xff]
        %3536 = vst [vmem:[#allocation1] ss:$9 sm:$0xff] %v3109
        %v3537 = vld [vmem:[#allocation1] sm:$0xff]
        %3539 = vst [vmem:[#allocation1] ss:$9 sm:$0xff] %v3112
        %v3540 = vld [vmem:[#allocation1] sm:$0xff]
        %3542 = vst [vmem:[#allocation1] ss:$9 sm:$0xff] %v3115
        %v3543 = vld [vmem:[#allocation1] sm:$0xff]
        %3545 = vst [vmem:[#allocation1] ss:$9 sm:$0xff] %v3118
        %v3546 = vld [vmem:[#allocation1] sm:$0xff]
        %3548 = vst [vmem:[#allocation1] ss:$9 sm:$0xff] %v3133
        %v3549 = vld [vmem:[#allocation1] sm:$0xff]
        %3551 = vst [vmem:[#allocation1] ss:$9 sm:$0xff] %v3136
        %v3552 = vld [vmem:[#allocation1] sm:$0xff]
        %3554 = vst [vmem:[#allocation1] ss:$9 sm:$0xff] %v3139
        %v3555 = vld [vmem:[#allocation1] sm:$0xff]
        %3557 = vst [vmem:[#allocation1] ss:$9 sm:$0xff] %v3142
        %v3558 = vld [vmem:[#allocation1] sm:$0xff]
        %3560 = vst [vmem:[#allocation1] ss:$9 sm:$0xff] 0
        %3561 = vst [vmem:[#allocation1] ss:$9 sm:$0xff] 0
        %3562 = vst [vmem:[#allocation1] ss:$9 sm:$0xff] 0
        %3563 = vst [vmem:[#allocation1] ss:$9 sm:$0xff] 0
        %v3564 = vunpack.c.l.b16 %v3513
        %v3565 = vunpack.c.l.b16 %v3516
        %v3566 = vunpack.c.l.b16 %v3519
        %v3567 = vunpack.c.l.b16 %v3522
        %v3568 = vunpack.c.l.b16 %v3525
        %v3569 = vunpack.c.l.b16 %v3528
        %v3570 = vunpack.c.l.b16 %v3531
        %v3571 = vunpack.c.l.b16 %v3534
        %v3572 = vunpack.c.l.b16 %v3537
        %v3573 = vunpack.c.l.b16 %v3540
        %v3574 = vunpack.c.l.b16 %v3543
        %v3575 = vunpack.c.l.b16 %v3546
        %v3576 = vunpack.c.l.b16 %v3549
        %v3577 = vunpack.c.l.b16 %v3552
        %v3578 = vunpack.c.l.b16 %v3555
        %v3579 = vunpack.c.l.b16 %v3558
        %v3580 = vrot.slane %v3565, 7
        %v3581 = vsel %vm377, %v3580, %v3564
        %v3582 = vrot.slane %v3566, 6
        %v3583 = vsel %vm381, %v3582, %v3581
        %v3584 = vrot.slane %v3567, 5
        %v3585 = vsel %vm385, %v3584, %v3583
        %v3586 = vrot.slane %v3569, 7
        %v3587 = vsel %vm377, %v3586, %v3568
        %v3588 = vrot.slane %v3570, 6
        %v3589 = vsel %vm381, %v3588, %v3587
        %v3590 = vrot.slane %v3571, 5
        %v3591 = vsel %vm385, %v3590, %v3589
        %v3592 = vrot.slane %v3573, 7
        %v3593 = vsel %vm377, %v3592, %v3572
        %v3594 = vrot.slane %v3574, 6
        %v3595 = vsel %vm381, %v3594, %v3593
        %v3596 = vrot.slane %v3575, 5
        %v3597 = vsel %vm385, %v3596, %v3595
        %v3598 = vrot.slane %v3577, 7
        %v3599 = vsel %vm377, %v3598, %v3576
        %v3600 = vrot.slane %v3578, 6
        %v3601 = vsel %vm381, %v3600, %v3599
        %v3602 = vrot.slane %v3579, 5
        %v3603 = vsel %vm385, %v3602, %v3601
        %v3604 = vpack.c.b16 %v3585, %v3585
        %v3605 = vpack.c.b16 %v3591, %v3591
        %v3606 = vpack.c.b16 %v3597, %v3597
        %v3607 = vpack.c.b16 %v3603, %v3603
        %v3609 = vsel %vm3387, %v3604, 0
        %v3611 = vsel %vm3387, %v3605, 0
        %v3613 = vsel %vm3387, %v3606, 0
        %v3615 = vsel %vm3387, %v3607, 0
        %3619 = vrot.lane.b32.xlu0 %v3389, 8
        %v3620 = vpop.permute.xlu0 %3619
        %3621 = vrot.lane.b32.xlu0 %v3391, 8
        %v3622 = vpop.permute.xlu0 %3621
        %3623 = vrot.lane.b32.xlu0 %v3393, 8
        %v3624 = vpop.permute.xlu0 %3623
        %v3626 = vshrl.u32 %v3291, 16
        %v3628 = vshll.u32 %v3291, 16
        %v3630 = vrot.slane %v3628, 1
        %v3631 = vor.u32 %v3626, %v3630
        %v3633 = vshrl.u32 %v3292, 16
        %v3635 = vshll.u32 %v3292, 16
        %v3637 = vrot.slane %v3635, 1
        %v3638 = vor.u32 %v3633, %v3637
        %v3640 = vshrl.u32 %v3293, 16
        %v3642 = vshll.u32 %v3293, 16
        %v3644 = vrot.slane %v3642, 1
        %v3645 = vor.u32 %v3640, %v3644
        %3646 = vrot.lane.b32.xlu0 %v3631, 16
        %v3647 = vpop.permute.xlu0 %3646
        %3648 = vrot.lane.b32.xlu0 %v3638, 16
        %v3649 = vpop.permute.xlu0 %3648
        %3650 = vrot.lane.b32.xlu0 %v3645, 16
        %v3651 = vpop.permute.xlu0 %3650
        %3656 = vrot.lane.b32.xlu0 %v3508, 24
        %v3657 = vpop.permute.xlu0 %3656
        %3658 = vrot.lane.b32.xlu0 %v3509, 24
        %v3659 = vpop.permute.xlu0 %3658
        %3660 = vrot.lane.b32.xlu0 %v3510, 24
        %v3661 = vpop.permute.xlu0 %3660
        %3662 = vrot.lane.b32.xlu0 %v3511, 24
        %v3663 = vpop.permute.xlu0 %3662
        %3668 = vrot.lane.b32.xlu0 %v3609, 32
        %v3669 = vpop.permute.xlu0 %3668
        %3670 = vrot.lane.b32.xlu0 %v3611, 32
        %v3671 = vpop.permute.xlu0 %3670
        %3672 = vrot.lane.b32.xlu0 %v3613, 32
        %v3673 = vpop.permute.xlu0 %3672
        %3674 = vrot.lane.b32.xlu0 %v3615, 32
        %v3675 = vpop.permute.xlu0 %3674
        %v3677 = vshrl.u32 %v3508, 16
        %v3679 = vshll.u32 %v3508, 16
        %v3681 = vrot.slane %v3679, 1
        %v3682 = vor.u32 %v3677, %v3681
        %v3684 = vshrl.u32 %v3509, 16
        %v3686 = vshll.u32 %v3509, 16
        %v3688 = vrot.slane %v3686, 1
        %v3689 = vor.u32 %v3684, %v3688
        %v3691 = vshrl.u32 %v3510, 16
        %v3693 = vshll.u32 %v3510, 16
        %v3695 = vrot.slane %v3693, 1
        %v3696 = vor.u32 %v3691, %v3695
        %v3698 = vshrl.u32 %v3511, 16
        %v3700 = vshll.u32 %v3511, 16
        %v3702 = vrot.slane %v3700, 1
        %v3703 = vor.u32 %v3698, %v3702
        %3704 = vrot.lane.b32.xlu0 %v3682, 40
        %v3705 = vpop.permute.xlu0 %3704
        %3706 = vrot.lane.b32.xlu0 %v3689, 40
        %v3707 = vpop.permute.xlu0 %3706
        %3708 = vrot.lane.b32.xlu0 %v3696, 40
        %v3709 = vpop.permute.xlu0 %3708
        %3710 = vrot.lane.b32.xlu0 %v3703, 40
        %v3711 = vpop.permute.xlu0 %3710
        %3716 = vrot.lane.b32.xlu0 %v3291, 48
        %v3717 = vpop.permute.xlu0 %3716
        %3718 = vrot.lane.b32.xlu0 %v3292, 48
        %v3719 = vpop.permute.xlu0 %3718
        %3720 = vrot.lane.b32.xlu0 %v3293, 48
        %v3721 = vpop.permute.xlu0 %3720
        %3722 = vrot.lane.b32.xlu0 %v3294, 48
        %v3723 = vpop.permute.xlu0 %3722
        %3725 = vrot.lane.b32.xlu0 %v3389, 56
        %v3726 = vpop.permute.xlu0 %3725
        %3727 = vrot.lane.b32.xlu0 %v3391, 56
        %v3728 = vpop.permute.xlu0 %3727
        %3729 = vrot.lane.b32.xlu0 %v3393, 56
        %v3730 = vpop.permute.xlu0 %3729
        %3731 = vrot.lane.b32.xlu0 %v3395, 56
        %v3732 = vpop.permute.xlu0 %3731
        %v3734 = vshrl.u32 %v3294, 16
        %v3736 = vshll.u32 %v3294, 16
        %v3738 = vrot.slane %v3736, 1
        %v3739 = vor.u32 %v3734, %v3738
        %3740 = vrot.lane.b32.xlu0 %v3631, 64
        %v3741 = vpop.permute.xlu0 %3740
        %3742 = vrot.lane.b32.xlu0 %v3638, 64
        %v3743 = vpop.permute.xlu0 %3742
        %3744 = vrot.lane.b32.xlu0 %v3645, 64
        %v3745 = vpop.permute.xlu0 %3744
        %3746 = vrot.lane.b32.xlu0 %v3739, 64
        %v3747 = vpop.permute.xlu0 %3746
        %v3749 = vsel %vm2786, %v3291, %v3620
        %v3751 = vsel %vm2786, %v3292, %v3622
        %v3753 = vsel %vm2786, %v3293, %v3624
        %v3755 = vsel %vm2803, %v3749, %v3647
        %v3757 = vsel %vm2803, %v3751, %v3649
        %v3759 = vsel %vm2803, %v3753, %v3651
        %v3761 = vsel %vm2820, %v2805, %v3657
        %v3763 = vsel %vm2820, %v3755, %v3659
        %v3765 = vsel %vm2820, %v3757, %v3661
        %v3767 = vsel %vm2820, %v3759, %v3663
        %v3769 = vsel %vm2837, %v3761, %v3669
        %v3771 = vsel %vm2837, %v3763, %v3671
        %v3773 = vsel %vm2837, %v3765, %v3673
        %v3775 = vsel %vm2837, %v3767, %v3675
        %v3777 = vsel %vm2854, %v3769, %v3705
        %v3779 = vsel %vm2854, %v3771, %v3707
        %v3781 = vsel %vm2854, %v3773, %v3709
        %v3783 = vsel %vm2854, %v3775, %v3711
        %v3785 = vsel %vm2871, %v3777, %v3717
        %v3787 = vsel %vm2871, %v3779, %v3719
        %v3789 = vsel %vm2871, %v3781, %v3721
        %v3791 = vsel %vm2871, %v3783, %v3723
        %v3793 = vsel %vm2888, %v3785, %v3726
        %v3795 = vsel %vm2888, %v3787, %v3728
        %v3797 = vsel %vm2888, %v3789, %v3730
        %v3799 = vsel %vm2888, %v3791, %v3732
        %v3801 = vsel %vm2905, %v3793, %v3741
        %v3803 = vsel %vm2905, %v3795, %v3743
        %v3805 = vsel %vm2905, %v3797, %v3745
        %v3807 = vsel %vm2905, %v3799, %v3747
        %v3808 = vld [vmem:[%s2] sm:$0xf]
        %v3809 = vld [vmem:[%s2 + $0x4] sm:$0xf]
        %v3810 = vld [vmem:[%s2 + $0x8] sm:$0xf]
        %v3811 = vld [vmem:[%s2 + $0xc] sm:$0xf]
        %v3812 = vld [vmem:[%s2 + $0x10] sm:$0xf]
        %v3813 = vld [vmem:[%s2 + $0x14] sm:$0xf]
        %v3814 = vld [vmem:[%s2 + $0x18] sm:$0xf]
        %v3815 = vld [vmem:[%s2 + $0x1c] sm:$0xf]
        %v3816 = vld [vmem:[%s2 + $0x20] sm:$0xf]
        %v3817 = vld [vmem:[%s4] sm:$0x1]
        %v3819 = vperm.slane %v3817, 0
        %3821 = vst [vmem:[#allocation1] ss:$4 sm:$0xff] %v3801
        %s3822 = scalar_lea.vmem [#allocation1], 1
        %3823 = vst [vmem:[%s3822] ss:$4 sm:$0xff] %v3803
        %s3824 = scalar_lea.vmem [#allocation1], 2
        %3825 = vst [vmem:[%s3824] ss:$4 sm:$0xff] %v3805
        %s3826 = scalar_lea.vmem [#allocation1], 3
        %3827 = vst [vmem:[%s3826] ss:$4 sm:$0xff] %v3807
        %v3828 = vld.sshfl [vmem:[#allocation1] sm:$0xff pattern:$0x73625140]
        %v3838 = vunpack.c.l.b16 %v3808
        %v3839 = vunpack.c.l.b16 %v3809
        %v3840 = vunpack.c.l.b16 %v3810
        %v3841 = vunpack.c.l.b16 %v3811
        %v3842 = vunpack.c.l.b16 %v3812
        %v3843 = vunpack.c.l.b16 %v3813
        %v3844 = vunpack.c.l.b16 %v3814
        %v3845 = vunpack.c.l.b16 %v3815
        %v3846 = vunpack.c.l.b16 %v3816
        %v3847 = vpack.c.b16 %v3839, %v3838
        %v3848 = vpack.c.b16 %v3841, %v3840
        %v3849 = vpack.c.b16 %v3843, %v3842
        %v3850 = vpack.c.b16 %v3845, %v3844
        %v3851 = vpack.c.b16 %v3846, %v3846
        %v3856 = vsel %vm2982, %v3828, 0
        %v3859 = vsel %vm1649, %v3851, 0
        %3861 = vmatpush.bf16.msra.mxu0 0
        %3862 = vmatpush.bf16.msra.mxu0 0
        %3863 = vmatpush.bf16.msra.mxu0 0
        %3864 = vmatpush.bf16.msra.mxu0 %v3859
        %3865 = vmatpush.bf16.msra.mxu0 %v3850
        %3866 = vmatpush.bf16.msra.mxu0 %v3849
        %3867 = vmatpush.bf16.msra.mxu0 %v3848
        %3868 = vmatpush.bf16.msra.mxu0 %v3847
        %3869 = vmatmul.bf16.gmra.mxu0 %v3856
        %v3870 = vpop.f32.mrf.mxu0
        %v3871 = vadd.f32 %v3819, %v3870
        %v3872 = vpop.f32.mrf.mxu0
        %v3873 = vadd.f32 %v3819, %v3872
        %3874 = vdwg.mxu0
        %v3875 = vmax.f32 %v3871, 0.0
        %v3876 = vmax.f32 %v3873, 0.0
        %v3877 = vsel %vm2803, %v3875, 0.0
        %v3878 = vsel %vm2803, %v3876, 0.0
        %v3879 = vadd.f32 %v3877, %v3878
        %v3880 = vrot.slane %v3879, 4
        %v3881 = vadd.f32 %v3879, %v3880
        %v3882 = vrot.slane %v3881, 2
        %v3883 = vadd.f32 %v3881, %v3882
        %v3884 = vrot.slane %v3883, 1
        %v3885 = vadd.f32 %v3883, %v3884
        %v3886 = vrcp.pop 16.0
        %v3887 = vmul.f32 16.0, %v3886
        %v3888 = vsub.f32 1.0, %v3887
        %v3889 = vmul.f32 %v3886, %v3888
        %v3890 = vadd.f32 %v3886, %v3889
        %vm3891 = vweird.f32 %v3886
        %v3892 = vsel %vm3891, %v3886, %v3890
        %v3893 = vmul.f32 %v3885, %v3892
        %v3894 = vpack.c.bf16 %v3893, %v3893
        %v3895 = vld [vmem:[%s5] sm:$0xf]
        %v3896 = vld [vmem:[%s5 + $0x4] sm:$0xf]
        %v3897 = vld [vmem:[%s6] sm:$0x1]
        %v3900 = vunpack.c.l.b16 %v3895
        %v3901 = vunpack.c.l.b16 %v3896
        %v3902 = vpack.c.b16 %v3901, %v3900
        %v3905 = vsel %vm2803, %v3894, 0
        %3907 = vmatpush.bf16.msra.mxu0 0
        %3908 = vmatpush.bf16.msra.mxu0 0
        %3909 = vmatpush.bf16.msra.mxu0 0
        %3910 = vmatpush.bf16.msra.mxu0 0
        %3911 = vmatpush.bf16.msra.mxu0 0
        %3912 = vmatpush.bf16.msra.mxu0 0
        %3913 = vmatpush.bf16.msra.mxu0 0
        %3914 = vmatpush.bf16.msra.mxu0 %v3902
        %3915 = vmatmul.bf16.gmra.mxu0 %v3905
        %v3916 = vpop.f32.mrf.mxu0
        %v3917 = vadd.f32 %v3897, %v3916
        %v3918 = vpop.f32.mrf.mxu0
        %3919 = vdwg.mxu0
        %3920 = vst [vmem:[%s270] sm:$0x1] %v3917
        %s3921 = sand.u32 %s181, 1
        %s3922 = scalar_lea.sflag [#allocation3], %s3921
        %s3923 = sand.u32 %s181, 1
        %s3924 = scalar_lea.vmem [#allocation2], %s3923
        // Predicated region
        $region49: #{simple_cnn_forward.1} parent=47 // pred_check
          %p3925 = pneg %p191
        $region50: #{simple_cnn_forward.1} parent=47 // pred_check_branch
          %3927 = sbr.rel (%p3925) target = $region52
        $region51: #{simple_cnn_forward.1} parent=47 // pred_region
          %3929 = vsyncadd %s3922, 0
          %s3930 = scalar_lea.hbm %s7, %s21
          %s3932 = sshll.u32 %s3924, 4
          %s3933 = int_to_ptr.vmem [resolvable:$true] %s3932
          %s3934 = sshll.u32 %s3930, 4
          %s3935 = int_to_ptr.hbm [resolvable:$true] %s3934
          %3937 = dma.vmem_to_hbm [thread:$0]  %s3933, 16, %s3935, %s3922
        $region52: #{simple_cnn_forward.1} parent=47 // pred_fallthru
          _
      $region48: #{simple_cnn_forward.1} parent=5 // pred_fallthru
        _
      %p3938 = scmp.le.s32.totalorder 2, %s16
      // Predicated region
      $region53: #{simple_cnn_forward.1} parent=5 // pred_check
        %p3939 = pneg %p3938
      $region54: #{simple_cnn_forward.1} parent=5 // pred_check_branch
        %3941 = sbr.rel (%p3939) target = $region56
      $region55: #{simple_cnn_forward.1} parent=5 // pred_region
        %s3942 = ssub.s32 %s16, 2
        // Predicated region
        $region57: #{simple_cnn_forward.1} parent=55 // pred_check
          %p3943 = pneg %p197
        $region58: #{simple_cnn_forward.1} parent=55 // pred_check_branch
          %3945 = sbr.rel (%p3943) target = $region60
        $region59: #{simple_cnn_forward.1} parent=55 // pred_region
          %s3946 = sand.u32 %s182, 1
          %s3947 = scalar_lea.sflag [#allocation3], %s3946
          %s3948 = sand.u32 %s182, 1
          %s3949 = scalar_lea.vmem [#allocation2], %s3948
          %3951 = dma.done %s3947, 16
        $region60: #{simple_cnn_forward.1} parent=55 // pred_fallthru
          _
      $region56: #{simple_cnn_forward.1} parent=5 // pred_fallthru
        _
    $region6: #{simple_cnn_forward.1} parent=1 // loop_footer
      %s20 = sadd.s32 1, %s16
    $region7: #{simple_cnn_forward.1} parent=1 // loop_footer_branch
      %15 = sbr.rel target = $region3
    $region8: #{simple_cnn_forward.1} parent=1 // loop_exit
      _
    %3952 = vsyncpa [#allocation3], 1
    %s3953 = scalar_lea.sflag [#allocation3], 1
    %3954 = vsyncpa %s3953, 1

</llo_original>
